<compile_context>
chip_gen: v7x
topology: tpu7x:2x2x1
jax: 0.10.0
libtpu: 0.0.40
codegen_flags: <defaults>
</compile_context>

<pallas_src>
import functools

import jax
import jax.numpy as jnp
from jax import lax
from jax.experimental import pallas as pl
from jax.experimental.pallas import tpu as pltpu


# --------------------------------------------------------------------------
# Packed row-vector slab layout (one DMA for all biases / BN params / node row)
# --------------------------------------------------------------------------

def _row_layout(cfg):
    C = cfg["nb_classes"]
    F = cfg["go_out"] + cfg["node_feat"]
    H = cfg["hid"]
    O = cfg["att_out"]
    names_widths = [
        ("att_b", C), ("b1row", C * 32), ("b2row", C * F), ("node_row", C * F),
        ("g1", C * F), ("bt1", C * F), ("g2", C * F), ("bt2", C * F),
        ("g3", C * F), ("bt3", C * F),
        ("mlp_b1", 2 * C * H), ("mlp_b2", 2 * C * O),
        ("b_out1", C), ("b_out2", C),
    ]
    slab_w = max(w for _, w in names_widths)
    row_ix = {n: (i, w) for i, (n, w) in enumerate(names_widths)}
    return row_ix, len(names_widths), slab_w


# --------------------------------------------------------------------------
# Fused kernel
# --------------------------------------------------------------------------

def _pfgcn_kernel(data_ref, badj_ref, drop_ref, rows_ref, att_w_ref, w1_ref,
                  w2_ref, mavg_ref, mlp_w1_ref, mlp_w2_ref, go_ref, thetas_ref,
                  wout1_ref, wout2_ref, out_ref, *, C, F, O, eps, row_ix):
    f32, bf16 = jnp.float32, jnp.bfloat16
    B = data_ref.shape[0]
    CF = C * F
    relu = lambda v: jnp.maximum(v, 0.0)

    def row(name):                       # static view into the packed row slab
        i, w = row_ix[name]
        return rows_ref[i:i + 1, :w]

    def mxu(a, w):                       # bf16 MXU inputs, f32 accumulation
        return jnp.dot(a.astype(bf16), w, preferred_element_type=f32)

    def softmax_rows(x):
        e = jnp.exp(x - jnp.max(x, axis=1, keepdims=True))
        return e / jnp.sum(e, axis=1, keepdims=True)

    m_avg = mavg_ref[...]

    def batchnorm(x, gname, bname):
        # BatchNorm1d(nb_classes), training mode: stats over (batch, in-class feat).
        # E[x] and E[x^2] stacked -> ONE per-class block-averaging matmul.
        stacked = jnp.concatenate(
            [jnp.mean(x, axis=0, keepdims=True),
             jnp.mean(x * x, axis=0, keepdims=True)], axis=0)            # (2, C*F)
        stats = jnp.dot(stacked, m_avg, preferred_element_type=f32)      # (2, C*F)
        mu = stats[0:1, :]
        var = jnp.maximum(stats[1:2, :] - mu * mu, 0.0)                  # clamp >= 0
        return (x - mu) * lax.rsqrt(var + eps) * row(gname) + row(bname)

    # ---- GoFeature: SelfAttention(~Linear) + both Conv1d folded into matmuls ----
    # TODO(synk): PositionalEncoding / SelfAttention sources not provided; sinusoidal
    #             PE (folded into att bias at prepare time) + Linear stand in.
    a = relu(mxu(data_ref[...], att_w_ref[...]) + row("att_b"))          # (B, C)
    h1 = relu(mxu(a, w1_ref[...]) + row("b1row"))                        # conv1+relu
    conv = relu(mxu(h1, w2_ref[...]) + row("b2row"))                     # conv2+relu
    # node-feature columns of `conv` are zero, so the add == torch.concat(dim=2)
    merged = batchnorm(conv + row("node_row"), "g1", "bt1")              # (B, C*F)

    # ---- Protein + Function attention MLPs (one pair of block matmuls) ---------
    zh = relu(mxu(merged, mlp_w1_ref[...]) + row("mlp_b1"))              # (B, 2*C*H)
    zz = mxu(zh, mlp_w2_ref[...]) + row("mlp_b2")                        # (B, 2*C*O)
    zz3 = zz.reshape(B, 2 * C, O)
    z3, zf3 = zz3[:, :C, :], zz3[:, C:, :]                               # (B, C, O)

    # ---- ProteinAttention score -> batch adjacency ------------------------------
    t = jnp.sum(z3, axis=1, keepdims=True)                               # (B, 1, O)
    s = jnp.sum(z3 * t, axis=2)                                          # (B, C)
    sc = jnp.einsum("bc,dc->bd", s, s, preferred_element_type=f32)       # (B, B)
    badj = softmax_rows(badj_ref[...] + softmax_rows(softmax_rows(sc)))  # as in torch
    badj = 1.0 / (1.0 + jnp.exp(-badj))                                  # sigmoid

    # ---- ProteinConv (Chebyshev: shared x for every k => summed Theta) ---------
    x1 = mxu(jnp.dot(badj, merged, preferred_element_type=f32),
             thetas_ref[:CF, :])                                         # (B, C*F)
    x1 = relu(batchnorm(x1, "g2", "bt2")) * drop_ref[:, :CF]             # dropout

    # ---- FunctionAttention score + FunctionConv class mixing (batched) ---------
    # TODO(synk): FunctionAttention / FunctionConv sources not provided; score =
    #             bmm(Z, Z^T) and a ProteinConv-style Chebyshev mixing stand in.
    S = jnp.einsum("bco,bdo->bcd", zf3, zf3, preferred_element_type=f32) # (B, C, C)
    e = jnp.exp(S - jnp.max(S, axis=1, keepdims=True))
    P = e / jnp.sum(e, axis=1, keepdims=True)                            # softmax dim=1
    G = go_ref[...][None, :, :] + P                                      # (B, C, C)
    merged3 = merged.reshape(B, C, F)
    x2 = jnp.einsum("bcd,bdf->bcf", G, merged3,
                    preferred_element_type=f32).reshape(B, CF)           # (B, C*F)
    x2 = mxu(x2, thetas_ref[CF:, :])
    x2 = relu(batchnorm(x2, "g3", "bt3")) * drop_ref[:, CF:]             # dropout

    # ---- fused output head -------------------------------------------------------
    x12 = jnp.concatenate([x1, x2], axis=1)                              # (B, 2*C*F)
    o1 = relu(mxu(x12, wout1_ref[...]) + row("b_out1"))                  # (B, C)
    out_ref[...] = mxu(o1, wout2_ref[...]) + row("b_out2")


def pfgcn_forward(operands, data, batch_adj, drop_mask, *, cfg):
    C = cfg["nb_classes"]
    F = cfg["go_out"] + cfg["node_feat"]
    O = cfg["att_out"]
    B = data.shape[0]
    row_ix, _, _ = _row_layout(cfg)

    args = (data.astype(jnp.float32), batch_adj.astype(jnp.float32),
            drop_mask.astype(jnp.float32),
            operands["rows"], operands["att_w"], operands["w1big"],
            operands["w2big"], operands["m_avg"], operands["mlp_w1"],
            operands["mlp_w2"], operands["go_adj"], operands["thetas"],
            operands["w_out1"], operands["w_out2"])

    kernel = functools.partial(_pfgcn_kernel, C=C, F=F, O=O, eps=1e-5, row_ix=row_ix)
    return pl.pallas_call(
        kernel,
        out_shape=jax.ShapeDtypeStruct((B, C), jnp.float32),
        in_specs=[pl.BlockSpec(memory_space=pltpu.MemorySpace.VMEM)] * len(args),
        out_specs=pl.BlockSpec(memory_space=pltpu.MemorySpace.VMEM),
        # grid-less: total operand footprint < 1 MiB, everything stays in VMEM/vregs.
    )(*args)


# --------------------------------------------------------------------------
# Parameters + one-time operand preparation (kron / im2col / PE / head folding)
# --------------------------------------------------------------------------

def init_params(key, cfg):
    C = cfg["nb_classes"]
    Fin = cfg["in_features"]
    go_out = cfg["go_out"]
    F = go_out + cfg["node_feat"]
    H = cfg["hid"]
    O = cfg["att_out"]
    K = cfg["K"]
    ks = jax.random.split(key, 12)
    n = lambda k, s: 0.1 * jax.random.normal(k, s, jnp.float32)
    return {
        # TODO(synk): SelfAttention source not provided; approximated by a Linear layer.
        "att_w": n(ks[0], (Fin, C)), "att_b": jnp.zeros((1, C), jnp.float32),
        "conv1_w": n(ks[1], (3, 32)),             # [tap, out_ch]   (in_ch == 1)
        "conv1_b": jnp.zeros((32,), jnp.float32),
        "conv2_w": n(ks[2], (3, go_out, 32)),     # [tap, out_ch, in_ch]
        "conv2_b": jnp.zeros((go_out,), jnp.float32),
        "bn1_g": jnp.ones((C,), jnp.float32), "bn1_b": jnp.zeros((C,), jnp.float32),
        "bn2_g": jnp.ones((C,), jnp.float32), "bn2_b": jnp.zeros((C,), jnp.float32),
        "bn3_g": jnp.ones((C,), jnp.float32), "bn3_b": jnp.zeros((C,), jnp.float32),
        "pa_w1": n(ks[3], (F, H)), "pa_b1": jnp.zeros((H,), jnp.float32),
        "pa_w2": n(ks[4], (H, O)), "pa_b2": jnp.zeros((O,), jnp.float32),
        # TODO(synk): FunctionAttention source not provided; mirrors ProteinAttention.
        "fa_w1": n(ks[5], (F, H)), "fa_b1": jnp.zeros((H,), jnp.float32),
        "fa_w2": n(ks[6], (H, O)), "fa_b2": jnp.zeros((O,), jnp.float32),
        "pc_theta": n(ks[7], (K, F, F)),
        # TODO(synk): FunctionConv source not provided; mirrors ProteinConv.
        "fc_theta": n(ks[8], (K, F, F)),
        "out1_w": n(ks[9], (2 * F, 1)), "out1_b": jnp.zeros((1, 1), jnp.float32),
        "out2_w": n(ks[10], (C, C)), "out2_b": jnp.zeros((1, C), jnp.float32),
    }


def prepare_operands(params, node_features, go_adj, cfg):
    """One-time folding of weights into lane-dense matmul operands (bf16)."""
    C = cfg["nb_classes"]
    L = C
    Fin = cfg["in_features"]
    maxlen = cfg["MAXLEN"]
    go_out = cfg["go_out"]
    nf = cfg["node_feat"]
    F = go_out + nf
    H = cfg["hid"]
    O = cfg["att_out"]
    CH = params["conv1_w"].shape[1]
    f32, bf16 = jnp.float32, jnp.bfloat16
    eye = lambda n, k=0: jnp.eye(n, k=k, dtype=f32)
    kron = jnp.kron

    # TODO(synk): PositionalEncoding source not provided; sinusoidal PE (outfea=1)
    #             stands in, folded into the attention bias (linearity).
    pe_row = jnp.concatenate([jnp.sin(jnp.arange(maxlen, dtype=f32)),
                              jnp.sin(jnp.arange(Fin - maxlen, dtype=f32))])[None, :]
    att_b = pe_row @ params["att_w"] + params["att_b"]                   # (1, C)

    # Conv1d(1->32, k=3, p=1) folded into one (C, C*32) matmul weight.
    w1big = sum(kron(eye(L, 1 - t), params["conv1_w"][t][None, :]) for t in range(3))
    b1row = jnp.tile(params["conv1_b"][None, :], (1, L))

    # Conv1d(32->go_out, k=3, p=1) folded into one (C*32, C*F) matmul weight; node
    # feature columns stay zero so the output layout is already the merged layout.
    a_taps = [jnp.concatenate([params["conv2_w"][t].T, jnp.zeros((CH, nf), f32)], axis=1)
              for t in range(3)]
    w2big = sum(kron(eye(L, 1 - t), a_taps[t]) for t in range(3))
    b2row = jnp.tile(jnp.concatenate([params["conv2_b"],
                                      jnp.zeros((nf,), f32)])[None, :], (1, C))
    node_row = jnp.concatenate([jnp.zeros((C, go_out), f32),
                                node_features.astype(f32)], axis=1).reshape(1, C * F)

    # Per-class block averaging matrix used for the BatchNorm1d statistics.
    m_avg = kron(eye(C), jnp.ones((F, F), f32) / F)
    per_chan = lambda v: jnp.repeat(v, F)[None, :]

    # Protein + Function attention MLPs batched into two block matmuls.
    mlp_w1 = jnp.concatenate([kron(eye(C), params["pa_w1"]),
                              kron(eye(C), params["fa_w1"])], axis=1)    # (C*F, 2*C*H)
    mlp_b1 = jnp.concatenate([jnp.tile(params["pa_b1"][None, :], (1, C)),
                              jnp.tile(params["fa_b1"][None, :], (1, C))], axis=1)
    mlp_w2 = jnp.zeros((2 * C * H, 2 * C * O), f32)
    mlp_w2 = mlp_w2.at[:C * H, :C * O].set(kron(eye(C), params["pa_w2"]))
    mlp_w2 = mlp_w2.at[C * H:, C * O:].set(kron(eye(C), params["fa_w2"]))
    mlp_b2 = jnp.concatenate([jnp.tile(params["pa_b2"][None, :], (1, C)),
                              jnp.tile(params["fa_b2"][None, :], (1, C))], axis=1)

    # Chebyshev: the torch loop reuses the SAME x for every k => sum_k Theta[k];
    # protein + function Theta blocks stacked into a single operand.
    thetas = jnp.concatenate([kron(eye(C), jnp.sum(params["pc_theta"], axis=0)),
                              kron(eye(C), jnp.sum(params["fc_theta"], axis=0))], axis=0)

    # Fused output head: concat(x1, x2) @ [w_out1a; w_out1b].
    w_out1 = jnp.concatenate([kron(eye(C), params["out1_w"][:F]),
                              kron(eye(C), params["out1_w"][F:])], axis=0)  # (2*C*F, C)
    b_out1 = jnp.tile(params["out1_b"], (1, C))

    # All (1, N) row vectors packed into one zero-padded slab -> one DMA.
    row_ix, n_rows, slab_w = _row_layout(cfg)
    row_vals = {
        "att_b": att_b, "b1row": b1row, "b2row": b2row, "node_row": node_row,
        "g1": per_chan(params["bn1_g"]), "bt1": per_chan(params["bn1_b"]),
        "g2": per_chan(params["bn2_g"]), "bt2": per_chan(params["bn2_b"]),
        "g3": per_chan(params["bn3_g"]), "bt3": per_chan(params["bn3_b"]),
        "mlp_b1": mlp_b1, "mlp_b2": mlp_b2,
        "b_out1": b_out1, "b_out2": params["out2_b"],
    }
    rows = jnp.zeros((n_rows, slab_w), f32)
    for name, (i, w) in row_ix.items():
        rows = rows.at[i, :w].set(row_vals[name].reshape(-1))

    return {
        "rows": rows, "m_avg": m_avg, "go_adj": go_adj.astype(f32),
        "att_w": params["att_w"].astype(bf16), "w1big": w1big.astype(bf16),
        "w2big": w2big.astype(bf16), "mlp_w1": mlp_w1.astype(bf16),
        "mlp_w2": mlp_w2.astype(bf16), "thetas": thetas.astype(bf16),
        "w_out1": w_out1.astype(bf16), "w_out2": params["out2_w"].astype(bf16),
    }


# --------------------------------------------------------------------------
if __name__ == "__main__":
    cfg = dict(nb_classes=8, in_features=16, MAXLEN=8, go_out=8, node_feat=8,
               hid=32, att_out=8, K=2)

    key = jax.random.PRNGKey(0)
    kp, kd, kn, kg, kb, km = jax.random.split(key, 6)

    params = init_params(kp, cfg)

    B = 4
    C = cfg["nb_classes"]
    F = cfg["go_out"] + cfg["node_feat"]
    data = jax.random.normal(kd, (B, cfg["in_features"]), jnp.float32)        # (4, 16)
    node_features = jax.random.normal(kn, (C, cfg["node_feat"]), jnp.float32) # (8, 8)
    go_adj = jax.random.uniform(kg, (C, C), jnp.float32)                      # (8, 8)
    batch_adj = jax.random.uniform(kb, (B, B), jnp.float32)                   # (4, 4)

    # Training-mode dropout (p=0.3): masks pre-scaled by 1/keep, one slab for both
    # dropout sites (kernel just multiplies — portable, no in-kernel PRNG needed).
    keep = 1.0 - 0.3
    drop_mask = (jax.random.uniform(km, (B, 2 * C * F)) < keep).astype(jnp.float32) / keep

    operands = prepare_operands(params, node_features, go_adj, cfg)
    out = pfgcn_forward(operands, data, batch_adj, drop_mask, cfg=cfg)
    jax.block_until_ready(out)

    assert out.shape == (B, C)
    assert bool(jnp.all(jnp.isfinite(out)))
    print("KERNEL_OK")
</pallas_src>

<mosaic_0001>
module attributes {stable_mosaic.version = 11 : i64} {
  func.func @_pfgcn_kernel(%arg0: memref<4x16xf32, #tpu.memory_space<vmem>>, %arg1: memref<4x4xf32, #tpu.memory_space<vmem>>, %arg2: memref<4x256xf32, #tpu.memory_space<vmem>>, %arg3: memref<14x512xf32, #tpu.memory_space<vmem>>, %arg4: memref<16x8xbf16, #tpu.memory_space<vmem>>, %arg5: memref<8x256xbf16, #tpu.memory_space<vmem>>, %arg6: memref<256x128xbf16, #tpu.memory_space<vmem>>, %arg7: memref<128x128xf32, #tpu.memory_space<vmem>>, %arg8: memref<128x512xbf16, #tpu.memory_space<vmem>>, %arg9: memref<512x128xbf16, #tpu.memory_space<vmem>>, %arg10: memref<8x8xf32, #tpu.memory_space<vmem>>, %arg11: memref<256x128xbf16, #tpu.memory_space<vmem>>, %arg12: memref<256x8xbf16, #tpu.memory_space<vmem>>, %arg13: memref<8x8xbf16, #tpu.memory_space<vmem>>, %arg14: memref<4x8xf32, #tpu.memory_space<vmem>>) attributes {dimension_semantics = [], scalar_prefetch = 0 : i64, scratch_operands = 0 : i64, tpu.core_type = #tpu.core_type<tc>} {
    %c0 = arith.constant 0 : index
    %c0_0 = arith.constant 0 : index
    %0 = vector.load %arg7[%c0, %c0_0] : memref<128x128xf32, #tpu.memory_space<vmem>>, vector<128x128xf32>
    %c0_1 = arith.constant 0 : index
    %c0_2 = arith.constant 0 : index
    %1 = vector.load %arg0[%c0_1, %c0_2] : memref<4x16xf32, #tpu.memory_space<vmem>>, vector<4x16xf32>
    %c0_3 = arith.constant 0 : index
    %c0_4 = arith.constant 0 : index
    %2 = vector.load %arg4[%c0_3, %c0_4] : memref<16x8xbf16, #tpu.memory_space<vmem>>, vector<16x8xbf16>
    %3 = arith.truncf %1 : vector<4x16xf32> to vector<4x16xbf16>
    %cst = arith.constant dense<0.000000e+00> : vector<4x8xf32>
    %4 = tpu.matmul %3, %2, %cst {dimension_numbers = #tpu.dot_dimension_numbers<[1], [0], [0], [1], [0, 0, 1, 1], [], []>} : vector<4x16xbf16>, vector<16x8xbf16>, vector<4x8xf32> -> vector<4x8xf32>
    %c0_5 = arith.constant 0 : index
    %c0_6 = arith.constant 0 : index
    %5 = vector.load %arg3[%c0_5, %c0_6] : memref<14x512xf32, #tpu.memory_space<vmem>>, vector<1x8xf32>
    %6 = vector.broadcast %5 : vector<1x8xf32> to vector<4x8xf32>
    %7 = arith.addf %4, %6 : vector<4x8xf32>
    %cst_7 = arith.constant 0.000000e+00 : f32
    %8 = vector.broadcast %cst_7 : f32 to vector<4x8xf32>
    %9 = arith.maximumf %7, %8 : vector<4x8xf32>
    %c0_8 = arith.constant 0 : index
    %c0_9 = arith.constant 0 : index
    %10 = vector.load %arg5[%c0_8, %c0_9] : memref<8x256xbf16, #tpu.memory_space<vmem>>, vector<8x256xbf16>
    %11 = arith.truncf %9 : vector<4x8xf32> to vector<4x8xbf16>
    %cst_10 = arith.constant dense<0.000000e+00> : vector<4x256xf32>
    %12 = tpu.matmul %11, %10, %cst_10 {dimension_numbers = #tpu.dot_dimension_numbers<[1], [0], [0], [1], [0, 0, 1, 1], [], []>} : vector<4x8xbf16>, vector<8x256xbf16>, vector<4x256xf32> -> vector<4x256xf32>
    %c1 = arith.constant 1 : index
    %c0_11 = arith.constant 0 : index
    %13 = vector.load %arg3[%c1, %c0_11] : memref<14x512xf32, #tpu.memory_space<vmem>>, vector<1x256xf32>
    %14 = vector.broadcast %13 : vector<1x256xf32> to vector<4x256xf32>
    %15 = arith.addf %12, %14 : vector<4x256xf32>
    %cst_12 = arith.constant 0.000000e+00 : f32
    %16 = vector.broadcast %cst_12 : f32 to vector<4x256xf32>
    %17 = arith.maximumf %15, %16 : vector<4x256xf32>
    %c0_13 = arith.constant 0 : index
    %c0_14 = arith.constant 0 : index
    %18 = vector.load %arg6[%c0_13, %c0_14] : memref<256x128xbf16, #tpu.memory_space<vmem>>, vector<256x128xbf16>
    %19 = arith.truncf %17 : vector<4x256xf32> to vector<4x256xbf16>
    %cst_15 = arith.constant dense<0.000000e+00> : vector<4x128xf32>
    %20 = tpu.matmul %19, %18, %cst_15 {dimension_numbers = #tpu.dot_dimension_numbers<[1], [0], [0], [1], [0, 0, 1, 1], [], []>} : vector<4x256xbf16>, vector<256x128xbf16>, vector<4x128xf32> -> vector<4x128xf32>
    %c2 = arith.constant 2 : index
    %c0_16 = arith.constant 0 : index
    %21 = vector.load %arg3[%c2, %c0_16] : memref<14x512xf32, #tpu.memory_space<vmem>>, vector<1x128xf32>
    %22 = vector.broadcast %21 : vector<1x128xf32> to vector<4x128xf32>
    %23 = arith.addf %20, %22 : vector<4x128xf32>
    %cst_17 = arith.constant 0.000000e+00 : f32
    %24 = vector.broadcast %cst_17 : f32 to vector<4x128xf32>
    %25 = arith.maximumf %23, %24 : vector<4x128xf32>
    %c3 = arith.constant 3 : index
    %c0_18 = arith.constant 0 : index
    %26 = vector.load %arg3[%c3, %c0_18] : memref<14x512xf32, #tpu.memory_space<vmem>>, vector<1x128xf32>
    %27 = vector.broadcast %26 : vector<1x128xf32> to vector<4x128xf32>
    %28 = arith.addf %25, %27 : vector<4x128xf32>
    %cst_19 = arith.constant dense<0.000000e+00> : vector<128xf32>
    %29 = vector.multi_reduction <add>, %28, %cst_19 [0] : vector<4x128xf32> to vector<128xf32>
    %30 = vector.shape_cast %29 : vector<128xf32> to vector<1x128xf32>
    %cst_20 = arith.constant 4.000000e+00 : f32
    %31 = vector.broadcast %cst_20 : f32 to vector<1x128xf32>
    %32 = arith.divf %30, %31 : vector<1x128xf32>
    %33 = arith.mulf %28, %28 : vector<4x128xf32>
    %cst_21 = arith.constant dense<0.000000e+00> : vector<128xf32>
    %34 = vector.multi_reduction <add>, %33, %cst_21 [0] : vector<4x128xf32> to vector<128xf32>
    %35 = vector.shape_cast %34 : vector<128xf32> to vector<1x128xf32>
    %cst_22 = arith.constant 4.000000e+00 : f32
    %36 = vector.broadcast %cst_22 : f32 to vector<1x128xf32>
    %37 = arith.divf %35, %36 : vector<1x128xf32>
    %38 = tpu.concatenate %32, %37 in 0 : vector<1x128xf32>, vector<1x128xf32> -> vector<2x128xf32>
    %cst_23 = arith.constant dense<0.000000e+00> : vector<2x128xf32>
    %39 = tpu.matmul %38, %0, %cst_23 {dimension_numbers = #tpu.dot_dimension_numbers<[1], [0], [0], [1], [0, 0, 1, 1], [], []>} : vector<2x128xf32>, vector<128x128xf32>, vector<2x128xf32> -> vector<2x128xf32>
    %40 = vector.extract_strided_slice %39 {offsets = [0, 0], sizes = [1, 128], strides = [1, 1]} : vector<2x128xf32> to vector<1x128xf32>
    %41 = vector.extract_strided_slice %39 {offsets = [1, 0], sizes = [1, 128], strides = [1, 1]} : vector<2x128xf32> to vector<1x128xf32>
    %42 = arith.mulf %40, %40 : vector<1x128xf32>
    %43 = arith.subf %41, %42 : vector<1x128xf32>
    %cst_24 = arith.constant 0.000000e+00 : f32
    %44 = vector.broadcast %cst_24 : f32 to vector<1x128xf32>
    %45 = arith.maximumf %43, %44 : vector<1x128xf32>
    %46 = vector.broadcast %40 : vector<1x128xf32> to vector<4x128xf32>
    %47 = arith.subf %28, %46 : vector<4x128xf32>
    %cst_25 = arith.constant 9.99999974E-6 : f32
    %48 = vector.broadcast %cst_25 : f32 to vector<1x128xf32>
    %49 = arith.addf %45, %48 : vector<1x128xf32>
    %50 = math.rsqrt %49 : vector<1x128xf32>
    %51 = vector.broadcast %50 : vector<1x128xf32> to vector<4x128xf32>
    %52 = arith.mulf %47, %51 : vector<4x128xf32>
    %c4 = arith.constant 4 : index
    %c0_26 = arith.constant 0 : index
    %53 = vector.load %arg3[%c4, %c0_26] : memref<14x512xf32, #tpu.memory_space<vmem>>, vector<1x128xf32>
    %54 = vector.broadcast %53 : vector<1x128xf32> to vector<4x128xf32>
    %55 = arith.mulf %52, %54 : vector<4x128xf32>
    %c5 = arith.constant 5 : index
    %c0_27 = arith.constant 0 : index
    %56 = vector.load %arg3[%c5, %c0_27] : memref<14x512xf32, #tpu.memory_space<vmem>>, vector<1x128xf32>
    %57 = vector.broadcast %56 : vector<1x128xf32> to vector<4x128xf32>
    %58 = arith.addf %55, %57 : vector<4x128xf32>
    %c0_28 = arith.constant 0 : index
    %c0_29 = arith.constant 0 : index
    %59 = vector.load %arg8[%c0_28, %c0_29] : memref<128x512xbf16, #tpu.memory_space<vmem>>, vector<128x512xbf16>
    %60 = arith.truncf %58 : vector<4x128xf32> to vector<4x128xbf16>
    %cst_30 = arith.constant dense<0.000000e+00> : vector<4x512xf32>
    %61 = tpu.matmul %60, %59, %cst_30 {dimension_numbers = #tpu.dot_dimension_numbers<[1], [0], [0], [1], [0, 0, 1, 1], [], []>} : vector<4x128xbf16>, vector<128x512xbf16>, vector<4x512xf32> -> vector<4x512xf32>
    %c10 = arith.constant 10 : index
    %c0_31 = arith.constant 0 : index
    %62 = vector.load %arg3[%c10, %c0_31] : memref<14x512xf32, #tpu.memory_space<vmem>>, vector<1x512xf32>
    %63 = vector.broadcast %62 : vector<1x512xf32> to vector<4x512xf32>
    %64 = arith.addf %61, %63 : vector<4x512xf32>
    %cst_32 = arith.constant 0.000000e+00 : f32
    %65 = vector.broadcast %cst_32 : f32 to vector<4x512xf32>
    %66 = arith.maximumf %64, %65 : vector<4x512xf32>
    %c0_33 = arith.constant 0 : index
    %c0_34 = arith.constant 0 : index
    %67 = vector.load %arg9[%c0_33, %c0_34] : memref<512x128xbf16, #tpu.memory_space<vmem>>, vector<512x128xbf16>
    %68 = arith.truncf %66 : vector<4x512xf32> to vector<4x512xbf16>
    %cst_35 = arith.constant dense<0.000000e+00> : vector<4x128xf32>
    %69 = tpu.matmul %68, %67, %cst_35 {dimension_numbers = #tpu.dot_dimension_numbers<[1], [0], [0], [1], [0, 0, 1, 1], [], []>} : vector<4x512xbf16>, vector<512x128xbf16>, vector<4x128xf32> -> vector<4x128xf32>
    %c11 = arith.constant 11 : index
    %c0_36 = arith.constant 0 : index
    %70 = vector.load %arg3[%c11, %c0_36] : memref<14x512xf32, #tpu.memory_space<vmem>>, vector<1x128xf32>
    %71 = vector.broadcast %70 : vector<1x128xf32> to vector<4x128xf32>
    %72 = arith.addf %69, %71 : vector<4x128xf32>
    %73 = vector.shape_cast %72 : vector<4x128xf32> to vector<4x16x8xf32>
    %74 = vector.extract_strided_slice %73 {offsets = [0, 0, 0], sizes = [4, 8, 8], strides = [1, 1, 1]} : vector<4x16x8xf32> to vector<4x8x8xf32>
    %75 = vector.extract_strided_slice %73 {offsets = [0, 8, 0], sizes = [4, 8, 8], strides = [1, 1, 1]} : vector<4x16x8xf32> to vector<4x8x8xf32>
    %cst_37 = arith.constant dense<0.000000e+00> : vector<4x8xf32>
    %76 = vector.multi_reduction <add>, %74, %cst_37 [1] : vector<4x8x8xf32> to vector<4x8xf32>
    %77 = vector.shape_cast %76 : vector<4x8xf32> to vector<4x1x8xf32>
    %78 = vector.broadcast %77 : vector<4x1x8xf32> to vector<4x8x8xf32>
    %79 = arith.mulf %74, %78 : vector<4x8x8xf32>
    %cst_38 = arith.constant dense<0.000000e+00> : vector<4x8xf32>
    %80 = vector.multi_reduction <add>, %79, %cst_38 [2] : vector<4x8x8xf32> to vector<4x8xf32>
    "tpu.trace_start"() <{level = 10 : i32, message = "bc,dc->bd"}> : () -> ()
    %cst_39 = arith.constant dense<0.000000e+00> : vector<4x4xf32>
    %81 = tpu.matmul %80, %80, %cst_39 {dimension_numbers = #tpu.dot_dimension_numbers<[1], [1], [0], [0], [0, 0, 1, 0], [], []>} : vector<4x8xf32>, vector<4x8xf32>, vector<4x4xf32> -> vector<4x4xf32>
    "tpu.trace_stop"() : () -> ()
    %c0_40 = arith.constant 0 : index
    %c0_41 = arith.constant 0 : index
    %82 = vector.load %arg1[%c0_40, %c0_41] : memref<4x4xf32, #tpu.memory_space<vmem>>, vector<4x4xf32>
    %cst_42 = arith.constant dense<0xFF800000> : vector<4xf32>
    %83 = vector.multi_reduction <maximumf>, %81, %cst_42 [1] : vector<4x4xf32> to vector<4xf32>
    %84 = vector.shape_cast %83 : vector<4xf32> to vector<4x1xf32>
    %85 = vector.broadcast %84 : vector<4x1xf32> to vector<4x4xf32>
    %86 = arith.subf %81, %85 : vector<4x4xf32>
    %87 = math.exp %86 : vector<4x4xf32>
    %cst_43 = arith.constant dense<0.000000e+00> : vector<4xf32>
    %88 = vector.multi_reduction <add>, %87, %cst_43 [1] : vector<4x4xf32> to vector<4xf32>
    %89 = vector.shape_cast %88 : vector<4xf32> to vector<4x1xf32>
    %90 = vector.broadcast %89 : vector<4x1xf32> to vector<4x4xf32>
    %91 = arith.divf %87, %90 : vector<4x4xf32>
    %cst_44 = arith.constant dense<0xFF800000> : vector<4xf32>
    %92 = vector.multi_reduction <maximumf>, %91, %cst_44 [1] : vector<4x4xf32> to vector<4xf32>
    %93 = vector.shape_cast %92 : vector<4xf32> to vector<4x1xf32>
    %94 = vector.broadcast %93 : vector<4x1xf32> to vector<4x4xf32>
    %95 = arith.subf %91, %94 : vector<4x4xf32>
    %96 = math.exp %95 : vector<4x4xf32>
    %cst_45 = arith.constant dense<0.000000e+00> : vector<4xf32>
    %97 = vector.multi_reduction <add>, %96, %cst_45 [1] : vector<4x4xf32> to vector<4xf32>
    %98 = vector.shape_cast %97 : vector<4xf32> to vector<4x1xf32>
    %99 = vector.broadcast %98 : vector<4x1xf32> to vector<4x4xf32>
    %100 = arith.divf %96, %99 : vector<4x4xf32>
    %101 = arith.addf %82, %100 : vector<4x4xf32>
    %cst_46 = arith.constant dense<0xFF800000> : vector<4xf32>
    %102 = vector.multi_reduction <maximumf>, %101, %cst_46 [1] : vector<4x4xf32> to vector<4xf32>
    %103 = vector.shape_cast %102 : vector<4xf32> to vector<4x1xf32>
    %104 = vector.broadcast %103 : vector<4x1xf32> to vector<4x4xf32>
    %105 = arith.subf %101, %104 : vector<4x4xf32>
    %106 = math.exp %105 : vector<4x4xf32>
    %cst_47 = arith.constant dense<0.000000e+00> : vector<4xf32>
    %107 = vector.multi_reduction <add>, %106, %cst_47 [1] : vector<4x4xf32> to vector<4xf32>
    %108 = vector.shape_cast %107 : vector<4xf32> to vector<4x1xf32>
    %109 = vector.broadcast %108 : vector<4x1xf32> to vector<4x4xf32>
    %110 = arith.divf %106, %109 : vector<4x4xf32>
    %cst_48 = arith.constant 0.000000e+00 : f32
    %111 = vector.broadcast %cst_48 : f32 to vector<4x4xf32>
    %112 = arith.subf %111, %110 : vector<4x4xf32>
    %113 = math.exp %112 : vector<4x4xf32>
    %cst_49 = arith.constant 1.000000e+00 : f32
    %114 = vector.broadcast %cst_49 : f32 to vector<4x4xf32>
    %115 = arith.addf %114, %113 : vector<4x4xf32>
    %cst_50 = arith.constant 1.000000e+00 : f32
    %116 = vector.broadcast %cst_50 : f32 to vector<4x4xf32>
    %117 = arith.divf %116, %115 : vector<4x4xf32>
    %cst_51 = arith.constant dense<0.000000e+00> : vector<4x128xf32>
    %118 = tpu.matmul %117, %58, %cst_51 {dimension_numbers = #tpu.dot_dimension_numbers<[1], [0], [0], [1], [0, 0, 1, 1], [], []>} : vector<4x4xf32>, vector<4x128xf32>, vector<4x128xf32> -> vector<4x128xf32>
    %c0_52 = arith.constant 0 : index
    %c0_53 = arith.constant 0 : index
    %119 = vector.load %arg11[%c0_52, %c0_53] : memref<256x128xbf16, #tpu.memory_space<vmem>>, vector<128x128xbf16>
    %120 = arith.truncf %118 : vector<4x128xf32> to vector<4x128xbf16>
    %cst_54 = arith.constant dense<0.000000e+00> : vector<4x128xf32>
    %121 = tpu.matmul %120, %119, %cst_54 {dimension_numbers = #tpu.dot_dimension_numbers<[1], [0], [0], [1], [0, 0, 1, 1], [], []>} : vector<4x128xbf16>, vector<128x128xbf16>, vector<4x128xf32> -> vector<4x128xf32>
    %cst_55 = arith.constant dense<0.000000e+00> : vector<128xf32>
    %122 = vector.multi_reduction <add>, %121, %cst_55 [0] : vector<4x128xf32> to vector<128xf32>
    %123 = vector.shape_cast %122 : vector<128xf32> to vector<1x128xf32>
    %cst_56 = arith.constant 4.000000e+00 : f32
    %124 = vector.broadcast %cst_56 : f32 to vector<1x128xf32>
    %125 = arith.divf %123, %124 : vector<1x128xf32>
    %126 = arith.mulf %121, %121 : vector<4x128xf32>
    %cst_57 = arith.constant dense<0.000000e+00> : vector<128xf32>
    %127 = vector.multi_reduction <add>, %126, %cst_57 [0] : vector<4x128xf32> to vector<128xf32>
    %128 = vector.shape_cast %127 : vector<128xf32> to vector<1x128xf32>
    %cst_58 = arith.constant 4.000000e+00 : f32
    %129 = vector.broadcast %cst_58 : f32 to vector<1x128xf32>
    %130 = arith.divf %128, %129 : vector<1x128xf32>
    %131 = tpu.concatenate %125, %130 in 0 : vector<1x128xf32>, vector<1x128xf32> -> vector<2x128xf32>
    %cst_59 = arith.constant dense<0.000000e+00> : vector<2x128xf32>
    %132 = tpu.matmul %131, %0, %cst_59 {dimension_numbers = #tpu.dot_dimension_numbers<[1], [0], [0], [1], [0, 0, 1, 1], [], []>} : vector<2x128xf32>, vector<128x128xf32>, vector<2x128xf32> -> vector<2x128xf32>
    %133 = vector.extract_strided_slice %132 {offsets = [0, 0], sizes = [1, 128], strides = [1, 1]} : vector<2x128xf32> to vector<1x128xf32>
    %134 = vector.extract_strided_slice %132 {offsets = [1, 0], sizes = [1, 128], strides = [1, 1]} : vector<2x128xf32> to vector<1x128xf32>
    %135 = arith.mulf %133, %133 : vector<1x128xf32>
    %136 = arith.subf %134, %135 : vector<1x128xf32>
    %cst_60 = arith.constant 0.000000e+00 : f32
    %137 = vector.broadcast %cst_60 : f32 to vector<1x128xf32>
    %138 = arith.maximumf %136, %137 : vector<1x128xf32>
    %139 = vector.broadcast %133 : vector<1x128xf32> to vector<4x128xf32>
    %140 = arith.subf %121, %139 : vector<4x128xf32>
    %cst_61 = arith.constant 9.99999974E-6 : f32
    %141 = vector.broadcast %cst_61 : f32 to vector<1x128xf32>
    %142 = arith.addf %138, %141 : vector<1x128xf32>
    %143 = math.rsqrt %142 : vector<1x128xf32>
    %144 = vector.broadcast %143 : vector<1x128xf32> to vector<4x128xf32>
    %145 = arith.mulf %140, %144 : vector<4x128xf32>
    %c6 = arith.constant 6 : index
    %c0_62 = arith.constant 0 : index
    %146 = vector.load %arg3[%c6, %c0_62] : memref<14x512xf32, #tpu.memory_space<vmem>>, vector<1x128xf32>
    %147 = vector.broadcast %146 : vector<1x128xf32> to vector<4x128xf32>
    %148 = arith.mulf %145, %147 : vector<4x128xf32>
    %c7 = arith.constant 7 : index
    %c0_63 = arith.constant 0 : index
    %149 = vector.load %arg3[%c7, %c0_63] : memref<14x512xf32, #tpu.memory_space<vmem>>, vector<1x128xf32>
    %150 = vector.broadcast %149 : vector<1x128xf32> to vector<4x128xf32>
    %151 = arith.addf %148, %150 : vector<4x128xf32>
    %cst_64 = arith.constant 0.000000e+00 : f32
    %152 = vector.broadcast %cst_64 : f32 to vector<4x128xf32>
    %153 = arith.maximumf %151, %152 : vector<4x128xf32>
    %c0_65 = arith.constant 0 : index
    %c0_66 = arith.constant 0 : index
    %154 = vector.load %arg2[%c0_65, %c0_66] : memref<4x256xf32, #tpu.memory_space<vmem>>, vector<4x128xf32>
    %155 = arith.mulf %153, %154 : vector<4x128xf32>
    "tpu.trace_start"() <{level = 10 : i32, message = "bco,bdo->bcd"}> : () -> ()
    %cst_67 = arith.constant dense<0.000000e+00> : vector<4x8x8xf32>
    %156 = tpu.matmul %75, %75, %cst_67 {dimension_numbers = #tpu.dot_dimension_numbers<[2], [2], [1], [1], [0, 0, 0, 1, 1, 1], [0], [0]>} : vector<4x8x8xf32>, vector<4x8x8xf32>, vector<4x8x8xf32> -> vector<4x8x8xf32>
    "tpu.trace_stop"() : () -> ()
    %cst_68 = arith.constant dense<0xFF800000> : vector<4x8xf32>
    %157 = vector.multi_reduction <maximumf>, %156, %cst_68 [1] : vector<4x8x8xf32> to vector<4x8xf32>
    %158 = vector.shape_cast %157 : vector<4x8xf32> to vector<4x1x8xf32>
    %159 = vector.broadcast %158 : vector<4x1x8xf32> to vector<4x8x8xf32>
    %160 = arith.subf %156, %159 : vector<4x8x8xf32>
    %161 = math.exp %160 : vector<4x8x8xf32>
    %cst_69 = arith.constant dense<0.000000e+00> : vector<4x8xf32>
    %162 = vector.multi_reduction <add>, %161, %cst_69 [1] : vector<4x8x8xf32> to vector<4x8xf32>
    %163 = vector.shape_cast %162 : vector<4x8xf32> to vector<4x1x8xf32>
    %164 = vector.broadcast %163 : vector<4x1x8xf32> to vector<4x8x8xf32>
    %165 = arith.divf %161, %164 : vector<4x8x8xf32>
    %c0_70 = arith.constant 0 : index
    %c0_71 = arith.constant 0 : index
    %166 = vector.load %arg10[%c0_70, %c0_71] : memref<8x8xf32, #tpu.memory_space<vmem>>, vector<8x8xf32>
    %167 = vector.shape_cast %166 : vector<8x8xf32> to vector<1x8x8xf32>
    %168 = vector.broadcast %167 : vector<1x8x8xf32> to vector<4x8x8xf32>
    %169 = arith.addf %168, %165 : vector<4x8x8xf32>
    %170 = vector.shape_cast %58 : vector<4x128xf32> to vector<4x8x16xf32>
    "tpu.trace_start"() <{level = 10 : i32, message = "bcd,bdf->bcf"}> : () -> ()
    %cst_72 = arith.constant dense<0.000000e+00> : vector<4x8x16xf32>
    %171 = tpu.matmul %169, %170, %cst_72 {dimension_numbers = #tpu.dot_dimension_numbers<[2], [1], [1], [2], [0, 0, 0, 1, 1, 2], [0], [0]>} : vector<4x8x8xf32>, vector<4x8x16xf32>, vector<4x8x16xf32> -> vector<4x8x16xf32>
    "tpu.trace_stop"() : () -> ()
    %172 = vector.shape_cast %171 : vector<4x8x16xf32> to vector<4x128xf32>
    %c128 = arith.constant 128 : index
    %c0_73 = arith.constant 0 : index
    %173 = vector.load %arg11[%c128, %c0_73] : memref<256x128xbf16, #tpu.memory_space<vmem>>, vector<128x128xbf16>
    %174 = arith.truncf %172 : vector<4x128xf32> to vector<4x128xbf16>
    %cst_74 = arith.constant dense<0.000000e+00> : vector<4x128xf32>
    %175 = tpu.matmul %174, %173, %cst_74 {dimension_numbers = #tpu.dot_dimension_numbers<[1], [0], [0], [1], [0, 0, 1, 1], [], []>} : vector<4x128xbf16>, vector<128x128xbf16>, vector<4x128xf32> -> vector<4x128xf32>
    %cst_75 = arith.constant dense<0.000000e+00> : vector<128xf32>
    %176 = vector.multi_reduction <add>, %175, %cst_75 [0] : vector<4x128xf32> to vector<128xf32>
    %177 = vector.shape_cast %176 : vector<128xf32> to vector<1x128xf32>
    %cst_76 = arith.constant 4.000000e+00 : f32
    %178 = vector.broadcast %cst_76 : f32 to vector<1x128xf32>
    %179 = arith.divf %177, %178 : vector<1x128xf32>
    %180 = arith.mulf %175, %175 : vector<4x128xf32>
    %cst_77 = arith.constant dense<0.000000e+00> : vector<128xf32>
    %181 = vector.multi_reduction <add>, %180, %cst_77 [0] : vector<4x128xf32> to vector<128xf32>
    %182 = vector.shape_cast %181 : vector<128xf32> to vector<1x128xf32>
    %cst_78 = arith.constant 4.000000e+00 : f32
    %183 = vector.broadcast %cst_78 : f32 to vector<1x128xf32>
    %184 = arith.divf %182, %183 : vector<1x128xf32>
    %185 = tpu.concatenate %179, %184 in 0 : vector<1x128xf32>, vector<1x128xf32> -> vector<2x128xf32>
    %cst_79 = arith.constant dense<0.000000e+00> : vector<2x128xf32>
    %186 = tpu.matmul %185, %0, %cst_79 {dimension_numbers = #tpu.dot_dimension_numbers<[1], [0], [0], [1], [0, 0, 1, 1], [], []>} : vector<2x128xf32>, vector<128x128xf32>, vector<2x128xf32> -> vector<2x128xf32>
    %187 = vector.extract_strided_slice %186 {offsets = [0, 0], sizes = [1, 128], strides = [1, 1]} : vector<2x128xf32> to vector<1x128xf32>
    %188 = vector.extract_strided_slice %186 {offsets = [1, 0], sizes = [1, 128], strides = [1, 1]} : vector<2x128xf32> to vector<1x128xf32>
    %189 = arith.mulf %187, %187 : vector<1x128xf32>
    %190 = arith.subf %188, %189 : vector<1x128xf32>
    %cst_80 = arith.constant 0.000000e+00 : f32
    %191 = vector.broadcast %cst_80 : f32 to vector<1x128xf32>
    %192 = arith.maximumf %190, %191 : vector<1x128xf32>
    %193 = vector.broadcast %187 : vector<1x128xf32> to vector<4x128xf32>
    %194 = arith.subf %175, %193 : vector<4x128xf32>
    %cst_81 = arith.constant 9.99999974E-6 : f32
    %195 = vector.broadcast %cst_81 : f32 to vector<1x128xf32>
    %196 = arith.addf %192, %195 : vector<1x128xf32>
    %197 = math.rsqrt %196 : vector<1x128xf32>
    %198 = vector.broadcast %197 : vector<1x128xf32> to vector<4x128xf32>
    %199 = arith.mulf %194, %198 : vector<4x128xf32>
    %c8 = arith.constant 8 : index
    %c0_82 = arith.constant 0 : index
    %200 = vector.load %arg3[%c8, %c0_82] : memref<14x512xf32, #tpu.memory_space<vmem>>, vector<1x128xf32>
    %201 = vector.broadcast %200 : vector<1x128xf32> to vector<4x128xf32>
    %202 = arith.mulf %199, %201 : vector<4x128xf32>
    %c9 = arith.constant 9 : index
    %c0_83 = arith.constant 0 : index
    %203 = vector.load %arg3[%c9, %c0_83] : memref<14x512xf32, #tpu.memory_space<vmem>>, vector<1x128xf32>
    %204 = vector.broadcast %203 : vector<1x128xf32> to vector<4x128xf32>
    %205 = arith.addf %202, %204 : vector<4x128xf32>
    %cst_84 = arith.constant 0.000000e+00 : f32
    %206 = vector.broadcast %cst_84 : f32 to vector<4x128xf32>
    %207 = arith.maximumf %205, %206 : vector<4x128xf32>
    %c0_85 = arith.constant 0 : index
    %c128_86 = arith.constant 128 : index
    %208 = vector.load %arg2[%c0_85, %c128_86] : memref<4x256xf32, #tpu.memory_space<vmem>>, vector<4x128xf32>
    %209 = arith.mulf %207, %208 : vector<4x128xf32>
    %210 = tpu.concatenate %155, %209 in 1 : vector<4x128xf32>, vector<4x128xf32> -> vector<4x256xf32>
    %c0_87 = arith.constant 0 : index
    %c0_88 = arith.constant 0 : index
    %211 = vector.load %arg12[%c0_87, %c0_88] : memref<256x8xbf16, #tpu.memory_space<vmem>>, vector<256x8xbf16>
    %212 = arith.truncf %210 : vector<4x256xf32> to vector<4x256xbf16>
    %cst_89 = arith.constant dense<0.000000e+00> : vector<4x8xf32>
    %213 = tpu.matmul %212, %211, %cst_89 {dimension_numbers = #tpu.dot_dimension_numbers<[1], [0], [0], [1], [0, 0, 1, 1], [], []>} : vector<4x256xbf16>, vector<256x8xbf16>, vector<4x8xf32> -> vector<4x8xf32>
    %c12 = arith.constant 12 : index
    %c0_90 = arith.constant 0 : index
    %214 = vector.load %arg3[%c12, %c0_90] : memref<14x512xf32, #tpu.memory_space<vmem>>, vector<1x8xf32>
    %215 = vector.broadcast %214 : vector<1x8xf32> to vector<4x8xf32>
    %216 = arith.addf %213, %215 : vector<4x8xf32>
    %cst_91 = arith.constant 0.000000e+00 : f32
    %217 = vector.broadcast %cst_91 : f32 to vector<4x8xf32>
    %218 = arith.maximumf %216, %217 : vector<4x8xf32>
    %c0_92 = arith.constant 0 : index
    %c0_93 = arith.constant 0 : index
    %219 = vector.load %arg13[%c0_92, %c0_93] : memref<8x8xbf16, #tpu.memory_space<vmem>>, vector<8x8xbf16>
    %220 = arith.truncf %218 : vector<4x8xf32> to vector<4x8xbf16>
    %cst_94 = arith.constant dense<0.000000e+00> : vector<4x8xf32>
    %221 = tpu.matmul %220, %219, %cst_94 {dimension_numbers = #tpu.dot_dimension_numbers<[1], [0], [0], [1], [0, 0, 1, 1], [], []>} : vector<4x8xbf16>, vector<8x8xbf16>, vector<4x8xf32> -> vector<4x8xf32>
    %c13 = arith.constant 13 : index
    %c0_95 = arith.constant 0 : index
    %222 = vector.load %arg3[%c13, %c0_95] : memref<14x512xf32, #tpu.memory_space<vmem>>, vector<1x8xf32>
    %223 = vector.broadcast %222 : vector<1x8xf32> to vector<4x8xf32>
    %224 = arith.addf %221, %223 : vector<4x8xf32>
    %c0_96 = arith.constant 0 : index
    %c0_97 = arith.constant 0 : index
    %225 = vector.load %arg14[%c0_96, %c0_97] : memref<4x8xf32, #tpu.memory_space<vmem>>, vector<4x8xf32>
    tpu.vector_store %arg14[%c0_96, %c0_97], %224 {strides = array<i32>} : memref<4x8xf32, #tpu.memory_space<vmem>>, vector<4x8xf32>,
    return
  }
}

</mosaic_0001>

<llo_original>
// kernel: tpu_custom_call.1
$region0: #{tpu_custom_call.1}
  #allocation0 [shape = 'u32[]', space=smem, size = 0x4, offset = 0x4, fixed_abs, tag = 'smem constant byte address 0x4 - core index']
  #allocation1 [shape = 'u32[144,128]{1,0:T(1,128)}', space=vmem, size = 0x12000, scoped, tag = 'internal scratch']
  %s0 = inlined_call_operand.vmem [shape: f32[4,16], index: 0, kind: input, shape index: {}]
  %s1 = inlined_call_operand.vmem [shape: f32[4,4], index: 1, kind: input, shape index: {}]
  %s2 = inlined_call_operand.vmem [shape: f32[4,256], index: 2, kind: input, shape index: {}]
  %s3 = inlined_call_operand.hbm [shape: f32[14,512], index: 3, kind: input, shape index: {}]
  %s4 = inlined_call_operand.vmem [shape: bf16[16,8], index: 4, kind: input, shape index: {}]
  %s5 = inlined_call_operand.vmem [shape: bf16[8,256], index: 5, kind: input, shape index: {}]
  %s6 = inlined_call_operand.vmem [shape: bf16[256,128], index: 6, kind: input, shape index: {}]
  %s7 = inlined_call_operand.hbm [shape: f32[128,128], index: 7, kind: input, shape index: {}]
  %s8 = inlined_call_operand.hbm [shape: bf16[128,512], index: 8, kind: input, shape index: {}]
  %s9 = inlined_call_operand.hbm [shape: bf16[512,128], index: 9, kind: input, shape index: {}]
  %s10 = inlined_call_operand.vmem [shape: f32[8,8], index: 10, kind: input, shape index: {}]
  %s11 = inlined_call_operand.hbm [shape: bf16[256,128], index: 11, kind: input, shape index: {}]
  %s12 = inlined_call_operand.vmem [shape: bf16[256,8], index: 12, kind: input, shape index: {}]
  %s13 = inlined_call_operand.vmem [shape: bf16[8,8], index: 13, kind: input, shape index: {}]
  %s14 = inlined_call_operand.hbm [shape: f32[4,8], index: 14, kind: output, shape index: {}]
  %s15 = sld [smem:[#allocation0]]
  $region86: #{tpu_custom_call.1} parent=0
    _
  %s17 = ssub.s32 1, %s15
  %s18 = scalar_select 0, %s17, %s15
  $region1: #{tpu_custom_call.1} parent=0
    #allocation2 [shape = 'u8[32768]{0}', space=vmem, size = 0x8000, scoped, tag = 'input window, operand 3, single buffered']
    #allocation3 [shape = 's32[1]{0}', space=sflag, size = 0x4, scoped, tag = 'scoped memory for tpu_custom_call.1']
    #allocation4 [shape = 's32[1]{0}', space=sflag, size = 0x4, scoped, tag = 'scoped memory for tpu_custom_call.1']
    #allocation5 [shape = 'u8[65536]{0}', space=vmem, size = 0x10000, scoped, tag = 'input window, operand 7, single buffered']
    #allocation6 [shape = 's32[1]{0}', space=sflag, size = 0x4, scoped, tag = 'scoped memory for tpu_custom_call.1']
    #allocation7 [shape = 'u8[131072]{0}', space=vmem, size = 0x20000, scoped, tag = 'input window, operand 8, single buffered']
    #allocation8 [shape = 'u8[131072]{0}', space=vmem, size = 0x20000, scoped, tag = 'input window, operand 9, single buffered']
    #allocation9 [shape = 's32[1]{0}', space=sflag, size = 0x4, scoped, tag = 'scoped memory for tpu_custom_call.1']
    #allocation10 [shape = 'u8[65536]{0}', space=vmem, size = 0x10000, scoped, tag = 'input window, operand 11, single buffered']
    #allocation11 [shape = 'u8[2048]{0}', space=vmem, size = 0x800, scoped, tag = 'output window, operand 0, single buffered']
    %19 = vsyncpa [#allocation3], 0
    %20 = vsyncpa [#allocation6], 0
    %21 = vsyncpa [#allocation9], 0
    %22 = vsyncpa [#allocation4], 0
    // Predicated region
    $region2: #{tpu_custom_call.1} parent=1 // pred_check
      _
    $region3: #{tpu_custom_call.1} parent=1 // pred_check_branch
      %24 = sbr.rel (0) target = $region5
    $region4: #{tpu_custom_call.1} parent=1 // pred_region
      _
    $region5: #{tpu_custom_call.1} parent=1 // pred_fallthru
      _
    // Predicated region
    $region6: #{tpu_custom_call.1} parent=1 // pred_check
      _
    $region7: #{tpu_custom_call.1} parent=1 // pred_check_branch
      %26 = sbr.rel (0) target = $region9
    $region8: #{tpu_custom_call.1} parent=1 // pred_region
      _
    $region9: #{tpu_custom_call.1} parent=1 // pred_fallthru
      _
    // Predicated region
    $region10: #{tpu_custom_call.1} parent=1 // pred_check
      _
    $region11: #{tpu_custom_call.1} parent=1 // pred_check_branch
      %28 = sbr.rel (0) target = $region13
    $region12: #{tpu_custom_call.1} parent=1 // pred_region
      _
    $region13: #{tpu_custom_call.1} parent=1 // pred_fallthru
      _
    // Predicated region
    $region14: #{tpu_custom_call.1} parent=1 // pred_check
      _
    $region15: #{tpu_custom_call.1} parent=1 // pred_check_branch
      %30 = sbr.rel (0) target = $region17
    $region16: #{tpu_custom_call.1} parent=1 // pred_region
      %s32 = ssub.s32 1024, 1024
      %33 = vsyncadd [#allocation3], %s32
      %s34 = sshll.u32 [#allocation2], 4
      %s35 = int_to_ptr.vmem [resolvable:$true] %s34
      %40 = dma.hbm_to_vmem [thread:$0]  %s3, 1024, %s35, [#allocation3], 512, 512, 32
    $region17: #{tpu_custom_call.1} parent=1 // pred_fallthru
      _
    // Predicated region
    $region18: #{tpu_custom_call.1} parent=1 // pred_check
      _
    $region19: #{tpu_custom_call.1} parent=1 // pred_check_branch
      %42 = sbr.rel (0) target = $region21
    $region20: #{tpu_custom_call.1} parent=1 // pred_region
      _
    $region21: #{tpu_custom_call.1} parent=1 // pred_fallthru
      _
    // Predicated region
    $region22: #{tpu_custom_call.1} parent=1 // pred_check
      _
    $region23: #{tpu_custom_call.1} parent=1 // pred_check_branch
      %44 = sbr.rel (0) target = $region25
    $region24: #{tpu_custom_call.1} parent=1 // pred_region
      _
    $region25: #{tpu_custom_call.1} parent=1 // pred_fallthru
      _
    // Predicated region
    $region26: #{tpu_custom_call.1} parent=1 // pred_check
      _
    $region27: #{tpu_custom_call.1} parent=1 // pred_check_branch
      %46 = sbr.rel (0) target = $region29
    $region28: #{tpu_custom_call.1} parent=1 // pred_region
      _
    $region29: #{tpu_custom_call.1} parent=1 // pred_fallthru
      _
    // Predicated region
    $region30: #{tpu_custom_call.1} parent=1 // pred_check
      _
    $region31: #{tpu_custom_call.1} parent=1 // pred_check_branch
      %48 = sbr.rel (0) target = $region33
    $region32: #{tpu_custom_call.1} parent=1 // pred_region
      %s50 = ssub.s32 2048, 2048
      %51 = vsyncadd [#allocation6], %s50
      %s52 = sshll.u32 [#allocation5], 4
      %s53 = int_to_ptr.vmem [resolvable:$true] %s52
      %58 = dma.hbm_to_vmem [thread:$0]  %s7, 2048, %s53, [#allocation6], 128, 128, 8
    $region33: #{tpu_custom_call.1} parent=1 // pred_fallthru
      _
    // Predicated region
    $region34: #{tpu_custom_call.1} parent=1 // pred_check
      _
    $region35: #{tpu_custom_call.1} parent=1 // pred_check_branch
      %60 = sbr.rel (0) target = $region37
    $region36: #{tpu_custom_call.1} parent=1 // pred_region
      %s62 = ssub.s32 4096, 4096
      %63 = vsyncadd [#allocation6], %s62
      %s64 = sshll.u32 [#allocation7], 4
      %s65 = int_to_ptr.vmem [resolvable:$true] %s64
      %70 = dma.hbm_to_vmem [thread:$0]  %s8, 4096, %s65, [#allocation6], 256, 256, 16
    $region37: #{tpu_custom_call.1} parent=1 // pred_fallthru
      _
    // Predicated region
    $region38: #{tpu_custom_call.1} parent=1 // pred_check
      _
    $region39: #{tpu_custom_call.1} parent=1 // pred_check_branch
      %72 = sbr.rel (0) target = $region41
    $region40: #{tpu_custom_call.1} parent=1 // pred_region
      %s74 = ssub.s32 4096, 4096
      %75 = vsyncadd [#allocation9], %s74
      %s76 = sshll.u32 [#allocation8], 4
      %s77 = int_to_ptr.vmem [resolvable:$true] %s76
      %82 = dma.hbm_to_vmem [thread:$0]  %s9, 4096, %s77, [#allocation9], 64, 64, 4
    $region41: #{tpu_custom_call.1} parent=1 // pred_fallthru
      _
    // Predicated region
    $region42: #{tpu_custom_call.1} parent=1 // pred_check
      _
    $region43: #{tpu_custom_call.1} parent=1 // pred_check_branch
      %84 = sbr.rel (0) target = $region45
    $region44: #{tpu_custom_call.1} parent=1 // pred_region
      _
    $region45: #{tpu_custom_call.1} parent=1 // pred_fallthru
      _
    // Predicated region
    $region46: #{tpu_custom_call.1} parent=1 // pred_check
      _
    $region47: #{tpu_custom_call.1} parent=1 // pred_check_branch
      %86 = sbr.rel (0) target = $region49
    $region48: #{tpu_custom_call.1} parent=1 // pred_region
      %s88 = ssub.s32 2048, 2048
      %89 = vsyncadd [#allocation9], %s88
      %s90 = sshll.u32 [#allocation10], 4
      %s91 = int_to_ptr.vmem [resolvable:$true] %s90
      %96 = dma.hbm_to_vmem [thread:$0]  %s11, 2048, %s91, [#allocation9], 64, 64, 4
    $region49: #{tpu_custom_call.1} parent=1 // pred_fallthru
      _
    // Predicated region
    $region50: #{tpu_custom_call.1} parent=1 // pred_check
      _
    $region51: #{tpu_custom_call.1} parent=1 // pred_check_branch
      %98 = sbr.rel (0) target = $region53
    $region52: #{tpu_custom_call.1} parent=1 // pred_region
      _
    $region53: #{tpu_custom_call.1} parent=1 // pred_fallthru
      _
    // Predicated region
    $region54: #{tpu_custom_call.1} parent=1 // pred_check
      _
    $region55: #{tpu_custom_call.1} parent=1 // pred_check_branch
      %100 = sbr.rel (0) target = $region57
    $region56: #{tpu_custom_call.1} parent=1 // pred_region
      _
    $region57: #{tpu_custom_call.1} parent=1 // pred_fallthru
      _
    // Predicated region
    $region58: #{tpu_custom_call.1} parent=1 // pred_check
      _
    $region59: #{tpu_custom_call.1} parent=1 // pred_check_branch
      %102 = sbr.rel (0) target = $region61
    $region60: #{tpu_custom_call.1} parent=1 // pred_region
      %103 = dma.done [#allocation3], 1024
    $region61: #{tpu_custom_call.1} parent=1 // pred_fallthru
      _
    // Predicated region
    $region62: #{tpu_custom_call.1} parent=1 // pred_check
      _
    $region63: #{tpu_custom_call.1} parent=1 // pred_check_branch
      %105 = sbr.rel (0) target = $region65
    $region64: #{tpu_custom_call.1} parent=1 // pred_region
      %106 = dma.done [#allocation6], 2048
    $region65: #{tpu_custom_call.1} parent=1 // pred_fallthru
      _
    // Predicated region
    $region66: #{tpu_custom_call.1} parent=1 // pred_check
      _
    $region67: #{tpu_custom_call.1} parent=1 // pred_check_branch
      %108 = sbr.rel (0) target = $region69
    $region68: #{tpu_custom_call.1} parent=1 // pred_region
      %109 = dma.done [#allocation6], 4096
    $region69: #{tpu_custom_call.1} parent=1 // pred_fallthru
      _
    // Predicated region
    $region70: #{tpu_custom_call.1} parent=1 // pred_check
      _
    $region71: #{tpu_custom_call.1} parent=1 // pred_check_branch
      %111 = sbr.rel (0) target = $region73
    $region72: #{tpu_custom_call.1} parent=1 // pred_region
      %112 = dma.done [#allocation9], 4096
    $region73: #{tpu_custom_call.1} parent=1 // pred_fallthru
      _
    // Predicated region
    $region74: #{tpu_custom_call.1} parent=1 // pred_check
      _
    $region75: #{tpu_custom_call.1} parent=1 // pred_check_branch
      %114 = sbr.rel (0) target = $region77
    $region76: #{tpu_custom_call.1} parent=1 // pred_region
      %115 = dma.done [#allocation9], 2048
    $region77: #{tpu_custom_call.1} parent=1 // pred_fallthru
      _
    %v117 = vld [vmem:[#allocation5] sm:$0xff]
    %v118 = vld [vmem:[#allocation5 + $0x8] sm:$0xff]
    %v119 = vld [vmem:[#allocation5 + $0x10] sm:$0xff]
    %v120 = vld [vmem:[#allocation5 + $0x18] sm:$0xff]
    %v121 = vld [vmem:[#allocation5 + $0x20] sm:$0xff]
    %v122 = vld [vmem:[#allocation5 + $0x28] sm:$0xff]
    %v123 = vld [vmem:[#allocation5 + $0x30] sm:$0xff]
    %v124 = vld [vmem:[#allocation5 + $0x38] sm:$0xff]
    %v125 = vld [vmem:[#allocation5 + $0x40] sm:$0xff]
    %v126 = vld [vmem:[#allocation5 + $0x48] sm:$0xff]
    %v127 = vld [vmem:[#allocation5 + $0x50] sm:$0xff]
    %v128 = vld [vmem:[#allocation5 + $0x58] sm:$0xff]
    %v129 = vld [vmem:[#allocation5 + $0x60] sm:$0xff]
    %v130 = vld [vmem:[#allocation5 + $0x68] sm:$0xff]
    %v131 = vld [vmem:[#allocation5 + $0x70] sm:$0xff]
    %v132 = vld [vmem:[#allocation5 + $0x78] sm:$0xff]
    %v133 = vld [vmem:[%s0] sm:$0xf]
    %v134 = vld [vmem:[%s4] sm:$0xf]
    %v135 = vld [vmem:[%s4 + $0x4] sm:$0xf]
    %v136 = vpack.c.bf16 %v133, %v133
    %v137 = vld [vmem:[#allocation2] ss:$0 sm:$0xff]
    %v140 = vunpack.c.l.b16 %v134
    %v141 = vunpack.c.l.b16 %v135
    %v142 = vpack.c.b16 %v141, %v140
    %vm144 = vcmask 130048
    %v146 = vsel %vm144, %v136, 0
    %148 = vmatprep.subr.bf16.mxu0 0
    %149 = vmatpush1.bf16.msra.mxu0 %v142
    %150 = vmatprep.subr.bf16.mxu0 0
    %151 = vmatpush1.bf16.msra.mxu0 0
    %152 = vmatprep.subr.bf16.mxu0 0
    %153 = vmatpush1.bf16.msra.mxu0 0
    %154 = vmatprep.subr.bf16.mxu0 0
    %155 = vmatpush1.bf16.msra.mxu0 0
    %156 = vmatprep.subr.bf16.mxu0 0
    %157 = vmatpush1.bf16.msra.mxu0 0
    %158 = vmatprep.subr.bf16.mxu0 0
    %159 = vmatpush1.bf16.msra.mxu0 0
    %160 = vmatprep.subr.bf16.mxu0 0
    %161 = vmatpush1.bf16.msra.mxu0 0
    %162 = vmatprep.subr.bf16.mxu0 0
    %163 = vmatpush1.bf16.msra.mxu0 0
    %164 = vmatprep.subr.bf16.mxu0 0
    %165 = vmatpush1.bf16.msra.mxu0 0
    %166 = vmatprep.subr.bf16.mxu0 0
    %167 = vmatpush1.bf16.msra.mxu0 0
    %168 = vmatprep.subr.bf16.mxu0 0
    %169 = vmatpush1.bf16.msra.mxu0 0
    %170 = vmatprep.subr.bf16.mxu0 0
    %171 = vmatpush1.bf16.msra.mxu0 0
    %172 = vmatprep.subr.bf16.mxu0 0
    %173 = vmatpush1.bf16.msra.mxu0 0
    %174 = vmatprep.subr.bf16.mxu0 0
    %175 = vmatpush1.bf16.msra.mxu0 0
    %176 = vmatprep.subr.bf16.mxu0 0
    %177 = vmatpush1.bf16.msra.mxu0 0
    %178 = vmatprep.subr.bf16.mxu0 0
    %179 = vmatpush1.bf16.msra.mxu0 0
    %180 = vmatprep.mubr.bf16.mxu0 0
    %181 = vmatmul.mubr.bf16.gmra.mrb[0].mxu0 %v146
    %v182 = vpop.f32.mrb[0].mxu0
    %v183 = vadd.f32 %v137, %v182
    %v184 = vpop.f32.mrb[0].mxu0
    %v185 = vpop.f32.mrb[0].mxu0
    %v186 = vpop.f32.mrb[0].mxu0
    %187 = vdwg.mxu0
    %v188 = vmax.f32 %v183, 0.0
    %v189 = vld [vmem:[%s5] sm:$0xff]
    %v190 = vpack.c.bf16 %v188, %v188
    %s191 = scalar_lea.vmem [#allocation2], 1
    %v192 = vld [vmem:[%s191] ss:$8 sm:$0x3]
    %v194 = vlaneseq
    %v195 = vshrl.u32 %v194, 7
    %v196 = vsub.s32 0, %v195
    %v197 = vrot.slane %v192, %v196
    %v198 = vlaneseq
    %v199 = vshrl.u32 %v198, 7
    %v200 = vsub.s32 1, %v199
    %v201 = vrot.slane %v192, %v200
    %v205 = vunpack.c.l.b16 %v189
    %v206 = vunpack.c.h.b16 %v189
    %v207 = vpack.c.b16 %v205, %v205
    %v208 = vpack.c.b16 %v206, %v206
    %vm209 = vcmask 64512
    %v211 = vsel %vm209, %v190, 0
    %vm213 = vcmask 1043456
    %v215 = vsel %vm213, %v207, 0
    %v218 = vsel %vm213, %v208, 0
    %220 = vmatprep.subr.bf16.mxu0 %v218
    %221 = vmatpush1.bf16.msra.mxu0 %v215
    %222 = vmatprep.subr.bf16.mxu0 0
    %223 = vmatpush1.bf16.msra.mxu0 0
    %224 = vmatprep.subr.bf16.mxu0 0
    %225 = vmatpush1.bf16.msra.mxu0 0
    %226 = vmatprep.subr.bf16.mxu0 0
    %227 = vmatpush1.bf16.msra.mxu0 0
    %228 = vmatprep.subr.bf16.mxu0 0
    %229 = vmatpush1.bf16.msra.mxu0 0
    %230 = vmatprep.subr.bf16.mxu0 0
    %231 = vmatpush1.bf16.msra.mxu0 0
    %232 = vmatprep.subr.bf16.mxu0 0
    %233 = vmatpush1.bf16.msra.mxu0 0
    %234 = vmatprep.subr.bf16.mxu0 0
    %235 = vmatpush1.bf16.msra.mxu0 0
    %236 = vmatprep.subr.bf16.mxu0 0
    %237 = vmatpush1.bf16.msra.mxu0 0
    %238 = vmatprep.subr.bf16.mxu0 0
    %239 = vmatpush1.bf16.msra.mxu0 0
    %240 = vmatprep.subr.bf16.mxu0 0
    %241 = vmatpush1.bf16.msra.mxu0 0
    %242 = vmatprep.subr.bf16.mxu0 0
    %243 = vmatpush1.bf16.msra.mxu0 0
    %244 = vmatprep.subr.bf16.mxu0 0
    %245 = vmatpush1.bf16.msra.mxu0 0
    %246 = vmatprep.subr.bf16.mxu0 0
    %247 = vmatpush1.bf16.msra.mxu0 0
    %248 = vmatprep.subr.bf16.mxu0 0
    %249 = vmatpush1.bf16.msra.mxu0 0
    %250 = vmatprep.subr.bf16.mxu0 0
    %251 = vmatpush1.bf16.msra.mxu0 0
    %252 = vmatprep.mubr.bf16.mxu0 0
    %253 = vmatmul.mubr.bf16.gmra.mrb[0].mxu0 %v211
    %v254 = vpop.f32.mrb[0].mxu0
    %v255 = vadd.f32 %v197, %v254
    %v256 = vpop.f32.mrb[0].mxu0
    %v257 = vadd.f32 %v201, %v256
    %v258 = vpop.f32.mrb[0].mxu0
    %v259 = vpop.f32.mrb[0].mxu0
    %260 = vdwg.mxu0
    %v261 = vmax.f32 %v255, 0.0
    %v262 = vmax.f32 %v257, 0.0
    %v263 = vld [vmem:[%s6] sm:$0xf]
    %v264 = vld [vmem:[%s6 + $0x4] sm:$0xf]
    %v265 = vld [vmem:[%s6 + $0x8] sm:$0xf]
    %v266 = vld [vmem:[%s6 + $0xc] sm:$0xf]
    %v267 = vld [vmem:[%s6 + $0x10] sm:$0xf]
    %v268 = vld [vmem:[%s6 + $0x14] sm:$0xf]
    %v269 = vld [vmem:[%s6 + $0x18] sm:$0xf]
    %v270 = vld [vmem:[%s6 + $0x1c] sm:$0xf]
    %v271 = vld [vmem:[%s6 + $0x20] sm:$0xf]
    %v272 = vld [vmem:[%s6 + $0x24] sm:$0xf]
    %v273 = vld [vmem:[%s6 + $0x28] sm:$0xf]
    %v274 = vld [vmem:[%s6 + $0x2c] sm:$0xf]
    %v275 = vld [vmem:[%s6 + $0x30] sm:$0xf]
    %v276 = vld [vmem:[%s6 + $0x34] sm:$0xf]
    %v277 = vld [vmem:[%s6 + $0x38] sm:$0xf]
    %v278 = vld [vmem:[%s6 + $0x3c] sm:$0xf]
    %v279 = vld [vmem:[%s6 + $0x40] sm:$0xf]
    %v280 = vld [vmem:[%s6 + $0x44] sm:$0xf]
    %v281 = vld [vmem:[%s6 + $0x48] sm:$0xf]
    %v282 = vld [vmem:[%s6 + $0x4c] sm:$0xf]
    %v283 = vld [vmem:[%s6 + $0x50] sm:$0xf]
    %v284 = vld [vmem:[%s6 + $0x54] sm:$0xf]
    %v285 = vld [vmem:[%s6 + $0x58] sm:$0xf]
    %v286 = vld [vmem:[%s6 + $0x5c] sm:$0xf]
    %v287 = vld [vmem:[%s6 + $0x60] sm:$0xf]
    %v288 = vld [vmem:[%s6 + $0x64] sm:$0xf]
    %v289 = vld [vmem:[%s6 + $0x68] sm:$0xf]
    %v290 = vld [vmem:[%s6 + $0x6c] sm:$0xf]
    %v291 = vld [vmem:[%s6 + $0x70] sm:$0xf]
    %v292 = vld [vmem:[%s6 + $0x74] sm:$0xf]
    %v293 = vld [vmem:[%s6 + $0x78] sm:$0xf]
    %v294 = vld [vmem:[%s6 + $0x7c] sm:$0xf]
    %v295 = vpack.c.bf16 %v261, %v261
    %v296 = vpack.c.bf16 %v262, %v262
    %v297 = vld [vmem:[#allocation2 + $0x2] ss:$0 sm:$0xff]
    %v330 = vunpack.c.l.b16 %v263
    %v331 = vunpack.c.l.b16 %v264
    %v332 = vunpack.c.l.b16 %v265
    %v333 = vunpack.c.l.b16 %v266
    %v334 = vunpack.c.l.b16 %v267
    %v335 = vunpack.c.l.b16 %v268
    %v336 = vunpack.c.l.b16 %v269
    %v337 = vunpack.c.l.b16 %v270
    %v338 = vunpack.c.l.b16 %v271
    %v339 = vunpack.c.l.b16 %v272
    %v340 = vunpack.c.l.b16 %v273
    %v341 = vunpack.c.l.b16 %v274
    %v342 = vunpack.c.l.b16 %v275
    %v343 = vunpack.c.l.b16 %v276
    %v344 = vunpack.c.l.b16 %v277
    %v345 = vunpack.c.l.b16 %v278
    %v346 = vunpack.c.l.b16 %v279
    %v347 = vunpack.c.l.b16 %v280
    %v348 = vunpack.c.l.b16 %v281
    %v349 = vunpack.c.l.b16 %v282
    %v350 = vunpack.c.l.b16 %v283
    %v351 = vunpack.c.l.b16 %v284
    %v352 = vunpack.c.l.b16 %v285
    %v353 = vunpack.c.l.b16 %v286
    %v354 = vunpack.c.l.b16 %v287
    %v355 = vunpack.c.l.b16 %v288
    %v356 = vunpack.c.l.b16 %v289
    %v357 = vunpack.c.l.b16 %v290
    %v358 = vunpack.c.l.b16 %v291
    %v359 = vunpack.c.l.b16 %v292
    %v360 = vunpack.c.l.b16 %v293
    %v361 = vunpack.c.l.b16 %v294
    %v362 = vpack.c.b16 %v331, %v330
    %v363 = vpack.c.b16 %v333, %v332
    %v364 = vpack.c.b16 %v335, %v334
    %v365 = vpack.c.b16 %v337, %v336
    %v366 = vpack.c.b16 %v339, %v338
    %v367 = vpack.c.b16 %v341, %v340
    %v368 = vpack.c.b16 %v343, %v342
    %v369 = vpack.c.b16 %v345, %v344
    %v370 = vpack.c.b16 %v347, %v346
    %v371 = vpack.c.b16 %v349, %v348
    %v372 = vpack.c.b16 %v351, %v350
    %v373 = vpack.c.b16 %v353, %v352
    %v374 = vpack.c.b16 %v355, %v354
    %v375 = vpack.c.b16 %v357, %v356
    %v376 = vpack.c.b16 %v359, %v358
    %v377 = vpack.c.b16 %v361, %v360
    %394 = vmatprep.subr.bf16.mxu0 0
    %395 = vmatpush1.bf16.msra.mxu0 %v362
    %396 = vmatprep.subr.bf16.mxu0 0
    %397 = vmatpush1.bf16.msra.mxu0 %v363
    %398 = vmatprep.subr.bf16.mxu0 0
    %399 = vmatpush1.bf16.msra.mxu0 %v364
    %400 = vmatprep.subr.bf16.mxu0 0
    %401 = vmatpush1.bf16.msra.mxu0 %v365
    %402 = vmatprep.subr.bf16.mxu0 0
    %403 = vmatpush1.bf16.msra.mxu0 %v366
    %404 = vmatprep.subr.bf16.mxu0 0
    %405 = vmatpush1.bf16.msra.mxu0 %v367
    %406 = vmatprep.subr.bf16.mxu0 0
    %407 = vmatpush1.bf16.msra.mxu0 %v368
    %408 = vmatprep.subr.bf16.mxu0 0
    %409 = vmatpush1.bf16.msra.mxu0 %v369
    %410 = vmatprep.subr.bf16.mxu0 0
    %411 = vmatpush1.bf16.msra.mxu0 %v370
    %412 = vmatprep.subr.bf16.mxu0 0
    %413 = vmatpush1.bf16.msra.mxu0 %v371
    %414 = vmatprep.subr.bf16.mxu0 0
    %415 = vmatpush1.bf16.msra.mxu0 %v372
    %416 = vmatprep.subr.bf16.mxu0 0
    %417 = vmatpush1.bf16.msra.mxu0 %v373
    %418 = vmatprep.subr.bf16.mxu0 0
    %419 = vmatpush1.bf16.msra.mxu0 %v374
    %420 = vmatprep.subr.bf16.mxu0 0
    %421 = vmatpush1.bf16.msra.mxu0 %v375
    %422 = vmatprep.subr.bf16.mxu0 0
    %423 = vmatpush1.bf16.msra.mxu0 %v376
    %424 = vmatprep.subr.bf16.mxu0 0
    %425 = vmatpush1.bf16.msra.mxu0 %v377
    %426 = vmatprep.mubr.bf16.mxu0 %v296
    %427 = vmatmul.mubr.bf16.gmra.mrb[0].mxu0 %v295
    %v428 = vpop.f32.mrb[0].mxu0
    %v429 = vadd.f32 %v297, %v428
    %v430 = vpop.f32.mrb[0].mxu0
    %v431 = vpop.f32.mrb[0].mxu0
    %v432 = vpop.f32.mrb[0].mxu0
    %433 = vdwg.mxu0
    %v434 = vmax.f32 %v429, 0.0
    %v435 = vld [vmem:[#allocation2 + $0x3] ss:$0 sm:$0xff]
    %v436 = vadd.f32 %v434, %v435
    %v437 = vsel %vm213, %v436, 0.0
    %v438 = vrot.slane %v437, 4
    %v439 = vadd.f32 %v437, %v438
    %v440 = vrot.slane %v439, 2
    %v441 = vadd.f32 %v439, %v440
    %v442 = vrot.slane %v441, 1
    %v443 = vadd.f32 %v441, %v442
    %v444 = vrcp.pop 4.0
    %v445 = vmul.f32 %v443, %v444
    %v446 = vmul.f32 %v436, %v436
    %v447 = vsel %vm213, %v446, 0.0
    %v448 = vrot.slane %v447, 4
    %v449 = vadd.f32 %v447, %v448
    %v450 = vrot.slane %v449, 2
    %v451 = vadd.f32 %v449, %v450
    %v452 = vrot.slane %v451, 1
    %v453 = vadd.f32 %v451, %v452
    %v454 = vmul.f32 %v453, %v444
    %vm455 = vcmask 1040384
    %v456 = vsel %vm455, %v445, %v454
    %457 = vmatprep.subr.mxu0 0.0
    %458 = vmatpush1.msra.mxu0 %v117
    %459 = vmatprep.subr.mxu0 0.0
    %460 = vmatpush1.msra.mxu0 %v118
    %461 = vmatprep.subr.mxu0 0.0
    %462 = vmatpush1.msra.mxu0 %v119
    %463 = vmatprep.subr.mxu0 0.0
    %464 = vmatpush1.msra.mxu0 %v120
    %465 = vmatprep.subr.mxu0 0.0
    %466 = vmatpush1.msra.mxu0 %v121
    %467 = vmatprep.subr.mxu0 0.0
    %468 = vmatpush1.msra.mxu0 %v122
    %469 = vmatprep.subr.mxu0 0.0
    %470 = vmatpush1.msra.mxu0 %v123
    %471 = vmatprep.subr.mxu0 0.0
    %472 = vmatpush1.msra.mxu0 %v124
    %473 = vmatprep.subr.mxu0 0.0
    %474 = vmatpush1.msra.mxu0 %v125
    %475 = vmatprep.subr.mxu0 0.0
    %476 = vmatpush1.msra.mxu0 %v126
    %477 = vmatprep.subr.mxu0 0.0
    %478 = vmatpush1.msra.mxu0 %v127
    %479 = vmatprep.subr.mxu0 0.0
    %480 = vmatpush1.msra.mxu0 %v128
    %481 = vmatprep.subr.mxu0 0.0
    %482 = vmatpush1.msra.mxu0 %v129
    %483 = vmatprep.subr.mxu0 0.0
    %484 = vmatpush1.msra.mxu0 %v130
    %485 = vmatprep.subr.mxu0 0.0
    %486 = vmatpush1.msra.mxu0 %v131
    %487 = vmatprep.subr.mxu0 0.0
    %488 = vmatpush1.msra.mxu0 %v132
    %489 = vmatprep.subr.mxu0 0.0
    %490 = vmatpush1.msra.mxu0 0.0
    %491 = vmatprep.subr.mxu0 0.0
    %492 = vmatpush1.msra.mxu0 0.0
    %493 = vmatprep.subr.mxu0 0.0
    %494 = vmatpush1.msra.mxu0 0.0
    %495 = vmatprep.subr.mxu0 0.0
    %496 = vmatpush1.msra.mxu0 0.0
    %497 = vmatprep.subr.mxu0 0.0
    %498 = vmatpush1.msra.mxu0 0.0
    %499 = vmatprep.subr.mxu0 0.0
    %500 = vmatpush1.msra.mxu0 0.0
    %501 = vmatprep.subr.mxu0 0.0
    %502 = vmatpush1.msra.mxu0 0.0
    %503 = vmatprep.subr.mxu0 0.0
    %504 = vmatpush1.msra.mxu0 0.0
    %505 = vmatprep.subr.mxu0 0.0
    %506 = vmatpush1.msra.mxu0 0.0
    %507 = vmatprep.subr.mxu0 0.0
    %508 = vmatpush1.msra.mxu0 0.0
    %509 = vmatprep.subr.mxu0 0.0
    %510 = vmatpush1.msra.mxu0 0.0
    %511 = vmatprep.subr.mxu0 0.0
    %512 = vmatpush1.msra.mxu0 0.0
    %513 = vmatprep.subr.mxu0 0.0
    %514 = vmatpush1.msra.mxu0 0.0
    %515 = vmatprep.subr.mxu0 0.0
    %516 = vmatpush1.msra.mxu0 0.0
    %517 = vmatprep.subr.mxu0 0.0
    %518 = vmatpush1.msra.mxu0 0.0
    %519 = vmatprep.subr.mxu0 0.0
    %520 = vmatpush1.msra.mxu0 0.0
    %521 = vmatprep.mubr.f32.mxu0 0.0
    %522 = vmatmul.mubr.f32.gmra.mrb[0].mxu0 %v456
    %v523 = vpop.f32.mrb[0].mxu0
    %v524 = vadd.f32 0.0, %v523
    %v525 = vpop.f32.mrb[0].mxu0
    %526 = vdwg.mxu0
    %v527 = vmul.f32 %v524, %v524
    %v529 = vrot.slane %v527, 7
    %v531 = vsub.f32 %v524, %v529
    %v532 = vmax.f32 %v531, 0.0
    %v533 = vlaneseq
    %v534 = vshrl.u32 %v533, 7
    %v535 = vsub.s32 0, %v534
    %v536 = vrot.slane %v524, %v535
    %v537 = vsub.f32 %v436, %v536
    %v538 = vadd.f32 %v532, 1e-05
    %v539 = vrsqrt.pop %v538
    %v540 = vlaneseq
    %v541 = vshrl.u32 %v540, 7
    %v542 = vsub.s32 1, %v541
    %v543 = vrot.slane %v539, %v542
    %v544 = vmul.f32 %v537, %v543
    %v545 = vld [vmem:[#allocation2 + $0x4] ss:$0 sm:$0xff]
    %v546 = vmul.f32 %v544, %v545
    %v547 = vld [vmem:[#allocation2 + $0x5] ss:$0 sm:$0xff]
    %v548 = vadd.f32 %v546, %v547
    %v549 = vld [vmem:[#allocation7] sm:$0xff]
    %v550 = vld [vmem:[#allocation7 + $0x8] sm:$0xff]
    %v551 = vld [vmem:[#allocation7 + $0x10] sm:$0xff]
    %v552 = vld [vmem:[#allocation7 + $0x18] sm:$0xff]
    %v553 = vld [vmem:[#allocation7 + $0x20] sm:$0xff]
    %v554 = vld [vmem:[#allocation7 + $0x28] sm:$0xff]
    %v555 = vld [vmem:[#allocation7 + $0x30] sm:$0xff]
    %v556 = vld [vmem:[#allocation7 + $0x38] sm:$0xff]
    %v557 = vld [vmem:[#allocation7 + $0x40] sm:$0xff]
    %v558 = vld [vmem:[#allocation7 + $0x48] sm:$0xff]
    %v559 = vld [vmem:[#allocation7 + $0x50] sm:$0xff]
    %v560 = vld [vmem:[#allocation7 + $0x58] sm:$0xff]
    %v561 = vld [vmem:[#allocation7 + $0x60] sm:$0xff]
    %v562 = vld [vmem:[#allocation7 + $0x68] sm:$0xff]
    %v563 = vld [vmem:[#allocation7 + $0x70] sm:$0xff]
    %v564 = vld [vmem:[#allocation7 + $0x78] sm:$0xff]
    %v565 = vld [vmem:[#allocation7 + $0x80] sm:$0xff]
    %v566 = vld [vmem:[#allocation7 + $0x88] sm:$0xff]
    %v567 = vld [vmem:[#allocation7 + $0x90] sm:$0xff]
    %v568 = vld [vmem:[#allocation7 + $0x98] sm:$0xff]
    %v569 = vld [vmem:[#allocation7 + $0xa0] sm:$0xff]
    %v570 = vld [vmem:[#allocation7 + $0xa8] sm:$0xff]
    %v571 = vld [vmem:[#allocation7 + $0xb0] sm:$0xff]
    %v572 = vld [vmem:[#allocation7 + $0xb8] sm:$0xff]
    %v573 = vld [vmem:[#allocation7 + $0xc0] sm:$0xff]
    %v574 = vld [vmem:[#allocation7 + $0xc8] sm:$0xff]
    %v575 = vld [vmem:[#allocation7 + $0xd0] sm:$0xff]
    %v576 = vld [vmem:[#allocation7 + $0xd8] sm:$0xff]
    %v577 = vld [vmem:[#allocation7 + $0xe0] sm:$0xff]
    %v578 = vld [vmem:[#allocation7 + $0xe8] sm:$0xff]
    %v579 = vld [vmem:[#allocation7 + $0xf0] sm:$0xff]
    %v580 = vld [vmem:[#allocation7 + $0xf8] sm:$0xff]
    %v581 = vpack.c.bf16 %v548, %v548
    %s582 = scalar_lea.vmem [#allocation2], 34
    %v583 = vld [vmem:[%s582] ss:$8 sm:$0xf]
    %v585 = vlaneseq
    %v586 = vshrl.u32 %v585, 7
    %v587 = vsub.s32 0, %v586
    %v588 = vrot.slane %v583, %v587
    %v589 = vlaneseq
    %v590 = vshrl.u32 %v589, 7
    %v591 = vsub.s32 1, %v590
    %v592 = vrot.slane %v583, %v591
    %v593 = vlaneseq
    %v594 = vshrl.u32 %v593, 7
    %v595 = vsub.s32 2, %v594
    %v596 = vrot.slane %v583, %v595
    %v597 = vlaneseq
    %v598 = vshrl.u32 %v597, 7
    %v599 = vsub.s32 3, %v598
    %v600 = vrot.slane %v583, %v599
    %v637 = vunpack.c.l.b16 %v549
    %v638 = vunpack.c.h.b16 %v549
    %v639 = vunpack.c.l.b16 %v550
    %v640 = vunpack.c.h.b16 %v550
    %v641 = vunpack.c.l.b16 %v551
    %v642 = vunpack.c.h.b16 %v551
    %v643 = vunpack.c.l.b16 %v552
    %v644 = vunpack.c.h.b16 %v552
    %v645 = vunpack.c.l.b16 %v553
    %v646 = vunpack.c.h.b16 %v553
    %v647 = vunpack.c.l.b16 %v554
    %v648 = vunpack.c.h.b16 %v554
    %v649 = vunpack.c.l.b16 %v555
    %v650 = vunpack.c.h.b16 %v555
    %v651 = vunpack.c.l.b16 %v556
    %v652 = vunpack.c.h.b16 %v556
    %v653 = vunpack.c.l.b16 %v557
    %v654 = vunpack.c.h.b16 %v557
    %v655 = vunpack.c.l.b16 %v558
    %v656 = vunpack.c.h.b16 %v558
    %v657 = vunpack.c.l.b16 %v559
    %v658 = vunpack.c.h.b16 %v559
    %v659 = vunpack.c.l.b16 %v560
    %v660 = vunpack.c.h.b16 %v560
    %v661 = vunpack.c.l.b16 %v561
    %v662 = vunpack.c.h.b16 %v561
    %v663 = vunpack.c.l.b16 %v562
    %v664 = vunpack.c.h.b16 %v562
    %v665 = vunpack.c.l.b16 %v563
    %v666 = vunpack.c.h.b16 %v563
    %v667 = vunpack.c.l.b16 %v564
    %v668 = vunpack.c.h.b16 %v564
    %v669 = vunpack.c.l.b16 %v565
    %v670 = vunpack.c.h.b16 %v565
    %v671 = vunpack.c.l.b16 %v566
    %v672 = vunpack.c.h.b16 %v566
    %v673 = vunpack.c.l.b16 %v567
    %v674 = vunpack.c.h.b16 %v567
    %v675 = vunpack.c.l.b16 %v568
    %v676 = vunpack.c.h.b16 %v568
    %v677 = vunpack.c.l.b16 %v569
    %v678 = vunpack.c.h.b16 %v569
    %v679 = vunpack.c.l.b16 %v570
    %v680 = vunpack.c.h.b16 %v570
    %v681 = vunpack.c.l.b16 %v571
    %v682 = vunpack.c.h.b16 %v571
    %v683 = vunpack.c.l.b16 %v572
    %v684 = vunpack.c.h.b16 %v572
    %v685 = vunpack.c.l.b16 %v573
    %v686 = vunpack.c.h.b16 %v573
    %v687 = vunpack.c.l.b16 %v574
    %v688 = vunpack.c.h.b16 %v574
    %v689 = vunpack.c.l.b16 %v575
    %v690 = vunpack.c.h.b16 %v575
    %v691 = vunpack.c.l.b16 %v576
    %v692 = vunpack.c.h.b16 %v576
    %v693 = vunpack.c.l.b16 %v577
    %v694 = vunpack.c.h.b16 %v577
    %v695 = vunpack.c.l.b16 %v578
    %v696 = vunpack.c.h.b16 %v578
    %v697 = vunpack.c.l.b16 %v579
    %v698 = vunpack.c.h.b16 %v579
    %v699 = vunpack.c.l.b16 %v580
    %v700 = vunpack.c.h.b16 %v580
    %v701 = vpack.c.b16 %v641, %v637
    %v702 = vpack.c.b16 %v642, %v638
    %v703 = vpack.c.b16 %v643, %v639
    %v704 = vpack.c.b16 %v644, %v640
    %v705 = vpack.c.b16 %v649, %v645
    %v706 = vpack.c.b16 %v650, %v646
    %v707 = vpack.c.b16 %v651, %v647
    %v708 = vpack.c.b16 %v652, %v648
    %v709 = vpack.c.b16 %v657, %v653
    %v710 = vpack.c.b16 %v658, %v654
    %v711 = vpack.c.b16 %v659, %v655
    %v712 = vpack.c.b16 %v660, %v656
    %v713 = vpack.c.b16 %v665, %v661
    %v714 = vpack.c.b16 %v666, %v662
    %v715 = vpack.c.b16 %v667, %v663
    %v716 = vpack.c.b16 %v668, %v664
    %v717 = vpack.c.b16 %v673, %v669
    %v718 = vpack.c.b16 %v674, %v670
    %v719 = vpack.c.b16 %v675, %v671
    %v720 = vpack.c.b16 %v676, %v672
    %v721 = vpack.c.b16 %v681, %v677
    %v722 = vpack.c.b16 %v682, %v678
    %v723 = vpack.c.b16 %v683, %v679
    %v724 = vpack.c.b16 %v684, %v680
    %v725 = vpack.c.b16 %v689, %v685
    %v726 = vpack.c.b16 %v690, %v686
    %v727 = vpack.c.b16 %v691, %v687
    %v728 = vpack.c.b16 %v692, %v688
    %v729 = vpack.c.b16 %v697, %v693
    %v730 = vpack.c.b16 %v698, %v694
    %v731 = vpack.c.b16 %v699, %v695
    %v732 = vpack.c.b16 %v700, %v696
    %765 = vmatprep.subr.bf16.mxu0 %v702
    %766 = vmatpush1.bf16.msra.mxu0 %v701
    %767 = vmatprep.subr.bf16.mxu0 %v706
    %768 = vmatpush1.bf16.msra.mxu0 %v705
    %769 = vmatprep.subr.bf16.mxu0 %v710
    %770 = vmatpush1.bf16.msra.mxu0 %v709
    %771 = vmatprep.subr.bf16.mxu0 %v714
    %772 = vmatpush1.bf16.msra.mxu0 %v713
    %773 = vmatprep.subr.bf16.mxu0 %v718
    %774 = vmatpush1.bf16.msra.mxu0 %v717
    %775 = vmatprep.subr.bf16.mxu0 %v722
    %776 = vmatpush1.bf16.msra.mxu0 %v721
    %777 = vmatprep.subr.bf16.mxu0 %v726
    %778 = vmatpush1.bf16.msra.mxu0 %v725
    %779 = vmatprep.subr.bf16.mxu0 %v730
    %780 = vmatpush1.bf16.msra.mxu0 %v729
    %781 = vmatprep.subr.bf16.mxu0 0
    %782 = vmatpush1.bf16.msra.mxu0 0
    %783 = vmatprep.subr.bf16.mxu0 0
    %784 = vmatpush1.bf16.msra.mxu0 0
    %785 = vmatprep.subr.bf16.mxu0 0
    %786 = vmatpush1.bf16.msra.mxu0 0
    %787 = vmatprep.subr.bf16.mxu0 0
    %788 = vmatpush1.bf16.msra.mxu0 0
    %789 = vmatprep.subr.bf16.mxu0 0
    %790 = vmatpush1.bf16.msra.mxu0 0
    %791 = vmatprep.subr.bf16.mxu0 0
    %792 = vmatpush1.bf16.msra.mxu0 0
    %793 = vmatprep.subr.bf16.mxu0 0
    %794 = vmatpush1.bf16.msra.mxu0 0
    %795 = vmatprep.subr.bf16.mxu0 0
    %796 = vmatpush1.bf16.msra.mxu0 0
    %797 = vmatprep.mubr.bf16.mxu0 0
    %798 = vmatmul.mubr.bf16.gmra.mrb[0].mxu0 %v581
    %v799 = vpop.f32.mrb[0].mxu0
    %v800 = vadd.f32 %v588, %v799
    %v801 = vpop.f32.mrb[0].mxu0
    %v802 = vadd.f32 %v592, %v801
    %v803 = vpop.f32.mrb[0].mxu0
    %v804 = vpop.f32.mrb[0].mxu0
    %805 = vdwg.mxu0
    %806 = vmatprep.subr.bf16.mxu0 %v704
    %807 = vmatpush1.bf16.msra.mxu0 %v703
    %808 = vmatprep.subr.bf16.mxu0 %v708
    %809 = vmatpush1.bf16.msra.mxu0 %v707
    %810 = vmatprep.subr.bf16.mxu0 %v712
    %811 = vmatpush1.bf16.msra.mxu0 %v711
    %812 = vmatprep.subr.bf16.mxu0 %v716
    %813 = vmatpush1.bf16.msra.mxu0 %v715
    %814 = vmatprep.subr.bf16.mxu0 %v720
    %815 = vmatpush1.bf16.msra.mxu0 %v719
    %816 = vmatprep.subr.bf16.mxu0 %v724
    %817 = vmatpush1.bf16.msra.mxu0 %v723
    %818 = vmatprep.subr.bf16.mxu0 %v728
    %819 = vmatpush1.bf16.msra.mxu0 %v727
    %820 = vmatprep.subr.bf16.mxu0 %v732
    %821 = vmatpush1.bf16.msra.mxu0 %v731
    %822 = vmatprep.subr.bf16.mxu0 0
    %823 = vmatpush1.bf16.msra.mxu0 0
    %824 = vmatprep.subr.bf16.mxu0 0
    %825 = vmatpush1.bf16.msra.mxu0 0
    %826 = vmatprep.subr.bf16.mxu0 0
    %827 = vmatpush1.bf16.msra.mxu0 0
    %828 = vmatprep.subr.bf16.mxu0 0
    %829 = vmatpush1.bf16.msra.mxu0 0
    %830 = vmatprep.subr.bf16.mxu0 0
    %831 = vmatpush1.bf16.msra.mxu0 0
    %832 = vmatprep.subr.bf16.mxu0 0
    %833 = vmatpush1.bf16.msra.mxu0 0
    %834 = vmatprep.subr.bf16.mxu0 0
    %835 = vmatpush1.bf16.msra.mxu0 0
    %836 = vmatprep.subr.bf16.mxu0 0
    %837 = vmatpush1.bf16.msra.mxu0 0
    %838 = vmatprep.mubr.bf16.mxu0 0
    %839 = vmatmul.mubr.bf16.gmra.mrb[0].mxu0 %v581
    %v840 = vpop.f32.mrb[0].mxu0
    %v841 = vadd.f32 %v596, %v840
    %v842 = vpop.f32.mrb[0].mxu0
    %v843 = vadd.f32 %v600, %v842
    %v844 = vpop.f32.mrb[0].mxu0
    %v845 = vpop.f32.mrb[0].mxu0
    %846 = vdwg.mxu0
    %v847 = vmax.f32 %v800, 0.0
    %v848 = vmax.f32 %v802, 0.0
    %v849 = vmax.f32 %v841, 0.0
    %v850 = vmax.f32 %v843, 0.0
    %v851 = vld [vmem:[#allocation8] sm:$0xf]
    %v852 = vld [vmem:[#allocation8 + $0x4] sm:$0xf]
    %v853 = vld [vmem:[#allocation8 + $0x8] sm:$0xf]
    %v854 = vld [vmem:[#allocation8 + $0xc] sm:$0xf]
    %v855 = vld [vmem:[#allocation8 + $0x10] sm:$0xf]
    %v856 = vld [vmem:[#allocation8 + $0x14] sm:$0xf]
    %v857 = vld [vmem:[#allocation8 + $0x18] sm:$0xf]
    %v858 = vld [vmem:[#allocation8 + $0x1c] sm:$0xf]
    %v859 = vld [vmem:[#allocation8 + $0x20] sm:$0xf]
    %v860 = vld [vmem:[#allocation8 + $0x24] sm:$0xf]
    %v861 = vld [vmem:[#allocation8 + $0x28] sm:$0xf]
    %v862 = vld [vmem:[#allocation8 + $0x2c] sm:$0xf]
    %v863 = vld [vmem:[#allocation8 + $0x30] sm:$0xf]
    %v864 = vld [vmem:[#allocation8 + $0x34] sm:$0xf]
    %v865 = vld [vmem:[#allocation8 + $0x38] sm:$0xf]
    %v866 = vld [vmem:[#allocation8 + $0x3c] sm:$0xf]
    %v867 = vld [vmem:[#allocation8 + $0x40] sm:$0xf]
    %v868 = vld [vmem:[#allocation8 + $0x44] sm:$0xf]
    %v869 = vld [vmem:[#allocation8 + $0x48] sm:$0xf]
    %v870 = vld [vmem:[#allocation8 + $0x4c] sm:$0xf]
    %v871 = vld [vmem:[#allocation8 + $0x50] sm:$0xf]
    %v872 = vld [vmem:[#allocation8 + $0x54] sm:$0xf]
    %v873 = vld [vmem:[#allocation8 + $0x58] sm:$0xf]
    %v874 = vld [vmem:[#allocation8 + $0x5c] sm:$0xf]
    %v875 = vld [vmem:[#allocation8 + $0x60] sm:$0xf]
    %v876 = vld [vmem:[#allocation8 + $0x64] sm:$0xf]
    %v877 = vld [vmem:[#allocation8 + $0x68] sm:$0xf]
    %v878 = vld [vmem:[#allocation8 + $0x6c] sm:$0xf]
    %v879 = vld [vmem:[#allocation8 + $0x70] sm:$0xf]
    %v880 = vld [vmem:[#allocation8 + $0x74] sm:$0xf]
    %v881 = vld [vmem:[#allocation8 + $0x78] sm:$0xf]
    %v882 = vld [vmem:[#allocation8 + $0x7c] sm:$0xf]
    %v883 = vld [vmem:[#allocation8 + $0x80] sm:$0xf]
    %v884 = vld [vmem:[#allocation8 + $0x84] sm:$0xf]
    %v885 = vld [vmem:[#allocation8 + $0x88] sm:$0xf]
    %v886 = vld [vmem:[#allocation8 + $0x8c] sm:$0xf]
    %v887 = vld [vmem:[#allocation8 + $0x90] sm:$0xf]
    %v888 = vld [vmem:[#allocation8 + $0x94] sm:$0xf]
    %v889 = vld [vmem:[#allocation8 + $0x98] sm:$0xf]
    %v890 = vld [vmem:[#allocation8 + $0x9c] sm:$0xf]
    %v891 = vld [vmem:[#allocation8 + $0xa0] sm:$0xf]
    %v892 = vld [vmem:[#allocation8 + $0xa4] sm:$0xf]
    %v893 = vld [vmem:[#allocation8 + $0xa8] sm:$0xf]
    %v894 = vld [vmem:[#allocation8 + $0xac] sm:$0xf]
    %v895 = vld [vmem:[#allocation8 + $0xb0] sm:$0xf]
    %v896 = vld [vmem:[#allocation8 + $0xb4] sm:$0xf]
    %v897 = vld [vmem:[#allocation8 + $0xb8] sm:$0xf]
    %v898 = vld [vmem:[#allocation8 + $0xbc] sm:$0xf]
    %v899 = vld [vmem:[#allocation8 + $0xc0] sm:$0xf]
    %v900 = vld [vmem:[#allocation8 + $0xc4] sm:$0xf]
    %v901 = vld [vmem:[#allocation8 + $0xc8] sm:$0xf]
    %v902 = vld [vmem:[#allocation8 + $0xcc] sm:$0xf]
    %v903 = vld [vmem:[#allocation8 + $0xd0] sm:$0xf]
    %v904 = vld [vmem:[#allocation8 + $0xd4] sm:$0xf]
    %v905 = vld [vmem:[#allocation8 + $0xd8] sm:$0xf]
    %v906 = vld [vmem:[#allocation8 + $0xdc] sm:$0xf]
    %v907 = vld [vmem:[#allocation8 + $0xe0] sm:$0xf]
    %v908 = vld [vmem:[#allocation8 + $0xe4] sm:$0xf]
    %v909 = vld [vmem:[#allocation8 + $0xe8] sm:$0xf]
    %v910 = vld [vmem:[#allocation8 + $0xec] sm:$0xf]
    %v911 = vld [vmem:[#allocation8 + $0xf0] sm:$0xf]
    %v912 = vld [vmem:[#allocation8 + $0xf4] sm:$0xf]
    %v913 = vld [vmem:[#allocation8 + $0xf8] sm:$0xf]
    %v914 = vld [vmem:[#allocation8 + $0xfc] sm:$0xf]
    %v915 = vpack.c.bf16 %v847, %v847
    %v916 = vpack.c.bf16 %v848, %v848
    %v917 = vpack.c.bf16 %v849, %v849
    %v918 = vpack.c.bf16 %v850, %v850
    %v919 = vld [vmem:[#allocation2 + $0x23] ss:$0 sm:$0xff]
    %v984 = vunpack.c.l.b16 %v851
    %v985 = vunpack.c.l.b16 %v852
    %v986 = vunpack.c.l.b16 %v853
    %v987 = vunpack.c.l.b16 %v854
    %v988 = vunpack.c.l.b16 %v855
    %v989 = vunpack.c.l.b16 %v856
    %v990 = vunpack.c.l.b16 %v857
    %v991 = vunpack.c.l.b16 %v858
    %v992 = vunpack.c.l.b16 %v859
    %v993 = vunpack.c.l.b16 %v860
    %v994 = vunpack.c.l.b16 %v861
    %v995 = vunpack.c.l.b16 %v862
    %v996 = vunpack.c.l.b16 %v863
    %v997 = vunpack.c.l.b16 %v864
    %v998 = vunpack.c.l.b16 %v865
    %v999 = vunpack.c.l.b16 %v866
    %v1000 = vunpack.c.l.b16 %v867
    %v1001 = vunpack.c.l.b16 %v868
    %v1002 = vunpack.c.l.b16 %v869
    %v1003 = vunpack.c.l.b16 %v870
    %v1004 = vunpack.c.l.b16 %v871
    %v1005 = vunpack.c.l.b16 %v872
    %v1006 = vunpack.c.l.b16 %v873
    %v1007 = vunpack.c.l.b16 %v874
    %v1008 = vunpack.c.l.b16 %v875
    %v1009 = vunpack.c.l.b16 %v876
    %v1010 = vunpack.c.l.b16 %v877
    %v1011 = vunpack.c.l.b16 %v878
    %v1012 = vunpack.c.l.b16 %v879
    %v1013 = vunpack.c.l.b16 %v880
    %v1014 = vunpack.c.l.b16 %v881
    %v1015 = vunpack.c.l.b16 %v882
    %v1016 = vunpack.c.l.b16 %v883
    %v1017 = vunpack.c.l.b16 %v884
    %v1018 = vunpack.c.l.b16 %v885
    %v1019 = vunpack.c.l.b16 %v886
    %v1020 = vunpack.c.l.b16 %v887
    %v1021 = vunpack.c.l.b16 %v888
    %v1022 = vunpack.c.l.b16 %v889
    %v1023 = vunpack.c.l.b16 %v890
    %v1024 = vunpack.c.l.b16 %v891
    %v1025 = vunpack.c.l.b16 %v892
    %v1026 = vunpack.c.l.b16 %v893
    %v1027 = vunpack.c.l.b16 %v894
    %v1028 = vunpack.c.l.b16 %v895
    %v1029 = vunpack.c.l.b16 %v896
    %v1030 = vunpack.c.l.b16 %v897
    %v1031 = vunpack.c.l.b16 %v898
    %v1032 = vunpack.c.l.b16 %v899
    %v1033 = vunpack.c.l.b16 %v900
    %v1034 = vunpack.c.l.b16 %v901
    %v1035 = vunpack.c.l.b16 %v902
    %v1036 = vunpack.c.l.b16 %v903
    %v1037 = vunpack.c.l.b16 %v904
    %v1038 = vunpack.c.l.b16 %v905
    %v1039 = vunpack.c.l.b16 %v906
    %v1040 = vunpack.c.l.b16 %v907
    %v1041 = vunpack.c.l.b16 %v908
    %v1042 = vunpack.c.l.b16 %v909
    %v1043 = vunpack.c.l.b16 %v910
    %v1044 = vunpack.c.l.b16 %v911
    %v1045 = vunpack.c.l.b16 %v912
    %v1046 = vunpack.c.l.b16 %v913
    %v1047 = vunpack.c.l.b16 %v914
    %v1048 = vpack.c.b16 %v985, %v984
    %v1049 = vpack.c.b16 %v987, %v986
    %v1050 = vpack.c.b16 %v989, %v988
    %v1051 = vpack.c.b16 %v991, %v990
    %v1052 = vpack.c.b16 %v993, %v992
    %v1053 = vpack.c.b16 %v995, %v994
    %v1054 = vpack.c.b16 %v997, %v996
    %v1055 = vpack.c.b16 %v999, %v998
    %v1056 = vpack.c.b16 %v1001, %v1000
    %v1057 = vpack.c.b16 %v1003, %v1002
    %v1058 = vpack.c.b16 %v1005, %v1004
    %v1059 = vpack.c.b16 %v1007, %v1006
    %v1060 = vpack.c.b16 %v1009, %v1008
    %v1061 = vpack.c.b16 %v1011, %v1010
    %v1062 = vpack.c.b16 %v1013, %v1012
    %v1063 = vpack.c.b16 %v1015, %v1014
    %v1064 = vpack.c.b16 %v1017, %v1016
    %v1065 = vpack.c.b16 %v1019, %v1018
    %v1066 = vpack.c.b16 %v1021, %v1020
    %v1067 = vpack.c.b16 %v1023, %v1022
    %v1068 = vpack.c.b16 %v1025, %v1024
    %v1069 = vpack.c.b16 %v1027, %v1026
    %v1070 = vpack.c.b16 %v1029, %v1028
    %v1071 = vpack.c.b16 %v1031, %v1030
    %v1072 = vpack.c.b16 %v1033, %v1032
    %v1073 = vpack.c.b16 %v1035, %v1034
    %v1074 = vpack.c.b16 %v1037, %v1036
    %v1075 = vpack.c.b16 %v1039, %v1038
    %v1076 = vpack.c.b16 %v1041, %v1040
    %v1077 = vpack.c.b16 %v1043, %v1042
    %v1078 = vpack.c.b16 %v1045, %v1044
    %v1079 = vpack.c.b16 %v1047, %v1046
    %1112 = vmatprep.subr.bf16.mxu0 0
    %1113 = vmatpush1.bf16.msra.mxu0 %v1048
    %1114 = vmatprep.subr.bf16.mxu0 0
    %1115 = vmatpush1.bf16.msra.mxu0 %v1049
    %1116 = vmatprep.subr.bf16.mxu0 0
    %1117 = vmatpush1.bf16.msra.mxu0 %v1050
    %1118 = vmatprep.subr.bf16.mxu0 0
    %1119 = vmatpush1.bf16.msra.mxu0 %v1051
    %1120 = vmatprep.subr.bf16.mxu0 0
    %1121 = vmatpush1.bf16.msra.mxu0 %v1052
    %1122 = vmatprep.subr.bf16.mxu0 0
    %1123 = vmatpush1.bf16.msra.mxu0 %v1053
    %1124 = vmatprep.subr.bf16.mxu0 0
    %1125 = vmatpush1.bf16.msra.mxu0 %v1054
    %1126 = vmatprep.subr.bf16.mxu0 0
    %1127 = vmatpush1.bf16.msra.mxu0 %v1055
    %1128 = vmatprep.subr.bf16.mxu0 0
    %1129 = vmatpush1.bf16.msra.mxu0 %v1056
    %1130 = vmatprep.subr.bf16.mxu0 0
    %1131 = vmatpush1.bf16.msra.mxu0 %v1057
    %1132 = vmatprep.subr.bf16.mxu0 0
    %1133 = vmatpush1.bf16.msra.mxu0 %v1058
    %1134 = vmatprep.subr.bf16.mxu0 0
    %1135 = vmatpush1.bf16.msra.mxu0 %v1059
    %1136 = vmatprep.subr.bf16.mxu0 0
    %1137 = vmatpush1.bf16.msra.mxu0 %v1060
    %1138 = vmatprep.subr.bf16.mxu0 0
    %1139 = vmatpush1.bf16.msra.mxu0 %v1061
    %1140 = vmatprep.subr.bf16.mxu0 0
    %1141 = vmatpush1.bf16.msra.mxu0 %v1062
    %1142 = vmatprep.subr.bf16.mxu0 0
    %1143 = vmatpush1.bf16.msra.mxu0 %v1063
    %1144 = vmatprep.mubr.bf16.mxu0 %v916
    %1145 = vmatmul.mubr.bf16.gmra.mrb[0].mxu0 %v915
    %v1146 = vpop.f32.mrb[0].mxu0
    %v1147 = vadd.f32 %v919, %v1146
    %v1148 = vpop.f32.mrb[0].mxu0
    %v1149 = vpop.f32.mrb[0].mxu0
    %v1150 = vpop.f32.mrb[0].mxu0
    %1151 = vdwg.mxu0
    %1152 = vmatprep.subr.bf16.mxu0 0
    %1153 = vmatpush1.bf16.msra.mxu0 %v1064
    %1154 = vmatprep.subr.bf16.mxu0 0
    %1155 = vmatpush1.bf16.msra.mxu0 %v1065
    %1156 = vmatprep.subr.bf16.mxu0 0
    %1157 = vmatpush1.bf16.msra.mxu0 %v1066
    %1158 = vmatprep.subr.bf16.mxu0 0
    %1159 = vmatpush1.bf16.msra.mxu0 %v1067
    %1160 = vmatprep.subr.bf16.mxu0 0
    %1161 = vmatpush1.bf16.msra.mxu0 %v1068
    %1162 = vmatprep.subr.bf16.mxu0 0
    %1163 = vmatpush1.bf16.msra.mxu0 %v1069
    %1164 = vmatprep.subr.bf16.mxu0 0
    %1165 = vmatpush1.bf16.msra.mxu0 %v1070
    %1166 = vmatprep.subr.bf16.mxu0 0
    %1167 = vmatpush1.bf16.msra.mxu0 %v1071
    %1168 = vmatprep.subr.bf16.mxu0 0
    %1169 = vmatpush1.bf16.msra.mxu0 %v1072
    %1170 = vmatprep.subr.bf16.mxu0 0
    %1171 = vmatpush1.bf16.msra.mxu0 %v1073
    %1172 = vmatprep.subr.bf16.mxu0 0
    %1173 = vmatpush1.bf16.msra.mxu0 %v1074
    %1174 = vmatprep.subr.bf16.mxu0 0
    %1175 = vmatpush1.bf16.msra.mxu0 %v1075
    %1176 = vmatprep.subr.bf16.mxu0 0
    %1177 = vmatpush1.bf16.msra.mxu0 %v1076
    %1178 = vmatprep.subr.bf16.mxu0 0
    %1179 = vmatpush1.bf16.msra.mxu0 %v1077
    %1180 = vmatprep.subr.bf16.mxu0 0
    %1181 = vmatpush1.bf16.msra.mxu0 %v1078
    %1182 = vmatprep.subr.bf16.mxu0 0
    %1183 = vmatpush1.bf16.msra.mxu0 %v1079
    %1184 = vmatprep.mubr.bf16.mxu0 %v918
    %1185 = vmatmul.mubr.bf16.gmra.mrb[0].mxu0 %v917
    %v1186 = vpop.f32.mrb[0].mxu0
    %v1187 = vadd.f32 %v1147, %v1186
    %v1188 = vpop.f32.mrb[0].mxu0
    %v1189 = vpop.f32.mrb[0].mxu0
    %v1190 = vpop.f32.mrb[0].mxu0
    %1191 = vdwg.mxu0
    %1193 = vrot.lane.b32.xlu0 %v1187, 120
    %v1194 = vpop.permute.xlu0 %1193
    %1196 = vrot.lane.b32.xlu0 %v1187, 112
    %v1197 = vpop.permute.xlu0 %1196
    %1199 = vrot.lane.b32.xlu0 %v1187, 104
    %v1200 = vpop.permute.xlu0 %1199
    %1202 = vrot.lane.b32.xlu0 %v1187, 96
    %v1203 = vpop.permute.xlu0 %1202
    %1205 = vrot.lane.b32.xlu0 %v1187, 88
    %v1206 = vpop.permute.xlu0 %1205
    %1208 = vrot.lane.b32.xlu0 %v1187, 80
    %v1209 = vpop.permute.xlu0 %1208
    %1211 = vrot.lane.b32.xlu0 %v1187, 72
    %v1212 = vpop.permute.xlu0 %1211
    %1214 = vrot.lane.b32.xlu0 %v1187, 64
    %v1215 = vpop.permute.xlu0 %1214
    %1217 = vrot.lane.b32.xlu0 %v1187, 56
    %v1218 = vpop.permute.xlu0 %1217
    %1220 = vrot.lane.b32.xlu0 %v1187, 48
    %v1221 = vpop.permute.xlu0 %1220
    %1223 = vrot.lane.b32.xlu0 %v1187, 40
    %v1224 = vpop.permute.xlu0 %1223
    %1226 = vrot.lane.b32.xlu0 %v1187, 32
    %v1227 = vpop.permute.xlu0 %1226
    %1229 = vrot.lane.b32.xlu0 %v1187, 24
    %v1230 = vpop.permute.xlu0 %1229
    %1232 = vrot.lane.b32.xlu0 %v1187, 16
    %v1233 = vpop.permute.xlu0 %1232
    %1235 = vrot.lane.b32.xlu0 %v1187, 8
    %v1236 = vpop.permute.xlu0 %1235
    %v1238 = vcombine.low %v1187, %v1197
    %v1240 = vunpack.c.l.s4 1983009808
    %v1241 = vunpack.c.0.s8 %v1240
    %v1242 = vlaneseq
    %v1243 = vshrl.u32 %v1242, 7
    %v1244 = vsub.s32 %v1241, %v1243
    %v1245 = vrot.slane %v1238, %v1244
    %v1246 = vcombine.low %v1194, %v1200
    %v1248 = vunpack.c.l.s4 1983009808
    %v1249 = vunpack.c.0.s8 %v1248
    %v1250 = vlaneseq
    %v1251 = vshrl.u32 %v1250, 7
    %v1252 = vsub.s32 %v1249, %v1251
    %v1253 = vrot.slane %v1246, %v1252
    %v1254 = vcombine.low %v1203, %v1209
    %v1256 = vunpack.c.l.s4 1983009808
    %v1257 = vunpack.c.0.s8 %v1256
    %v1258 = vlaneseq
    %v1259 = vshrl.u32 %v1258, 7
    %v1260 = vsub.s32 %v1257, %v1259
    %v1261 = vrot.slane %v1254, %v1260
    %v1262 = vcombine.low %v1206, %v1212
    %v1264 = vunpack.c.l.s4 1983009808
    %v1265 = vunpack.c.0.s8 %v1264
    %v1266 = vlaneseq
    %v1267 = vshrl.u32 %v1266, 7
    %v1268 = vsub.s32 %v1265, %v1267
    %v1269 = vrot.slane %v1262, %v1268
    %v1270 = vcombine.low %v1245, %v1253
    %v1271 = vcombine.high %v1245, %v1253
    %v1273 = vunpack.c.l.s4 1934713408
    %v1274 = vunpack.c.0.s8 %v1273
    %v1275 = vlaneseq
    %v1276 = vshrl.u32 %v1275, 7
    %v1277 = vsub.s32 %v1274, %v1276
    %v1278 = vrot.slane %v1270, %v1277
    %v1280 = vunpack.c.l.s4 1934713408
    %v1281 = vunpack.c.0.s8 %v1280
    %v1282 = vlaneseq
    %v1283 = vshrl.u32 %v1282, 7
    %v1284 = vsub.s32 %v1281, %v1283
    %v1285 = vrot.slane %v1271, %v1284
    %v1286 = vcombine.low %v1261, %v1269
    %v1287 = vcombine.high %v1261, %v1269
    %v1289 = vunpack.c.l.s4 1934713408
    %v1290 = vunpack.c.0.s8 %v1289
    %v1291 = vlaneseq
    %v1292 = vshrl.u32 %v1291, 7
    %v1293 = vsub.s32 %v1290, %v1292
    %v1294 = vrot.slane %v1286, %v1293
    %v1296 = vunpack.c.l.s4 1934713408
    %v1297 = vunpack.c.0.s8 %v1296
    %v1298 = vlaneseq
    %v1299 = vshrl.u32 %v1298, 7
    %v1300 = vsub.s32 %v1297, %v1299
    %v1301 = vrot.slane %v1287, %v1300
    %v1302 = vcombine.low %v1278, %v1294
    %v1303 = vcombine.high %v1278, %v1294
    %v1304 = vcombine.low %v1285, %v1301
    %v1305 = vcombine.high %v1285, %v1301
    %v1306 = vcombine.low %v1215, %v1221
    %v1308 = vunpack.c.l.s4 1983009808
    %v1309 = vunpack.c.0.s8 %v1308
    %v1310 = vlaneseq
    %v1311 = vshrl.u32 %v1310, 7
    %v1312 = vsub.s32 %v1309, %v1311
    %v1313 = vrot.slane %v1306, %v1312
    %v1314 = vcombine.low %v1218, %v1224
    %v1316 = vunpack.c.l.s4 1983009808
    %v1317 = vunpack.c.0.s8 %v1316
    %v1318 = vlaneseq
    %v1319 = vshrl.u32 %v1318, 7
    %v1320 = vsub.s32 %v1317, %v1319
    %v1321 = vrot.slane %v1314, %v1320
    %v1322 = vcombine.low %v1227, %v1233
    %v1324 = vunpack.c.l.s4 1983009808
    %v1325 = vunpack.c.0.s8 %v1324
    %v1326 = vlaneseq
    %v1327 = vshrl.u32 %v1326, 7
    %v1328 = vsub.s32 %v1325, %v1327
    %v1329 = vrot.slane %v1322, %v1328
    %v1330 = vcombine.low %v1230, %v1236
    %v1332 = vunpack.c.l.s4 1983009808
    %v1333 = vunpack.c.0.s8 %v1332
    %v1334 = vlaneseq
    %v1335 = vshrl.u32 %v1334, 7
    %v1336 = vsub.s32 %v1333, %v1335
    %v1337 = vrot.slane %v1330, %v1336
    %v1338 = vcombine.low %v1313, %v1321
    %v1339 = vcombine.high %v1313, %v1321
    %v1341 = vunpack.c.l.s4 1934713408
    %v1342 = vunpack.c.0.s8 %v1341
    %v1343 = vlaneseq
    %v1344 = vshrl.u32 %v1343, 7
    %v1345 = vsub.s32 %v1342, %v1344
    %v1346 = vrot.slane %v1338, %v1345
    %v1348 = vunpack.c.l.s4 1934713408
    %v1349 = vunpack.c.0.s8 %v1348
    %v1350 = vlaneseq
    %v1351 = vshrl.u32 %v1350, 7
    %v1352 = vsub.s32 %v1349, %v1351
    %v1353 = vrot.slane %v1339, %v1352
    %v1354 = vcombine.low %v1329, %v1337
    %v1355 = vcombine.high %v1329, %v1337
    %v1357 = vunpack.c.l.s4 1934713408
    %v1358 = vunpack.c.0.s8 %v1357
    %v1359 = vlaneseq
    %v1360 = vshrl.u32 %v1359, 7
    %v1361 = vsub.s32 %v1358, %v1360
    %v1362 = vrot.slane %v1354, %v1361
    %v1364 = vunpack.c.l.s4 1934713408
    %v1365 = vunpack.c.0.s8 %v1364
    %v1366 = vlaneseq
    %v1367 = vshrl.u32 %v1366, 7
    %v1368 = vsub.s32 %v1365, %v1367
    %v1369 = vrot.slane %v1355, %v1368
    %v1370 = vcombine.low %v1346, %v1362
    %v1371 = vcombine.high %v1346, %v1362
    %v1372 = vcombine.low %v1353, %v1369
    %v1373 = vcombine.high %v1353, %v1369
    %v1374 = vsel %vm209, %v1302, 0.0
    %v1375 = vrot.slane %v1374, 4
    %v1376 = vadd.f32 %v1374, %v1375
    %v1377 = vrot.slane %v1376, 2
    %v1378 = vadd.f32 %v1376, %v1377
    %v1379 = vrot.slane %v1378, 1
    %v1380 = vadd.f32 %v1378, %v1379
    %v1381 = vsel %vm209, %v1303, 0.0
    %v1382 = vrot.slane %v1381, 4
    %v1383 = vadd.f32 %v1381, %v1382
    %v1384 = vrot.slane %v1383, 2
    %v1385 = vadd.f32 %v1383, %v1384
    %v1386 = vrot.slane %v1385, 1
    %v1387 = vadd.f32 %v1385, %v1386
    %v1388 = vsel %vm209, %v1304, 0.0
    %v1389 = vrot.slane %v1388, 4
    %v1390 = vadd.f32 %v1388, %v1389
    %v1391 = vrot.slane %v1390, 2
    %v1392 = vadd.f32 %v1390, %v1391
    %v1393 = vrot.slane %v1392, 1
    %v1394 = vadd.f32 %v1392, %v1393
    %v1395 = vsel %vm209, %v1305, 0.0
    %v1396 = vrot.slane %v1395, 4
    %v1397 = vadd.f32 %v1395, %v1396
    %v1398 = vrot.slane %v1397, 2
    %v1399 = vadd.f32 %v1397, %v1398
    %v1400 = vrot.slane %v1399, 1
    %v1401 = vadd.f32 %v1399, %v1400
    %v1402 = vmul.f32 %v1302, %v1380
    %v1403 = vmul.f32 %v1303, %v1387
    %v1404 = vmul.f32 %v1304, %v1394
    %v1405 = vmul.f32 %v1305, %v1401
    %v1406 = vsel %vm209, %v1402, 0.0
    %1407 = vadd.xlane.f32.xlu0 %v1406
    %v1408 = vpop.xlane.xlu0 %1407
    %v1409 = vsel %vm209, %v1403, 0.0
    %1410 = vadd.xlane.f32.xlu0 %v1409
    %v1411 = vpop.xlane.xlu0 %1410
    %v1412 = vsel %vm209, %v1404, 0.0
    %1413 = vadd.xlane.f32.xlu0 %v1412
    %v1414 = vpop.xlane.xlu0 %1413
    %v1415 = vsel %vm209, %v1405, 0.0
    %1416 = vadd.xlane.f32.xlu0 %v1415
    %v1417 = vpop.xlane.xlu0 %1416
    %v1422 = vlaneseq
    %v1423 = vand.u32 %v1422, 127
    %v1424 = vlaneseq
    %v1425 = vshrl.u32 %v1424, 7
    %v1426 = vsub.s32 %v1423, %v1425
    %v1427 = vrot.slane %v1408, %v1426
    %v1428 = vlaneseq
    %v1429 = vshrl.u32 %v1428, 7
    %v1430 = vsub.s32 %v1423, %v1429
    %v1431 = vrot.slane %v1411, %v1430
    %v1432 = vlaneseq
    %v1433 = vshrl.u32 %v1432, 7
    %v1434 = vsub.s32 %v1423, %v1433
    %v1435 = vrot.slane %v1414, %v1434
    %v1436 = vlaneseq
    %v1437 = vshrl.u32 %v1436, 7
    %v1438 = vsub.s32 %v1423, %v1437
    %v1439 = vrot.slane %v1417, %v1438
    %vm1440 = vcmask 1041409
    %v1441 = vsel %vm1440, %v1431, %v1427
    %vm1442 = vcmask 1042434
    %v1443 = vsel %vm1442, %v1435, %v1441
    %vm1444 = vcmask 1043459
    %v1445 = vsel %vm1444, %v1439, %v1443
    %v1446 = vsel %vm209, %v1445, 0
    %1448 = vmatprep.subr.mxu0 0.0
    %1449 = vmatpush1.xpose.msra.mxu0 %v1446
    %1450 = vmatprep.subr.mxu0 0.0
    %1451 = vmatpush1.xpose.msra.mxu0 0.0
    %1452 = vmatprep.subr.mxu0 0.0
    %1453 = vmatpush1.xpose.msra.mxu0 0.0
    %1454 = vmatprep.subr.mxu0 0.0
    %1455 = vmatpush1.xpose.msra.mxu0 0.0
    %1456 = vmatprep.subr.mxu0 0.0
    %1457 = vmatpush1.xpose.msra.mxu0 0.0
    %1458 = vmatprep.subr.mxu0 0.0
    %1459 = vmatpush1.xpose.msra.mxu0 0.0
    %1460 = vmatprep.subr.mxu0 0.0
    %1461 = vmatpush1.xpose.msra.mxu0 0.0
    %1462 = vmatprep.subr.mxu0 0.0
    %1463 = vmatpush1.xpose.msra.mxu0 0.0
    %1464 = vmatprep.subr.mxu0 0.0
    %1465 = vmatpush1.xpose.msra.mxu0 0.0
    %1466 = vmatprep.subr.mxu0 0.0
    %1467 = vmatpush1.xpose.msra.mxu0 0.0
    %1468 = vmatprep.subr.mxu0 0.0
    %1469 = vmatpush1.xpose.msra.mxu0 0.0
    %1470 = vmatprep.subr.mxu0 0.0
    %1471 = vmatpush1.xpose.msra.mxu0 0.0
    %1472 = vmatprep.subr.mxu0 0.0
    %1473 = vmatpush1.xpose.msra.mxu0 0.0
    %1474 = vmatprep.subr.mxu0 0.0
    %1475 = vmatpush1.xpose.msra.mxu0 0.0
    %1476 = vmatprep.subr.mxu0 0.0
    %1477 = vmatpush1.xpose.msra.mxu0 0.0
    %1478 = vmatprep.subr.mxu0 0.0
    %1479 = vmatpush1.xpose.msra.mxu0 0.0
    %1480 = vmatprep.subr.mxu0 0.0
    %1481 = vmatpush1.xpose.msra.mxu0 0.0
    %1482 = vmatprep.subr.mxu0 0.0
    %1483 = vmatpush1.xpose.msra.mxu0 0.0
    %1484 = vmatprep.subr.mxu0 0.0
    %1485 = vmatpush1.xpose.msra.mxu0 0.0
    %1486 = vmatprep.subr.mxu0 0.0
    %1487 = vmatpush1.xpose.msra.mxu0 0.0
    %1488 = vmatprep.subr.mxu0 0.0
    %1489 = vmatpush1.xpose.msra.mxu0 0.0
    %1490 = vmatprep.subr.mxu0 0.0
    %1491 = vmatpush1.xpose.msra.mxu0 0.0
    %1492 = vmatprep.subr.mxu0 0.0
    %1493 = vmatpush1.xpose.msra.mxu0 0.0
    %1494 = vmatprep.subr.mxu0 0.0
    %1495 = vmatpush1.xpose.msra.mxu0 0.0
    %1496 = vmatprep.subr.mxu0 0.0
    %1497 = vmatpush1.xpose.msra.mxu0 0.0
    %1498 = vmatprep.subr.mxu0 0.0
    %1499 = vmatpush1.xpose.msra.mxu0 0.0
    %1500 = vmatprep.subr.mxu0 0.0
    %1501 = vmatpush1.xpose.msra.mxu0 0.0
    %1502 = vmatprep.subr.mxu0 0.0
    %1503 = vmatpush1.xpose.msra.mxu0 0.0
    %1504 = vmatprep.subr.mxu0 0.0
    %1505 = vmatpush1.xpose.msra.mxu0 0.0
    %1506 = vmatprep.subr.mxu0 0.0
    %1507 = vmatpush1.xpose.msra.mxu0 0.0
    %1508 = vmatprep.subr.mxu0 0.0
    %1509 = vmatpush1.xpose.msra.mxu0 0.0
    %1510 = vmatprep.subr.mxu0 0.0
    %1511 = vmatpush1.xpose.msra.mxu0 0.0
    %1512 = vmatprep.mubr.f32.mxu0 0.0
    %1513 = vmatmul.mubr.f32.gmra.mrb[0].mxu0 %v1446
    %v1514 = vpop.f32.mrb[0].mxu0
    %v1515 = vadd.f32 0.0, %v1514
    %v1516 = vpop.f32.mrb[0].mxu0
    %1517 = vdwg.mxu0
    %v1518 = vld [vmem:[%s1] sm:$0xf]
    %vm1519 = vcmask 27648
    %v1520 = vsel %vm1519, %v1515, -inf
    %1521 = vmax.xlane.f32.xlu0 %v1520
    %v1522 = vpop.xlane.xlu0 %1521
    %v1523 = vsub.f32 %v1515, %v1522
    %v1524 = vmul.f32 %v1523, 1.442695
    %v1525 = vpow.pop %v1524
    %v1526 = vsel %vm1519, %v1525, 0.0
    %1527 = vadd.xlane.f32.xlu0 %v1526
    %v1528 = vpop.xlane.xlu0 %1527
    %v1529 = vrcp.pop %v1528
    %v1530 = vmul.f32 %v1525, %v1529
    %v1531 = vsel %vm1519, %v1530, -inf
    %1532 = vmax.xlane.f32.xlu0 %v1531
    %v1533 = vpop.xlane.xlu0 %1532
    %v1534 = vsub.f32 %v1530, %v1533
    %v1535 = vmul.f32 %v1534, 1.442695
    %v1536 = vpow.pop %v1535
    %v1537 = vsel %vm1519, %v1536, 0.0
    %1538 = vadd.xlane.f32.xlu0 %v1537
    %v1539 = vpop.xlane.xlu0 %1538
    %v1540 = vrcp.pop %v1539
    %v1541 = vmul.f32 %v1536, %v1540
    %v1542 = vadd.f32 %v1518, %v1541
    %v1543 = vsel %vm1519, %v1542, -inf
    %1544 = vmax.xlane.f32.xlu0 %v1543
    %v1545 = vpop.xlane.xlu0 %1544
    %v1546 = vsub.f32 %v1542, %v1545
    %v1547 = vmul.f32 %v1546, 1.442695
    %v1548 = vpow.pop %v1547
    %v1549 = vsel %vm1519, %v1548, 0.0
    %1550 = vadd.xlane.f32.xlu0 %v1549
    %v1551 = vpop.xlane.xlu0 %1550
    %v1552 = vrcp.pop %v1551
    %v1553 = vmul.f32 %v1548, %v1552
    %v1554 = vsub.f32 0.0, %v1553
    %v1555 = vmul.f32 %v1554, 1.442695
    %v1556 = vpow.pop %v1555
    %v1557 = vadd.f32 %v1556, 1.0
    %v1558 = vrcp.pop %v1557
    %v1559 = vmul.f32 1.0, %v1558
    %vm1560 = vcmask 31744
    %v1562 = vsel %vm1560, %v1559, 0
    %v1565 = vsel %vm213, %v548, 0
    %1567 = vmatprep.subr.mxu0 0.0
    %1568 = vmatpush1.msra.mxu0 %v1565
    %1569 = vmatprep.subr.mxu0 0.0
    %1570 = vmatpush1.msra.mxu0 0.0
    %1571 = vmatprep.subr.mxu0 0.0
    %1572 = vmatpush1.msra.mxu0 0.0
    %1573 = vmatprep.subr.mxu0 0.0
    %1574 = vmatpush1.msra.mxu0 0.0
    %1575 = vmatprep.subr.mxu0 0.0
    %1576 = vmatpush1.msra.mxu0 0.0
    %1577 = vmatprep.subr.mxu0 0.0
    %1578 = vmatpush1.msra.mxu0 0.0
    %1579 = vmatprep.subr.mxu0 0.0
    %1580 = vmatpush1.msra.mxu0 0.0
    %1581 = vmatprep.subr.mxu0 0.0
    %1582 = vmatpush1.msra.mxu0 0.0
    %1583 = vmatprep.subr.mxu0 0.0
    %1584 = vmatpush1.msra.mxu0 0.0
    %1585 = vmatprep.subr.mxu0 0.0
    %1586 = vmatpush1.msra.mxu0 0.0
    %1587 = vmatprep.subr.mxu0 0.0
    %1588 = vmatpush1.msra.mxu0 0.0
    %1589 = vmatprep.subr.mxu0 0.0
    %1590 = vmatpush1.msra.mxu0 0.0
    %1591 = vmatprep.subr.mxu0 0.0
    %1592 = vmatpush1.msra.mxu0 0.0
    %1593 = vmatprep.subr.mxu0 0.0
    %1594 = vmatpush1.msra.mxu0 0.0
    %1595 = vmatprep.subr.mxu0 0.0
    %1596 = vmatpush1.msra.mxu0 0.0
    %1597 = vmatprep.subr.mxu0 0.0
    %1598 = vmatpush1.msra.mxu0 0.0
    %1599 = vmatprep.subr.mxu0 0.0
    %1600 = vmatpush1.msra.mxu0 0.0
    %1601 = vmatprep.subr.mxu0 0.0
    %1602 = vmatpush1.msra.mxu0 0.0
    %1603 = vmatprep.subr.mxu0 0.0
    %1604 = vmatpush1.msra.mxu0 0.0
    %1605 = vmatprep.subr.mxu0 0.0
    %1606 = vmatpush1.msra.mxu0 0.0
    %1607 = vmatprep.subr.mxu0 0.0
    %1608 = vmatpush1.msra.mxu0 0.0
    %1609 = vmatprep.subr.mxu0 0.0
    %1610 = vmatpush1.msra.mxu0 0.0
    %1611 = vmatprep.subr.mxu0 0.0
    %1612 = vmatpush1.msra.mxu0 0.0
    %1613 = vmatprep.subr.mxu0 0.0
    %1614 = vmatpush1.msra.mxu0 0.0
    %1615 = vmatprep.subr.mxu0 0.0
    %1616 = vmatpush1.msra.mxu0 0.0
    %1617 = vmatprep.subr.mxu0 0.0
    %1618 = vmatpush1.msra.mxu0 0.0
    %1619 = vmatprep.subr.mxu0 0.0
    %1620 = vmatpush1.msra.mxu0 0.0
    %1621 = vmatprep.subr.mxu0 0.0
    %1622 = vmatpush1.msra.mxu0 0.0
    %1623 = vmatprep.subr.mxu0 0.0
    %1624 = vmatpush1.msra.mxu0 0.0
    %1625 = vmatprep.subr.mxu0 0.0
    %1626 = vmatpush1.msra.mxu0 0.0
    %1627 = vmatprep.subr.mxu0 0.0
    %1628 = vmatpush1.msra.mxu0 0.0
    %1629 = vmatprep.subr.mxu0 0.0
    %1630 = vmatpush1.msra.mxu0 0.0
    %1631 = vmatprep.mubr.f32.mxu0 0.0
    %1632 = vmatmul.mubr.f32.gmra.mrb[0].mxu0 %v1562
    %v1633 = vpop.f32.mrb[0].mxu0
    %v1634 = vadd.f32 0.0, %v1633
    %v1635 = vpop.f32.mrb[0].mxu0
    %1636 = vdwg.mxu0
    %v1637 = vld [vmem:[#allocation10] sm:$0xf]
    %v1638 = vld [vmem:[#allocation10 + $0x4] sm:$0xf]
    %v1639 = vld [vmem:[#allocation10 + $0x8] sm:$0xf]
    %v1640 = vld [vmem:[#allocation10 + $0xc] sm:$0xf]
    %v1641 = vld [vmem:[#allocation10 + $0x10] sm:$0xf]
    %v1642 = vld [vmem:[#allocation10 + $0x14] sm:$0xf]
    %v1643 = vld [vmem:[#allocation10 + $0x18] sm:$0xf]
    %v1644 = vld [vmem:[#allocation10 + $0x1c] sm:$0xf]
    %v1645 = vld [vmem:[#allocation10 + $0x20] sm:$0xf]
    %v1646 = vld [vmem:[#allocation10 + $0x24] sm:$0xf]
    %v1647 = vld [vmem:[#allocation10 + $0x28] sm:$0xf]
    %v1648 = vld [vmem:[#allocation10 + $0x2c] sm:$0xf]
    %v1649 = vld [vmem:[#allocation10 + $0x30] sm:$0xf]
    %v1650 = vld [vmem:[#allocation10 + $0x34] sm:$0xf]
    %v1651 = vld [vmem:[#allocation10 + $0x38] sm:$0xf]
    %v1652 = vld [vmem:[#allocation10 + $0x3c] sm:$0xf]
    %v1653 = vpack.c.bf16 %v1634, %v1634
    %v1670 = vunpack.c.l.b16 %v1637
    %v1671 = vunpack.c.l.b16 %v1638
    %v1672 = vunpack.c.l.b16 %v1639
    %v1673 = vunpack.c.l.b16 %v1640
    %v1674 = vunpack.c.l.b16 %v1641
    %v1675 = vunpack.c.l.b16 %v1642
    %v1676 = vunpack.c.l.b16 %v1643
    %v1677 = vunpack.c.l.b16 %v1644
    %v1678 = vunpack.c.l.b16 %v1645
    %v1679 = vunpack.c.l.b16 %v1646
    %v1680 = vunpack.c.l.b16 %v1647
    %v1681 = vunpack.c.l.b16 %v1648
    %v1682 = vunpack.c.l.b16 %v1649
    %v1683 = vunpack.c.l.b16 %v1650
    %v1684 = vunpack.c.l.b16 %v1651
    %v1685 = vunpack.c.l.b16 %v1652
    %v1686 = vpack.c.b16 %v1671, %v1670
    %v1687 = vpack.c.b16 %v1673, %v1672
    %v1688 = vpack.c.b16 %v1675, %v1674
    %v1689 = vpack.c.b16 %v1677, %v1676
    %v1690 = vpack.c.b16 %v1679, %v1678
    %v1691 = vpack.c.b16 %v1681, %v1680
    %v1692 = vpack.c.b16 %v1683, %v1682
    %v1693 = vpack.c.b16 %v1685, %v1684
    %1702 = vmatprep.subr.bf16.mxu0 0
    %1703 = vmatpush1.bf16.msra.mxu0 %v1686
    %1704 = vmatprep.subr.bf16.mxu0 0
    %1705 = vmatpush1.bf16.msra.mxu0 %v1687
    %1706 = vmatprep.subr.bf16.mxu0 0
    %1707 = vmatpush1.bf16.msra.mxu0 %v1688
    %1708 = vmatprep.subr.bf16.mxu0 0
    %1709 = vmatpush1.bf16.msra.mxu0 %v1689
    %1710 = vmatprep.subr.bf16.mxu0 0
    %1711 = vmatpush1.bf16.msra.mxu0 %v1690
    %1712 = vmatprep.subr.bf16.mxu0 0
    %1713 = vmatpush1.bf16.msra.mxu0 %v1691
    %1714 = vmatprep.subr.bf16.mxu0 0
    %1715 = vmatpush1.bf16.msra.mxu0 %v1692
    %1716 = vmatprep.subr.bf16.mxu0 0
    %1717 = vmatpush1.bf16.msra.mxu0 %v1693
    %1718 = vmatprep.subr.bf16.mxu0 0
    %1719 = vmatpush1.bf16.msra.mxu0 0
    %1720 = vmatprep.subr.bf16.mxu0 0
    %1721 = vmatpush1.bf16.msra.mxu0 0
    %1722 = vmatprep.subr.bf16.mxu0 0
    %1723 = vmatpush1.bf16.msra.mxu0 0
    %1724 = vmatprep.subr.bf16.mxu0 0
    %1725 = vmatpush1.bf16.msra.mxu0 0
    %1726 = vmatprep.subr.bf16.mxu0 0
    %1727 = vmatpush1.bf16.msra.mxu0 0
    %1728 = vmatprep.subr.bf16.mxu0 0
    %1729 = vmatpush1.bf16.msra.mxu0 0
    %1730 = vmatprep.subr.bf16.mxu0 0
    %1731 = vmatpush1.bf16.msra.mxu0 0
    %1732 = vmatprep.subr.bf16.mxu0 0
    %1733 = vmatpush1.bf16.msra.mxu0 0
    %1734 = vmatprep.mubr.bf16.mxu0 0
    %1735 = vmatmul.mubr.bf16.gmra.mrb[0].mxu0 %v1653
    %v1736 = vpop.f32.mrb[0].mxu0
    %v1737 = vadd.f32 0.0, %v1736
    %v1738 = vpop.f32.mrb[0].mxu0
    %v1739 = vpop.f32.mrb[0].mxu0
    %v1740 = vpop.f32.mrb[0].mxu0
    %1741 = vdwg.mxu0
    %v1742 = vsel %vm213, %v1737, 0.0
    %v1743 = vrot.slane %v1742, 4
    %v1744 = vadd.f32 %v1742, %v1743
    %v1745 = vrot.slane %v1744, 2
    %v1746 = vadd.f32 %v1744, %v1745
    %v1747 = vrot.slane %v1746, 1
    %v1748 = vadd.f32 %v1746, %v1747
    %v1749 = vmul.f32 %v1748, %v444
    %v1750 = vmul.f32 %v1737, %v1737
    %v1751 = vsel %vm213, %v1750, 0.0
    %v1752 = vrot.slane %v1751, 4
    %v1753 = vadd.f32 %v1751, %v1752
    %v1754 = vrot.slane %v1753, 2
    %v1755 = vadd.f32 %v1753, %v1754
    %v1756 = vrot.slane %v1755, 1
    %v1757 = vadd.f32 %v1755, %v1756
    %v1758 = vmul.f32 %v1757, %v444
    %v1759 = vsel %vm455, %v1749, %v1758
    %1760 = vmatprep.subr.mxu0 0.0
    %1761 = vmatpush1.msra.mxu0 %v117
    %1762 = vmatprep.subr.mxu0 0.0
    %1763 = vmatpush1.msra.mxu0 %v118
    %1764 = vmatprep.subr.mxu0 0.0
    %1765 = vmatpush1.msra.mxu0 %v119
    %1766 = vmatprep.subr.mxu0 0.0
    %1767 = vmatpush1.msra.mxu0 %v120
    %1768 = vmatprep.subr.mxu0 0.0
    %1769 = vmatpush1.msra.mxu0 %v121
    %1770 = vmatprep.subr.mxu0 0.0
    %1771 = vmatpush1.msra.mxu0 %v122
    %1772 = vmatprep.subr.mxu0 0.0
    %1773 = vmatpush1.msra.mxu0 %v123
    %1774 = vmatprep.subr.mxu0 0.0
    %1775 = vmatpush1.msra.mxu0 %v124
    %1776 = vmatprep.subr.mxu0 0.0
    %1777 = vmatpush1.msra.mxu0 %v125
    %1778 = vmatprep.subr.mxu0 0.0
    %1779 = vmatpush1.msra.mxu0 %v126
    %1780 = vmatprep.subr.mxu0 0.0
    %1781 = vmatpush1.msra.mxu0 %v127
    %1782 = vmatprep.subr.mxu0 0.0
    %1783 = vmatpush1.msra.mxu0 %v128
    %1784 = vmatprep.subr.mxu0 0.0
    %1785 = vmatpush1.msra.mxu0 %v129
    %1786 = vmatprep.subr.mxu0 0.0
    %1787 = vmatpush1.msra.mxu0 %v130
    %1788 = vmatprep.subr.mxu0 0.0
    %1789 = vmatpush1.msra.mxu0 %v131
    %1790 = vmatprep.subr.mxu0 0.0
    %1791 = vmatpush1.msra.mxu0 %v132
    %1792 = vmatprep.subr.mxu0 0.0
    %1793 = vmatpush1.msra.mxu0 0.0
    %1794 = vmatprep.subr.mxu0 0.0
    %1795 = vmatpush1.msra.mxu0 0.0
    %1796 = vmatprep.subr.mxu0 0.0
    %1797 = vmatpush1.msra.mxu0 0.0
    %1798 = vmatprep.subr.mxu0 0.0
    %1799 = vmatpush1.msra.mxu0 0.0
    %1800 = vmatprep.subr.mxu0 0.0
    %1801 = vmatpush1.msra.mxu0 0.0
    %1802 = vmatprep.subr.mxu0 0.0
    %1803 = vmatpush1.msra.mxu0 0.0
    %1804 = vmatprep.subr.mxu0 0.0
    %1805 = vmatpush1.msra.mxu0 0.0
    %1806 = vmatprep.subr.mxu0 0.0
    %1807 = vmatpush1.msra.mxu0 0.0
    %1808 = vmatprep.subr.mxu0 0.0
    %1809 = vmatpush1.msra.mxu0 0.0
    %1810 = vmatprep.subr.mxu0 0.0
    %1811 = vmatpush1.msra.mxu0 0.0
    %1812 = vmatprep.subr.mxu0 0.0
    %1813 = vmatpush1.msra.mxu0 0.0
    %1814 = vmatprep.subr.mxu0 0.0
    %1815 = vmatpush1.msra.mxu0 0.0
    %1816 = vmatprep.subr.mxu0 0.0
    %1817 = vmatpush1.msra.mxu0 0.0
    %1818 = vmatprep.subr.mxu0 0.0
    %1819 = vmatpush1.msra.mxu0 0.0
    %1820 = vmatprep.subr.mxu0 0.0
    %1821 = vmatpush1.msra.mxu0 0.0
    %1822 = vmatprep.subr.mxu0 0.0
    %1823 = vmatpush1.msra.mxu0 0.0
    %1824 = vmatprep.mubr.f32.mxu0 0.0
    %1825 = vmatmul.mubr.f32.gmra.mrb[0].mxu0 %v1759
    %v1826 = vpop.f32.mrb[0].mxu0
    %v1827 = vadd.f32 0.0, %v1826
    %v1828 = vpop.f32.mrb[0].mxu0
    %1829 = vdwg.mxu0
    %v1830 = vmul.f32 %v1827, %v1827
    %v1832 = vrot.slane %v1830, 7
    %v1834 = vsub.f32 %v1827, %v1832
    %v1835 = vmax.f32 %v1834, 0.0
    %v1836 = vlaneseq
    %v1837 = vshrl.u32 %v1836, 7
    %v1838 = vsub.s32 0, %v1837
    %v1839 = vrot.slane %v1827, %v1838
    %v1840 = vsub.f32 %v1737, %v1839
    %v1841 = vadd.f32 %v1835, 1e-05
    %v1842 = vrsqrt.pop %v1841
    %v1843 = vlaneseq
    %v1844 = vshrl.u32 %v1843, 7
    %v1845 = vsub.s32 1, %v1844
    %v1846 = vrot.slane %v1842, %v1845
    %v1847 = vmul.f32 %v1840, %v1846
    %v1848 = vld [vmem:[#allocation2 + $0x6] ss:$0 sm:$0xff]
    %v1849 = vmul.f32 %v1847, %v1848
    %v1850 = vld [vmem:[#allocation2 + $0x7] ss:$0 sm:$0xff]
    %v1851 = vadd.f32 %v1849, %v1850
    %v1852 = vmax.f32 %v1851, 0.0
    %v1853 = vld [vmem:[%s2] sm:$0xf]
    %v1854 = vmul.f32 %v1852, %v1853
    %v1856 = vsel %vm209, %v1370, 0
    %1858 = vmatprep.subr.mxu0 0.0
    %1859 = vmatpush1.xpose.msra.mxu0 %v1856
    %1860 = vmatprep.subr.mxu0 0.0
    %1861 = vmatpush1.xpose.msra.mxu0 0.0
    %1862 = vmatprep.subr.mxu0 0.0
    %1863 = vmatpush1.xpose.msra.mxu0 0.0
    %1864 = vmatprep.subr.mxu0 0.0
    %1865 = vmatpush1.xpose.msra.mxu0 0.0
    %1866 = vmatprep.subr.mxu0 0.0
    %1867 = vmatpush1.xpose.msra.mxu0 0.0
    %1868 = vmatprep.subr.mxu0 0.0
    %1869 = vmatpush1.xpose.msra.mxu0 0.0
    %1870 = vmatprep.subr.mxu0 0.0
    %1871 = vmatpush1.xpose.msra.mxu0 0.0
    %1872 = vmatprep.subr.mxu0 0.0
    %1873 = vmatpush1.xpose.msra.mxu0 0.0
    %1874 = vmatprep.subr.mxu0 0.0
    %1875 = vmatpush1.xpose.msra.mxu0 0.0
    %1876 = vmatprep.subr.mxu0 0.0
    %1877 = vmatpush1.xpose.msra.mxu0 0.0
    %1878 = vmatprep.subr.mxu0 0.0
    %1879 = vmatpush1.xpose.msra.mxu0 0.0
    %1880 = vmatprep.subr.mxu0 0.0
    %1881 = vmatpush1.xpose.msra.mxu0 0.0
    %1882 = vmatprep.subr.mxu0 0.0
    %1883 = vmatpush1.xpose.msra.mxu0 0.0
    %1884 = vmatprep.subr.mxu0 0.0
    %1885 = vmatpush1.xpose.msra.mxu0 0.0
    %1886 = vmatprep.subr.mxu0 0.0
    %1887 = vmatpush1.xpose.msra.mxu0 0.0
    %1888 = vmatprep.subr.mxu0 0.0
    %1889 = vmatpush1.xpose.msra.mxu0 0.0
    %1890 = vmatprep.subr.mxu0 0.0
    %1891 = vmatpush1.xpose.msra.mxu0 0.0
    %1892 = vmatprep.subr.mxu0 0.0
    %1893 = vmatpush1.xpose.msra.mxu0 0.0
    %1894 = vmatprep.subr.mxu0 0.0
    %1895 = vmatpush1.xpose.msra.mxu0 0.0
    %1896 = vmatprep.subr.mxu0 0.0
    %1897 = vmatpush1.xpose.msra.mxu0 0.0
    %1898 = vmatprep.subr.mxu0 0.0
    %1899 = vmatpush1.xpose.msra.mxu0 0.0
    %1900 = vmatprep.subr.mxu0 0.0
    %1901 = vmatpush1.xpose.msra.mxu0 0.0
    %1902 = vmatprep.subr.mxu0 0.0
    %1903 = vmatpush1.xpose.msra.mxu0 0.0
    %1904 = vmatprep.subr.mxu0 0.0
    %1905 = vmatpush1.xpose.msra.mxu0 0.0
    %1906 = vmatprep.subr.mxu0 0.0
    %1907 = vmatpush1.xpose.msra.mxu0 0.0
    %1908 = vmatprep.subr.mxu0 0.0
    %1909 = vmatpush1.xpose.msra.mxu0 0.0
    %1910 = vmatprep.subr.mxu0 0.0
    %1911 = vmatpush1.xpose.msra.mxu0 0.0
    %1912 = vmatprep.subr.mxu0 0.0
    %1913 = vmatpush1.xpose.msra.mxu0 0.0
    %1914 = vmatprep.subr.mxu0 0.0
    %1915 = vmatpush1.xpose.msra.mxu0 0.0
    %1916 = vmatprep.subr.mxu0 0.0
    %1917 = vmatpush1.xpose.msra.mxu0 0.0
    %1918 = vmatprep.subr.mxu0 0.0
    %1919 = vmatpush1.xpose.msra.mxu0 0.0
    %1920 = vmatprep.subr.mxu0 0.0
    %1921 = vmatpush1.xpose.msra.mxu0 0.0
    %1922 = vmatprep.mubr.f32.mxu0 0.0
    %1923 = vmatmul.mubr.f32.gmra.mrb[0].mxu0 %v1856
    %v1924 = vpop.f32.mrb[0].mxu0
    %v1925 = vadd.f32 0.0, %v1924
    %v1926 = vpop.f32.mrb[0].mxu0
    %1927 = vdwg.mxu0
    %v1929 = vsel %vm209, %v1371, 0
    %1931 = vmatprep.subr.mxu0 0.0
    %1932 = vmatpush1.xpose.msra.mxu0 %v1929
    %1933 = vmatprep.subr.mxu0 0.0
    %1934 = vmatpush1.xpose.msra.mxu0 0.0
    %1935 = vmatprep.subr.mxu0 0.0
    %1936 = vmatpush1.xpose.msra.mxu0 0.0
    %1937 = vmatprep.subr.mxu0 0.0
    %1938 = vmatpush1.xpose.msra.mxu0 0.0
    %1939 = vmatprep.subr.mxu0 0.0
    %1940 = vmatpush1.xpose.msra.mxu0 0.0
    %1941 = vmatprep.subr.mxu0 0.0
    %1942 = vmatpush1.xpose.msra.mxu0 0.0
    %1943 = vmatprep.subr.mxu0 0.0
    %1944 = vmatpush1.xpose.msra.mxu0 0.0
    %1945 = vmatprep.subr.mxu0 0.0
    %1946 = vmatpush1.xpose.msra.mxu0 0.0
    %1947 = vmatprep.subr.mxu0 0.0
    %1948 = vmatpush1.xpose.msra.mxu0 0.0
    %1949 = vmatprep.subr.mxu0 0.0
    %1950 = vmatpush1.xpose.msra.mxu0 0.0
    %1951 = vmatprep.subr.mxu0 0.0
    %1952 = vmatpush1.xpose.msra.mxu0 0.0
    %1953 = vmatprep.subr.mxu0 0.0
    %1954 = vmatpush1.xpose.msra.mxu0 0.0
    %1955 = vmatprep.subr.mxu0 0.0
    %1956 = vmatpush1.xpose.msra.mxu0 0.0
    %1957 = vmatprep.subr.mxu0 0.0
    %1958 = vmatpush1.xpose.msra.mxu0 0.0
    %1959 = vmatprep.subr.mxu0 0.0
    %1960 = vmatpush1.xpose.msra.mxu0 0.0
    %1961 = vmatprep.subr.mxu0 0.0
    %1962 = vmatpush1.xpose.msra.mxu0 0.0
    %1963 = vmatprep.subr.mxu0 0.0
    %1964 = vmatpush1.xpose.msra.mxu0 0.0
    %1965 = vmatprep.subr.mxu0 0.0
    %1966 = vmatpush1.xpose.msra.mxu0 0.0
    %1967 = vmatprep.subr.mxu0 0.0
    %1968 = vmatpush1.xpose.msra.mxu0 0.0
    %1969 = vmatprep.subr.mxu0 0.0
    %1970 = vmatpush1.xpose.msra.mxu0 0.0
    %1971 = vmatprep.subr.mxu0 0.0
    %1972 = vmatpush1.xpose.msra.mxu0 0.0
    %1973 = vmatprep.subr.mxu0 0.0
    %1974 = vmatpush1.xpose.msra.mxu0 0.0
    %1975 = vmatprep.subr.mxu0 0.0
    %1976 = vmatpush1.xpose.msra.mxu0 0.0
    %1977 = vmatprep.subr.mxu0 0.0
    %1978 = vmatpush1.xpose.msra.mxu0 0.0
    %1979 = vmatprep.subr.mxu0 0.0
    %1980 = vmatpush1.xpose.msra.mxu0 0.0
    %1981 = vmatprep.subr.mxu0 0.0
    %1982 = vmatpush1.xpose.msra.mxu0 0.0
    %1983 = vmatprep.subr.mxu0 0.0
    %1984 = vmatpush1.xpose.msra.mxu0 0.0
    %1985 = vmatprep.subr.mxu0 0.0
    %1986 = vmatpush1.xpose.msra.mxu0 0.0
    %1987 = vmatprep.subr.mxu0 0.0
    %1988 = vmatpush1.xpose.msra.mxu0 0.0
    %1989 = vmatprep.subr.mxu0 0.0
    %1990 = vmatpush1.xpose.msra.mxu0 0.0
    %1991 = vmatprep.subr.mxu0 0.0
    %1992 = vmatpush1.xpose.msra.mxu0 0.0
    %1993 = vmatprep.subr.mxu0 0.0
    %1994 = vmatpush1.xpose.msra.mxu0 0.0
    %1995 = vmatprep.mubr.f32.mxu0 0.0
    %1996 = vmatmul.mubr.f32.gmra.mrb[0].mxu0 %v1929
    %v1997 = vpop.f32.mrb[0].mxu0
    %v1998 = vadd.f32 0.0, %v1997
    %v1999 = vpop.f32.mrb[0].mxu0
    %2000 = vdwg.mxu0
    %v2002 = vsel %vm209, %v1372, 0
    %2004 = vmatprep.subr.mxu0 0.0
    %2005 = vmatpush1.xpose.msra.mxu0 %v2002
    %2006 = vmatprep.subr.mxu0 0.0
    %2007 = vmatpush1.xpose.msra.mxu0 0.0
    %2008 = vmatprep.subr.mxu0 0.0
    %2009 = vmatpush1.xpose.msra.mxu0 0.0
    %2010 = vmatprep.subr.mxu0 0.0
    %2011 = vmatpush1.xpose.msra.mxu0 0.0
    %2012 = vmatprep.subr.mxu0 0.0
    %2013 = vmatpush1.xpose.msra.mxu0 0.0
    %2014 = vmatprep.subr.mxu0 0.0
    %2015 = vmatpush1.xpose.msra.mxu0 0.0
    %2016 = vmatprep.subr.mxu0 0.0
    %2017 = vmatpush1.xpose.msra.mxu0 0.0
    %2018 = vmatprep.subr.mxu0 0.0
    %2019 = vmatpush1.xpose.msra.mxu0 0.0
    %2020 = vmatprep.subr.mxu0 0.0
    %2021 = vmatpush1.xpose.msra.mxu0 0.0
    %2022 = vmatprep.subr.mxu0 0.0
    %2023 = vmatpush1.xpose.msra.mxu0 0.0
    %2024 = vmatprep.subr.mxu0 0.0
    %2025 = vmatpush1.xpose.msra.mxu0 0.0
    %2026 = vmatprep.subr.mxu0 0.0
    %2027 = vmatpush1.xpose.msra.mxu0 0.0
    %2028 = vmatprep.subr.mxu0 0.0
    %2029 = vmatpush1.xpose.msra.mxu0 0.0
    %2030 = vmatprep.subr.mxu0 0.0
    %2031 = vmatpush1.xpose.msra.mxu0 0.0
    %2032 = vmatprep.subr.mxu0 0.0
    %2033 = vmatpush1.xpose.msra.mxu0 0.0
    %2034 = vmatprep.subr.mxu0 0.0
    %2035 = vmatpush1.xpose.msra.mxu0 0.0
    %2036 = vmatprep.subr.mxu0 0.0
    %2037 = vmatpush1.xpose.msra.mxu0 0.0
    %2038 = vmatprep.subr.mxu0 0.0
    %2039 = vmatpush1.xpose.msra.mxu0 0.0
    %2040 = vmatprep.subr.mxu0 0.0
    %2041 = vmatpush1.xpose.msra.mxu0 0.0
    %2042 = vmatprep.subr.mxu0 0.0
    %2043 = vmatpush1.xpose.msra.mxu0 0.0
    %2044 = vmatprep.subr.mxu0 0.0
    %2045 = vmatpush1.xpose.msra.mxu0 0.0
    %2046 = vmatprep.subr.mxu0 0.0
    %2047 = vmatpush1.xpose.msra.mxu0 0.0
    %2048 = vmatprep.subr.mxu0 0.0
    %2049 = vmatpush1.xpose.msra.mxu0 0.0
    %2050 = vmatprep.subr.mxu0 0.0
    %2051 = vmatpush1.xpose.msra.mxu0 0.0
    %2052 = vmatprep.subr.mxu0 0.0
    %2053 = vmatpush1.xpose.msra.mxu0 0.0
    %2054 = vmatprep.subr.mxu0 0.0
    %2055 = vmatpush1.xpose.msra.mxu0 0.0
    %2056 = vmatprep.subr.mxu0 0.0
    %2057 = vmatpush1.xpose.msra.mxu0 0.0
    %2058 = vmatprep.subr.mxu0 0.0
    %2059 = vmatpush1.xpose.msra.mxu0 0.0
    %2060 = vmatprep.subr.mxu0 0.0
    %2061 = vmatpush1.xpose.msra.mxu0 0.0
    %2062 = vmatprep.subr.mxu0 0.0
    %2063 = vmatpush1.xpose.msra.mxu0 0.0
    %2064 = vmatprep.subr.mxu0 0.0
    %2065 = vmatpush1.xpose.msra.mxu0 0.0
    %2066 = vmatprep.subr.mxu0 0.0
    %2067 = vmatpush1.xpose.msra.mxu0 0.0
    %2068 = vmatprep.mubr.f32.mxu0 0.0
    %2069 = vmatmul.mubr.f32.gmra.mrb[0].mxu0 %v2002
    %v2070 = vpop.f32.mrb[0].mxu0
    %v2071 = vadd.f32 0.0, %v2070
    %v2072 = vpop.f32.mrb[0].mxu0
    %2073 = vdwg.mxu0
    %v2075 = vsel %vm209, %v1373, 0
    %2077 = vmatprep.subr.mxu0 0.0
    %2078 = vmatpush1.xpose.msra.mxu0 %v2075
    %2079 = vmatprep.subr.mxu0 0.0
    %2080 = vmatpush1.xpose.msra.mxu0 0.0
    %2081 = vmatprep.subr.mxu0 0.0
    %2082 = vmatpush1.xpose.msra.mxu0 0.0
    %2083 = vmatprep.subr.mxu0 0.0
    %2084 = vmatpush1.xpose.msra.mxu0 0.0
    %2085 = vmatprep.subr.mxu0 0.0
    %2086 = vmatpush1.xpose.msra.mxu0 0.0
    %2087 = vmatprep.subr.mxu0 0.0
    %2088 = vmatpush1.xpose.msra.mxu0 0.0
    %2089 = vmatprep.subr.mxu0 0.0
    %2090 = vmatpush1.xpose.msra.mxu0 0.0
    %2091 = vmatprep.subr.mxu0 0.0
    %2092 = vmatpush1.xpose.msra.mxu0 0.0
    %2093 = vmatprep.subr.mxu0 0.0
    %2094 = vmatpush1.xpose.msra.mxu0 0.0
    %2095 = vmatprep.subr.mxu0 0.0
    %2096 = vmatpush1.xpose.msra.mxu0 0.0
    %2097 = vmatprep.subr.mxu0 0.0
    %2098 = vmatpush1.xpose.msra.mxu0 0.0
    %2099 = vmatprep.subr.mxu0 0.0
    %2100 = vmatpush1.xpose.msra.mxu0 0.0
    %2101 = vmatprep.subr.mxu0 0.0
    %2102 = vmatpush1.xpose.msra.mxu0 0.0
    %2103 = vmatprep.subr.mxu0 0.0
    %2104 = vmatpush1.xpose.msra.mxu0 0.0
    %2105 = vmatprep.subr.mxu0 0.0
    %2106 = vmatpush1.xpose.msra.mxu0 0.0
    %2107 = vmatprep.subr.mxu0 0.0
    %2108 = vmatpush1.xpose.msra.mxu0 0.0
    %2109 = vmatprep.subr.mxu0 0.0
    %2110 = vmatpush1.xpose.msra.mxu0 0.0
    %2111 = vmatprep.subr.mxu0 0.0
    %2112 = vmatpush1.xpose.msra.mxu0 0.0
    %2113 = vmatprep.subr.mxu0 0.0
    %2114 = vmatpush1.xpose.msra.mxu0 0.0
    %2115 = vmatprep.subr.mxu0 0.0
    %2116 = vmatpush1.xpose.msra.mxu0 0.0
    %2117 = vmatprep.subr.mxu0 0.0
    %2118 = vmatpush1.xpose.msra.mxu0 0.0
    %2119 = vmatprep.subr.mxu0 0.0
    %2120 = vmatpush1.xpose.msra.mxu0 0.0
    %2121 = vmatprep.subr.mxu0 0.0
    %2122 = vmatpush1.xpose.msra.mxu0 0.0
    %2123 = vmatprep.subr.mxu0 0.0
    %2124 = vmatpush1.xpose.msra.mxu0 0.0
    %2125 = vmatprep.subr.mxu0 0.0
    %2126 = vmatpush1.xpose.msra.mxu0 0.0
    %2127 = vmatprep.subr.mxu0 0.0
    %2128 = vmatpush1.xpose.msra.mxu0 0.0
    %2129 = vmatprep.subr.mxu0 0.0
    %2130 = vmatpush1.xpose.msra.mxu0 0.0
    %2131 = vmatprep.subr.mxu0 0.0
    %2132 = vmatpush1.xpose.msra.mxu0 0.0
    %2133 = vmatprep.subr.mxu0 0.0
    %2134 = vmatpush1.xpose.msra.mxu0 0.0
    %2135 = vmatprep.subr.mxu0 0.0
    %2136 = vmatpush1.xpose.msra.mxu0 0.0
    %2137 = vmatprep.subr.mxu0 0.0
    %2138 = vmatpush1.xpose.msra.mxu0 0.0
    %2139 = vmatprep.subr.mxu0 0.0
    %2140 = vmatpush1.xpose.msra.mxu0 0.0
    %2141 = vmatprep.mubr.f32.mxu0 0.0
    %2142 = vmatmul.mubr.f32.gmra.mrb[0].mxu0 %v2075
    %v2143 = vpop.f32.mrb[0].mxu0
    %v2144 = vadd.f32 0.0, %v2143
    %v2145 = vpop.f32.mrb[0].mxu0
    %2146 = vdwg.mxu0
    %v2147 = vsel %vm209, %v1925, -inf
    %v2148 = vrot.slane %v2147, 4
    %v2149 = vmax.f32 %v2147, %v2148
    %v2150 = vrot.slane %v2149, 2
    %v2151 = vmax.f32 %v2149, %v2150
    %v2152 = vrot.slane %v2151, 1
    %v2153 = vmax.f32 %v2151, %v2152
    %v2154 = vsel %vm209, %v1998, -inf
    %v2155 = vrot.slane %v2154, 4
    %v2156 = vmax.f32 %v2154, %v2155
    %v2157 = vrot.slane %v2156, 2
    %v2158 = vmax.f32 %v2156, %v2157
    %v2159 = vrot.slane %v2158, 1
    %v2160 = vmax.f32 %v2158, %v2159
    %v2161 = vsel %vm209, %v2071, -inf
    %v2162 = vrot.slane %v2161, 4
    %v2163 = vmax.f32 %v2161, %v2162
    %v2164 = vrot.slane %v2163, 2
    %v2165 = vmax.f32 %v2163, %v2164
    %v2166 = vrot.slane %v2165, 1
    %v2167 = vmax.f32 %v2165, %v2166
    %v2168 = vsel %vm209, %v2144, -inf
    %v2169 = vrot.slane %v2168, 4
    %v2170 = vmax.f32 %v2168, %v2169
    %v2171 = vrot.slane %v2170, 2
    %v2172 = vmax.f32 %v2170, %v2171
    %v2173 = vrot.slane %v2172, 1
    %v2174 = vmax.f32 %v2172, %v2173
    %v2175 = vsub.f32 %v1925, %v2153
    %v2176 = vsub.f32 %v1998, %v2160
    %v2177 = vsub.f32 %v2071, %v2167
    %v2178 = vsub.f32 %v2144, %v2174
    %v2179 = vmul.f32 %v2175, 1.442695
    %v2180 = vpow.pop %v2179
    %v2181 = vmul.f32 %v2176, 1.442695
    %v2182 = vpow.pop %v2181
    %v2183 = vmul.f32 %v2177, 1.442695
    %v2184 = vpow.pop %v2183
    %v2185 = vmul.f32 %v2178, 1.442695
    %v2186 = vpow.pop %v2185
    %v2187 = vsel %vm209, %v2180, 0.0
    %v2188 = vrot.slane %v2187, 4
    %v2189 = vadd.f32 %v2187, %v2188
    %v2190 = vrot.slane %v2189, 2
    %v2191 = vadd.f32 %v2189, %v2190
    %v2192 = vrot.slane %v2191, 1
    %v2193 = vadd.f32 %v2191, %v2192
    %v2194 = vsel %vm209, %v2182, 0.0
    %v2195 = vrot.slane %v2194, 4
    %v2196 = vadd.f32 %v2194, %v2195
    %v2197 = vrot.slane %v2196, 2
    %v2198 = vadd.f32 %v2196, %v2197
    %v2199 = vrot.slane %v2198, 1
    %v2200 = vadd.f32 %v2198, %v2199
    %v2201 = vsel %vm209, %v2184, 0.0
    %v2202 = vrot.slane %v2201, 4
    %v2203 = vadd.f32 %v2201, %v2202
    %v2204 = vrot.slane %v2203, 2
    %v2205 = vadd.f32 %v2203, %v2204
    %v2206 = vrot.slane %v2205, 1
    %v2207 = vadd.f32 %v2205, %v2206
    %v2208 = vsel %vm209, %v2186, 0.0
    %v2209 = vrot.slane %v2208, 4
    %v2210 = vadd.f32 %v2208, %v2209
    %v2211 = vrot.slane %v2210, 2
    %v2212 = vadd.f32 %v2210, %v2211
    %v2213 = vrot.slane %v2212, 1
    %v2214 = vadd.f32 %v2212, %v2213
    %v2215 = vrcp.pop %v2193
    %v2216 = vmul.f32 %v2180, %v2215
    %v2217 = vrcp.pop %v2200
    %v2218 = vmul.f32 %v2182, %v2217
    %v2219 = vrcp.pop %v2207
    %v2220 = vmul.f32 %v2184, %v2219
    %v2221 = vrcp.pop %v2214
    %v2222 = vmul.f32 %v2186, %v2221
    %v2223 = vld [vmem:[%s10] sm:$0xff]
    %v2224 = vadd.f32 %v2223, %v2216
    %v2225 = vadd.f32 %v2223, %v2218
    %v2226 = vadd.f32 %v2223, %v2220
    %v2227 = vadd.f32 %v2223, %v2222
    %2228 = vrot.lane.b32.xlu0 %v548, 112
    %v2229 = vpop.permute.xlu0 %2228
    %2231 = vrot.lane.b32.xlu0 %v548, 96
    %v2232 = vpop.permute.xlu0 %2231
    %2234 = vrot.lane.b32.xlu0 %v548, 80
    %v2235 = vpop.permute.xlu0 %2234
    %2237 = vrot.lane.b32.xlu0 %v548, 64
    %v2238 = vpop.permute.xlu0 %2237
    %2240 = vrot.lane.b32.xlu0 %v548, 48
    %v2241 = vpop.permute.xlu0 %2240
    %2243 = vrot.lane.b32.xlu0 %v548, 32
    %v2244 = vpop.permute.xlu0 %2243
    %2246 = vrot.lane.b32.xlu0 %v548, 16
    %v2247 = vpop.permute.xlu0 %2246
    %v2249 = vcombine.low %v548, %v2232
    %v2251 = vunpack.c.l.s4 1983009808
    %v2252 = vunpack.c.0.s8 %v2251
    %v2253 = vlaneseq
    %v2254 = vshrl.u32 %v2253, 7
    %v2255 = vsub.s32 %v2252, %v2254
    %v2256 = vrot.slane %v2249, %v2255
    %v2257 = vcombine.low %v2229, %v2235
    %v2259 = vunpack.c.l.s4 1983009808
    %v2260 = vunpack.c.0.s8 %v2259
    %v2261 = vlaneseq
    %v2262 = vshrl.u32 %v2261, 7
    %v2263 = vsub.s32 %v2260, %v2262
    %v2264 = vrot.slane %v2257, %v2263
    %v2265 = vcombine.low %v2238, %v2244
    %v2267 = vunpack.c.l.s4 1983009808
    %v2268 = vunpack.c.0.s8 %v2267
    %v2269 = vlaneseq
    %v2270 = vshrl.u32 %v2269, 7
    %v2271 = vsub.s32 %v2268, %v2270
    %v2272 = vrot.slane %v2265, %v2271
    %v2273 = vcombine.low %v2241, %v2247
    %v2275 = vunpack.c.l.s4 1983009808
    %v2276 = vunpack.c.0.s8 %v2275
    %v2277 = vlaneseq
    %v2278 = vshrl.u32 %v2277, 7
    %v2279 = vsub.s32 %v2276, %v2278
    %v2280 = vrot.slane %v2273, %v2279
    %v2281 = vcombine.low %v2256, %v2264
    %v2282 = vcombine.high %v2256, %v2264
    %v2284 = vunpack.c.l.s4 1934713408
    %v2285 = vunpack.c.0.s8 %v2284
    %v2286 = vlaneseq
    %v2287 = vshrl.u32 %v2286, 7
    %v2288 = vsub.s32 %v2285, %v2287
    %v2289 = vrot.slane %v2281, %v2288
    %v2291 = vunpack.c.l.s4 1934713408
    %v2292 = vunpack.c.0.s8 %v2291
    %v2293 = vlaneseq
    %v2294 = vshrl.u32 %v2293, 7
    %v2295 = vsub.s32 %v2292, %v2294
    %v2296 = vrot.slane %v2282, %v2295
    %v2297 = vcombine.low %v2272, %v2280
    %v2298 = vcombine.high %v2272, %v2280
    %v2300 = vunpack.c.l.s4 1934713408
    %v2301 = vunpack.c.0.s8 %v2300
    %v2302 = vlaneseq
    %v2303 = vshrl.u32 %v2302, 7
    %v2304 = vsub.s32 %v2301, %v2303
    %v2305 = vrot.slane %v2297, %v2304
    %v2307 = vunpack.c.l.s4 1934713408
    %v2308 = vunpack.c.0.s8 %v2307
    %v2309 = vlaneseq
    %v2310 = vshrl.u32 %v2309, 7
    %v2311 = vsub.s32 %v2308, %v2310
    %v2312 = vrot.slane %v2298, %v2311
    %v2313 = vcombine.low %v2289, %v2305
    %v2314 = vcombine.high %v2289, %v2305
    %v2315 = vcombine.low %v2296, %v2312
    %v2316 = vcombine.high %v2296, %v2312
    %v2318 = vsel %vm209, %v2224, 0
    %2320 = vmatprep.subr.mxu0 0.0
    %2321 = vmatpush1.msra.mxu0 %v2313
    %2322 = vmatprep.subr.mxu0 0.0
    %2323 = vmatpush1.msra.mxu0 0.0
    %2324 = vmatprep.subr.mxu0 0.0
    %2325 = vmatpush1.msra.mxu0 0.0
    %2326 = vmatprep.subr.mxu0 0.0
    %2327 = vmatpush1.msra.mxu0 0.0
    %2328 = vmatprep.subr.mxu0 0.0
    %2329 = vmatpush1.msra.mxu0 0.0
    %2330 = vmatprep.subr.mxu0 0.0
    %2331 = vmatpush1.msra.mxu0 0.0
    %2332 = vmatprep.subr.mxu0 0.0
    %2333 = vmatpush1.msra.mxu0 0.0
    %2334 = vmatprep.subr.mxu0 0.0
    %2335 = vmatpush1.msra.mxu0 0.0
    %2336 = vmatprep.subr.mxu0 0.0
    %2337 = vmatpush1.msra.mxu0 0.0
    %2338 = vmatprep.subr.mxu0 0.0
    %2339 = vmatpush1.msra.mxu0 0.0
    %2340 = vmatprep.subr.mxu0 0.0
    %2341 = vmatpush1.msra.mxu0 0.0
    %2342 = vmatprep.subr.mxu0 0.0
    %2343 = vmatpush1.msra.mxu0 0.0
    %2344 = vmatprep.subr.mxu0 0.0
    %2345 = vmatpush1.msra.mxu0 0.0
    %2346 = vmatprep.subr.mxu0 0.0
    %2347 = vmatpush1.msra.mxu0 0.0
    %2348 = vmatprep.subr.mxu0 0.0
    %2349 = vmatpush1.msra.mxu0 0.0
    %2350 = vmatprep.subr.mxu0 0.0
    %2351 = vmatpush1.msra.mxu0 0.0
    %2352 = vmatprep.subr.mxu0 0.0
    %2353 = vmatpush1.msra.mxu0 0.0
    %2354 = vmatprep.subr.mxu0 0.0
    %2355 = vmatpush1.msra.mxu0 0.0
    %2356 = vmatprep.subr.mxu0 0.0
    %2357 = vmatpush1.msra.mxu0 0.0
    %2358 = vmatprep.subr.mxu0 0.0
    %2359 = vmatpush1.msra.mxu0 0.0
    %2360 = vmatprep.subr.mxu0 0.0
    %2361 = vmatpush1.msra.mxu0 0.0
    %2362 = vmatprep.subr.mxu0 0.0
    %2363 = vmatpush1.msra.mxu0 0.0
    %2364 = vmatprep.subr.mxu0 0.0
    %2365 = vmatpush1.msra.mxu0 0.0
    %2366 = vmatprep.subr.mxu0 0.0
    %2367 = vmatpush1.msra.mxu0 0.0
    %2368 = vmatprep.subr.mxu0 0.0
    %2369 = vmatpush1.msra.mxu0 0.0
    %2370 = vmatprep.subr.mxu0 0.0
    %2371 = vmatpush1.msra.mxu0 0.0
    %2372 = vmatprep.subr.mxu0 0.0
    %2373 = vmatpush1.msra.mxu0 0.0
    %2374 = vmatprep.subr.mxu0 0.0
    %2375 = vmatpush1.msra.mxu0 0.0
    %2376 = vmatprep.subr.mxu0 0.0
    %2377 = vmatpush1.msra.mxu0 0.0
    %2378 = vmatprep.subr.mxu0 0.0
    %2379 = vmatpush1.msra.mxu0 0.0
    %2380 = vmatprep.subr.mxu0 0.0
    %2381 = vmatpush1.msra.mxu0 0.0
    %2382 = vmatprep.subr.mxu0 0.0
    %2383 = vmatpush1.msra.mxu0 0.0
    %2384 = vmatprep.mubr.f32.mxu0 0.0
    %2385 = vmatmul.mubr.f32.gmra.mrb[0].mxu0 %v2318
    %v2386 = vpop.f32.mrb[0].mxu0
    %v2387 = vadd.f32 0.0, %v2386
    %v2388 = vpop.f32.mrb[0].mxu0
    %2389 = vdwg.mxu0
    %v2391 = vsel %vm209, %v2225, 0
    %2393 = vmatprep.subr.mxu0 0.0
    %2394 = vmatpush1.msra.mxu0 %v2314
    %2395 = vmatprep.subr.mxu0 0.0
    %2396 = vmatpush1.msra.mxu0 0.0
    %2397 = vmatprep.subr.mxu0 0.0
    %2398 = vmatpush1.msra.mxu0 0.0
    %2399 = vmatprep.subr.mxu0 0.0
    %2400 = vmatpush1.msra.mxu0 0.0
    %2401 = vmatprep.subr.mxu0 0.0
    %2402 = vmatpush1.msra.mxu0 0.0
    %2403 = vmatprep.subr.mxu0 0.0
    %2404 = vmatpush1.msra.mxu0 0.0
    %2405 = vmatprep.subr.mxu0 0.0
    %2406 = vmatpush1.msra.mxu0 0.0
    %2407 = vmatprep.subr.mxu0 0.0
    %2408 = vmatpush1.msra.mxu0 0.0
    %2409 = vmatprep.subr.mxu0 0.0
    %2410 = vmatpush1.msra.mxu0 0.0
    %2411 = vmatprep.subr.mxu0 0.0
    %2412 = vmatpush1.msra.mxu0 0.0
    %2413 = vmatprep.subr.mxu0 0.0
    %2414 = vmatpush1.msra.mxu0 0.0
    %2415 = vmatprep.subr.mxu0 0.0
    %2416 = vmatpush1.msra.mxu0 0.0
    %2417 = vmatprep.subr.mxu0 0.0
    %2418 = vmatpush1.msra.mxu0 0.0
    %2419 = vmatprep.subr.mxu0 0.0
    %2420 = vmatpush1.msra.mxu0 0.0
    %2421 = vmatprep.subr.mxu0 0.0
    %2422 = vmatpush1.msra.mxu0 0.0
    %2423 = vmatprep.subr.mxu0 0.0
    %2424 = vmatpush1.msra.mxu0 0.0
    %2425 = vmatprep.subr.mxu0 0.0
    %2426 = vmatpush1.msra.mxu0 0.0
    %2427 = vmatprep.subr.mxu0 0.0
    %2428 = vmatpush1.msra.mxu0 0.0
    %2429 = vmatprep.subr.mxu0 0.0
    %2430 = vmatpush1.msra.mxu0 0.0
    %2431 = vmatprep.subr.mxu0 0.0
    %2432 = vmatpush1.msra.mxu0 0.0
    %2433 = vmatprep.subr.mxu0 0.0
    %2434 = vmatpush1.msra.mxu0 0.0
    %2435 = vmatprep.subr.mxu0 0.0
    %2436 = vmatpush1.msra.mxu0 0.0
    %2437 = vmatprep.subr.mxu0 0.0
    %2438 = vmatpush1.msra.mxu0 0.0
    %2439 = vmatprep.subr.mxu0 0.0
    %2440 = vmatpush1.msra.mxu0 0.0
    %2441 = vmatprep.subr.mxu0 0.0
    %2442 = vmatpush1.msra.mxu0 0.0
    %2443 = vmatprep.subr.mxu0 0.0
    %2444 = vmatpush1.msra.mxu0 0.0
    %2445 = vmatprep.subr.mxu0 0.0
    %2446 = vmatpush1.msra.mxu0 0.0
    %2447 = vmatprep.subr.mxu0 0.0
    %2448 = vmatpush1.msra.mxu0 0.0
    %2449 = vmatprep.subr.mxu0 0.0
    %2450 = vmatpush1.msra.mxu0 0.0
    %2451 = vmatprep.subr.mxu0 0.0
    %2452 = vmatpush1.msra.mxu0 0.0
    %2453 = vmatprep.subr.mxu0 0.0
    %2454 = vmatpush1.msra.mxu0 0.0
    %2455 = vmatprep.subr.mxu0 0.0
    %2456 = vmatpush1.msra.mxu0 0.0
    %2457 = vmatprep.mubr.f32.mxu0 0.0
    %2458 = vmatmul.mubr.f32.gmra.mrb[0].mxu0 %v2391
    %v2459 = vpop.f32.mrb[0].mxu0
    %v2460 = vadd.f32 0.0, %v2459
    %v2461 = vpop.f32.mrb[0].mxu0
    %2462 = vdwg.mxu0
    %v2464 = vsel %vm209, %v2226, 0
    %2466 = vmatprep.subr.mxu0 0.0
    %2467 = vmatpush1.msra.mxu0 %v2315
    %2468 = vmatprep.subr.mxu0 0.0
    %2469 = vmatpush1.msra.mxu0 0.0
    %2470 = vmatprep.subr.mxu0 0.0
    %2471 = vmatpush1.msra.mxu0 0.0
    %2472 = vmatprep.subr.mxu0 0.0
    %2473 = vmatpush1.msra.mxu0 0.0
    %2474 = vmatprep.subr.mxu0 0.0
    %2475 = vmatpush1.msra.mxu0 0.0
    %2476 = vmatprep.subr.mxu0 0.0
    %2477 = vmatpush1.msra.mxu0 0.0
    %2478 = vmatprep.subr.mxu0 0.0
    %2479 = vmatpush1.msra.mxu0 0.0
    %2480 = vmatprep.subr.mxu0 0.0
    %2481 = vmatpush1.msra.mxu0 0.0
    %2482 = vmatprep.subr.mxu0 0.0
    %2483 = vmatpush1.msra.mxu0 0.0
    %2484 = vmatprep.subr.mxu0 0.0
    %2485 = vmatpush1.msra.mxu0 0.0
    %2486 = vmatprep.subr.mxu0 0.0
    %2487 = vmatpush1.msra.mxu0 0.0
    %2488 = vmatprep.subr.mxu0 0.0
    %2489 = vmatpush1.msra.mxu0 0.0
    %2490 = vmatprep.subr.mxu0 0.0
    %2491 = vmatpush1.msra.mxu0 0.0
    %2492 = vmatprep.subr.mxu0 0.0
    %2493 = vmatpush1.msra.mxu0 0.0
    %2494 = vmatprep.subr.mxu0 0.0
    %2495 = vmatpush1.msra.mxu0 0.0
    %2496 = vmatprep.subr.mxu0 0.0
    %2497 = vmatpush1.msra.mxu0 0.0
    %2498 = vmatprep.subr.mxu0 0.0
    %2499 = vmatpush1.msra.mxu0 0.0
    %2500 = vmatprep.subr.mxu0 0.0
    %2501 = vmatpush1.msra.mxu0 0.0
    %2502 = vmatprep.subr.mxu0 0.0
    %2503 = vmatpush1.msra.mxu0 0.0
    %2504 = vmatprep.subr.mxu0 0.0
    %2505 = vmatpush1.msra.mxu0 0.0
    %2506 = vmatprep.subr.mxu0 0.0
    %2507 = vmatpush1.msra.mxu0 0.0
    %2508 = vmatprep.subr.mxu0 0.0
    %2509 = vmatpush1.msra.mxu0 0.0
    %2510 = vmatprep.subr.mxu0 0.0
    %2511 = vmatpush1.msra.mxu0 0.0
    %2512 = vmatprep.subr.mxu0 0.0
    %2513 = vmatpush1.msra.mxu0 0.0
    %2514 = vmatprep.subr.mxu0 0.0
    %2515 = vmatpush1.msra.mxu0 0.0
    %2516 = vmatprep.subr.mxu0 0.0
    %2517 = vmatpush1.msra.mxu0 0.0
    %2518 = vmatprep.subr.mxu0 0.0
    %2519 = vmatpush1.msra.mxu0 0.0
    %2520 = vmatprep.subr.mxu0 0.0
    %2521 = vmatpush1.msra.mxu0 0.0
    %2522 = vmatprep.subr.mxu0 0.0
    %2523 = vmatpush1.msra.mxu0 0.0
    %2524 = vmatprep.subr.mxu0 0.0
    %2525 = vmatpush1.msra.mxu0 0.0
    %2526 = vmatprep.subr.mxu0 0.0
    %2527 = vmatpush1.msra.mxu0 0.0
    %2528 = vmatprep.subr.mxu0 0.0
    %2529 = vmatpush1.msra.mxu0 0.0
    %2530 = vmatprep.mubr.f32.mxu0 0.0
    %2531 = vmatmul.mubr.f32.gmra.mrb[0].mxu0 %v2464
    %v2532 = vpop.f32.mrb[0].mxu0
    %v2533 = vadd.f32 0.0, %v2532
    %v2534 = vpop.f32.mrb[0].mxu0
    %2535 = vdwg.mxu0
    %v2537 = vsel %vm209, %v2227, 0
    %2539 = vmatprep.subr.mxu0 0.0
    %2540 = vmatpush1.msra.mxu0 %v2316
    %2541 = vmatprep.subr.mxu0 0.0
    %2542 = vmatpush1.msra.mxu0 0.0
    %2543 = vmatprep.subr.mxu0 0.0
    %2544 = vmatpush1.msra.mxu0 0.0
    %2545 = vmatprep.subr.mxu0 0.0
    %2546 = vmatpush1.msra.mxu0 0.0
    %2547 = vmatprep.subr.mxu0 0.0
    %2548 = vmatpush1.msra.mxu0 0.0
    %2549 = vmatprep.subr.mxu0 0.0
    %2550 = vmatpush1.msra.mxu0 0.0
    %2551 = vmatprep.subr.mxu0 0.0
    %2552 = vmatpush1.msra.mxu0 0.0
    %2553 = vmatprep.subr.mxu0 0.0
    %2554 = vmatpush1.msra.mxu0 0.0
    %2555 = vmatprep.subr.mxu0 0.0
    %2556 = vmatpush1.msra.mxu0 0.0
    %2557 = vmatprep.subr.mxu0 0.0
    %2558 = vmatpush1.msra.mxu0 0.0
    %2559 = vmatprep.subr.mxu0 0.0
    %2560 = vmatpush1.msra.mxu0 0.0
    %2561 = vmatprep.subr.mxu0 0.0
    %2562 = vmatpush1.msra.mxu0 0.0
    %2563 = vmatprep.subr.mxu0 0.0
    %2564 = vmatpush1.msra.mxu0 0.0
    %2565 = vmatprep.subr.mxu0 0.0
    %2566 = vmatpush1.msra.mxu0 0.0
    %2567 = vmatprep.subr.mxu0 0.0
    %2568 = vmatpush1.msra.mxu0 0.0
    %2569 = vmatprep.subr.mxu0 0.0
    %2570 = vmatpush1.msra.mxu0 0.0
    %2571 = vmatprep.subr.mxu0 0.0
    %2572 = vmatpush1.msra.mxu0 0.0
    %2573 = vmatprep.subr.mxu0 0.0
    %2574 = vmatpush1.msra.mxu0 0.0
    %2575 = vmatprep.subr.mxu0 0.0
    %2576 = vmatpush1.msra.mxu0 0.0
    %2577 = vmatprep.subr.mxu0 0.0
    %2578 = vmatpush1.msra.mxu0 0.0
    %2579 = vmatprep.subr.mxu0 0.0
    %2580 = vmatpush1.msra.mxu0 0.0
    %2581 = vmatprep.subr.mxu0 0.0
    %2582 = vmatpush1.msra.mxu0 0.0
    %2583 = vmatprep.subr.mxu0 0.0
    %2584 = vmatpush1.msra.mxu0 0.0
    %2585 = vmatprep.subr.mxu0 0.0
    %2586 = vmatpush1.msra.mxu0 0.0
    %2587 = vmatprep.subr.mxu0 0.0
    %2588 = vmatpush1.msra.mxu0 0.0
    %2589 = vmatprep.subr.mxu0 0.0
    %2590 = vmatpush1.msra.mxu0 0.0
    %2591 = vmatprep.subr.mxu0 0.0
    %2592 = vmatpush1.msra.mxu0 0.0
    %2593 = vmatprep.subr.mxu0 0.0
    %2594 = vmatpush1.msra.mxu0 0.0
    %2595 = vmatprep.subr.mxu0 0.0
    %2596 = vmatpush1.msra.mxu0 0.0
    %2597 = vmatprep.subr.mxu0 0.0
    %2598 = vmatpush1.msra.mxu0 0.0
    %2599 = vmatprep.subr.mxu0 0.0
    %2600 = vmatpush1.msra.mxu0 0.0
    %2601 = vmatprep.subr.mxu0 0.0
    %2602 = vmatpush1.msra.mxu0 0.0
    %2603 = vmatprep.mubr.f32.mxu0 0.0
    %2604 = vmatmul.mubr.f32.gmra.mrb[0].mxu0 %v2537
    %v2605 = vpop.f32.mrb[0].mxu0
    %v2606 = vadd.f32 0.0, %v2605
    %v2607 = vpop.f32.mrb[0].mxu0
    %2608 = vdwg.mxu0
    %v2609 = vcombine.low %v2387, %v2533
    %v2610 = vcombine.high %v2387, %v2533
    %v2612 = vunpack.c.l.s4 1983009808
    %v2613 = vunpack.c.0.s8 %v2612
    %v2614 = vlaneseq
    %v2615 = vshrl.u32 %v2614, 7
    %v2616 = vsub.s32 %v2613, %v2615
    %v2617 = vrot.slane %v2609, %v2616
    %v2619 = vunpack.c.l.s4 1983009808
    %v2620 = vunpack.c.0.s8 %v2619
    %v2621 = vlaneseq
    %v2622 = vshrl.u32 %v2621, 7
    %v2623 = vsub.s32 %v2620, %v2622
    %v2624 = vrot.slane %v2610, %v2623
    %v2625 = vcombine.low %v2460, %v2606
    %v2626 = vcombine.high %v2460, %v2606
    %v2628 = vunpack.c.l.s4 1983009808
    %v2629 = vunpack.c.0.s8 %v2628
    %v2630 = vlaneseq
    %v2631 = vshrl.u32 %v2630, 7
    %v2632 = vsub.s32 %v2629, %v2631
    %v2633 = vrot.slane %v2625, %v2632
    %v2635 = vunpack.c.l.s4 1983009808
    %v2636 = vunpack.c.0.s8 %v2635
    %v2637 = vlaneseq
    %v2638 = vshrl.u32 %v2637, 7
    %v2639 = vsub.s32 %v2636, %v2638
    %v2640 = vrot.slane %v2626, %v2639
    %v2641 = vcombine.low %v2617, %v2633
    %v2642 = vcombine.high %v2617, %v2633
    %v2644 = vunpack.c.l.s4 1934713408
    %v2645 = vunpack.c.0.s8 %v2644
    %v2646 = vlaneseq
    %v2647 = vshrl.u32 %v2646, 7
    %v2648 = vsub.s32 %v2645, %v2647
    %v2649 = vrot.slane %v2641, %v2648
    %v2651 = vunpack.c.l.s4 1934713408
    %v2652 = vunpack.c.0.s8 %v2651
    %v2653 = vlaneseq
    %v2654 = vshrl.u32 %v2653, 7
    %v2655 = vsub.s32 %v2652, %v2654
    %v2656 = vrot.slane %v2642, %v2655
    %v2657 = vcombine.low %v2624, %v2640
    %v2658 = vcombine.high %v2624, %v2640
    %v2660 = vunpack.c.l.s4 1934713408
    %v2661 = vunpack.c.0.s8 %v2660
    %v2662 = vlaneseq
    %v2663 = vshrl.u32 %v2662, 7
    %v2664 = vsub.s32 %v2661, %v2663
    %v2665 = vrot.slane %v2657, %v2664
    %v2667 = vunpack.c.l.s4 1934713408
    %v2668 = vunpack.c.0.s8 %v2667
    %v2669 = vlaneseq
    %v2670 = vshrl.u32 %v2669, 7
    %v2671 = vsub.s32 %v2668, %v2670
    %v2672 = vrot.slane %v2658, %v2671
    %v2673 = vcombine.high %v2649, 0.0
    %v2674 = vcombine.high %v2656, 0.0
    %v2675 = vcombine.high %v2665, 0.0
    %v2676 = vcombine.high %v2672, 0.0
    %2678 = vrot.lane.b32.xlu0 %v2673, 16
    %v2679 = vpop.permute.xlu0 %2678
    %2682 = vrot.lane.b32.xlu0 %v2656, 32
    %v2683 = vpop.permute.xlu0 %2682
    %2686 = vrot.lane.b32.xlu0 %v2674, 48
    %v2687 = vpop.permute.xlu0 %2686
    %2690 = vrot.lane.b32.xlu0 %v2665, 64
    %v2691 = vpop.permute.xlu0 %2690
    %2694 = vrot.lane.b32.xlu0 %v2675, 80
    %v2695 = vpop.permute.xlu0 %2694
    %2698 = vrot.lane.b32.xlu0 %v2672, 96
    %v2699 = vpop.permute.xlu0 %2698
    %2702 = vrot.lane.b32.xlu0 %v2676, 112
    %v2703 = vpop.permute.xlu0 %2702
    %v2705 = vsel %vm144, %v2649, %v2679
    %vm2706 = vcmask 261120
    %v2707 = vsel %vm2706, %v2705, %v2683
    %vm2708 = vcmask 392192
    %v2709 = vsel %vm2708, %v2707, %v2687
    %vm2710 = vcmask 523264
    %v2711 = vsel %vm2710, %v2709, %v2691
    %vm2712 = vcmask 654336
    %v2713 = vsel %vm2712, %v2711, %v2695
    %vm2714 = vcmask 785408
    %v2715 = vsel %vm2714, %v2713, %v2699
    %vm2716 = vcmask 916480
    %v2717 = vsel %vm2716, %v2715, %v2703
    %v2718 = vld [vmem:[#allocation10 + $0x40] sm:$0xf]
    %v2719 = vld [vmem:[#allocation10 + $0x44] sm:$0xf]
    %v2720 = vld [vmem:[#allocation10 + $0x48] sm:$0xf]
    %v2721 = vld [vmem:[#allocation10 + $0x4c] sm:$0xf]
    %v2722 = vld [vmem:[#allocation10 + $0x50] sm:$0xf]
    %v2723 = vld [vmem:[#allocation10 + $0x54] sm:$0xf]
    %v2724 = vld [vmem:[#allocation10 + $0x58] sm:$0xf]
    %v2725 = vld [vmem:[#allocation10 + $0x5c] sm:$0xf]
    %v2726 = vld [vmem:[#allocation10 + $0x60] sm:$0xf]
    %v2727 = vld [vmem:[#allocation10 + $0x64] sm:$0xf]
    %v2728 = vld [vmem:[#allocation10 + $0x68] sm:$0xf]
    %v2729 = vld [vmem:[#allocation10 + $0x6c] sm:$0xf]
    %v2730 = vld [vmem:[#allocation10 + $0x70] sm:$0xf]
    %v2731 = vld [vmem:[#allocation10 + $0x74] sm:$0xf]
    %v2732 = vld [vmem:[#allocation10 + $0x78] sm:$0xf]
    %v2733 = vld [vmem:[#allocation10 + $0x7c] sm:$0xf]
    %v2734 = vpack.c.bf16 %v2717, %v2717
    %v2751 = vunpack.c.l.b16 %v2718
    %v2752 = vunpack.c.l.b16 %v2719
    %v2753 = vunpack.c.l.b16 %v2720
    %v2754 = vunpack.c.l.b16 %v2721
    %v2755 = vunpack.c.l.b16 %v2722
    %v2756 = vunpack.c.l.b16 %v2723
    %v2757 = vunpack.c.l.b16 %v2724
    %v2758 = vunpack.c.l.b16 %v2725
    %v2759 = vunpack.c.l.b16 %v2726
    %v2760 = vunpack.c.l.b16 %v2727
    %v2761 = vunpack.c.l.b16 %v2728
    %v2762 = vunpack.c.l.b16 %v2729
    %v2763 = vunpack.c.l.b16 %v2730
    %v2764 = vunpack.c.l.b16 %v2731
    %v2765 = vunpack.c.l.b16 %v2732
    %v2766 = vunpack.c.l.b16 %v2733
    %v2767 = vpack.c.b16 %v2752, %v2751
    %v2768 = vpack.c.b16 %v2754, %v2753
    %v2769 = vpack.c.b16 %v2756, %v2755
    %v2770 = vpack.c.b16 %v2758, %v2757
    %v2771 = vpack.c.b16 %v2760, %v2759
    %v2772 = vpack.c.b16 %v2762, %v2761
    %v2773 = vpack.c.b16 %v2764, %v2763
    %v2774 = vpack.c.b16 %v2766, %v2765
    %2783 = vmatprep.subr.bf16.mxu0 0
    %2784 = vmatpush1.bf16.msra.mxu0 %v2767
    %2785 = vmatprep.subr.bf16.mxu0 0
    %2786 = vmatpush1.bf16.msra.mxu0 %v2768
    %2787 = vmatprep.subr.bf16.mxu0 0
    %2788 = vmatpush1.bf16.msra.mxu0 %v2769
    %2789 = vmatprep.subr.bf16.mxu0 0
    %2790 = vmatpush1.bf16.msra.mxu0 %v2770
    %2791 = vmatprep.subr.bf16.mxu0 0
    %2792 = vmatpush1.bf16.msra.mxu0 %v2771
    %2793 = vmatprep.subr.bf16.mxu0 0
    %2794 = vmatpush1.bf16.msra.mxu0 %v2772
    %2795 = vmatprep.subr.bf16.mxu0 0
    %2796 = vmatpush1.bf16.msra.mxu0 %v2773
    %2797 = vmatprep.subr.bf16.mxu0 0
    %2798 = vmatpush1.bf16.msra.mxu0 %v2774
    %2799 = vmatprep.subr.bf16.mxu0 0
    %2800 = vmatpush1.bf16.msra.mxu0 0
    %2801 = vmatprep.subr.bf16.mxu0 0
    %2802 = vmatpush1.bf16.msra.mxu0 0
    %2803 = vmatprep.subr.bf16.mxu0 0
    %2804 = vmatpush1.bf16.msra.mxu0 0
    %2805 = vmatprep.subr.bf16.mxu0 0
    %2806 = vmatpush1.bf16.msra.mxu0 0
    %2807 = vmatprep.subr.bf16.mxu0 0
    %2808 = vmatpush1.bf16.msra.mxu0 0
    %2809 = vmatprep.subr.bf16.mxu0 0
    %2810 = vmatpush1.bf16.msra.mxu0 0
    %2811 = vmatprep.subr.bf16.mxu0 0
    %2812 = vmatpush1.bf16.msra.mxu0 0
    %2813 = vmatprep.subr.bf16.mxu0 0
    %2814 = vmatpush1.bf16.msra.mxu0 0
    %2815 = vmatprep.mubr.bf16.mxu0 0
    %2816 = vmatmul.mubr.bf16.gmra.mrb[0].mxu0 %v2734
    %v2817 = vpop.f32.mrb[0].mxu0
    %v2818 = vadd.f32 0.0, %v2817
    %v2819 = vpop.f32.mrb[0].mxu0
    %v2820 = vpop.f32.mrb[0].mxu0
    %v2821 = vpop.f32.mrb[0].mxu0
    %2822 = vdwg.mxu0
    %v2823 = vsel %vm213, %v2818, 0.0
    %v2824 = vrot.slane %v2823, 4
    %v2825 = vadd.f32 %v2823, %v2824
    %v2826 = vrot.slane %v2825, 2
    %v2827 = vadd.f32 %v2825, %v2826
    %v2828 = vrot.slane %v2827, 1
    %v2829 = vadd.f32 %v2827, %v2828
    %v2830 = vmul.f32 %v2829, %v444
    %v2831 = vmul.f32 %v2818, %v2818
    %v2832 = vsel %vm213, %v2831, 0.0
    %v2833 = vrot.slane %v2832, 4
    %v2834 = vadd.f32 %v2832, %v2833
    %v2835 = vrot.slane %v2834, 2
    %v2836 = vadd.f32 %v2834, %v2835
    %v2837 = vrot.slane %v2836, 1
    %v2838 = vadd.f32 %v2836, %v2837
    %v2839 = vmul.f32 %v2838, %v444
    %v2840 = vsel %vm455, %v2830, %v2839
    %2841 = vmatprep.subr.mxu0 0.0
    %2842 = vmatpush1.msra.mxu0 %v117
    %2843 = vmatprep.subr.mxu0 0.0
    %2844 = vmatpush1.msra.mxu0 %v118
    %2845 = vmatprep.subr.mxu0 0.0
    %2846 = vmatpush1.msra.mxu0 %v119
    %2847 = vmatprep.subr.mxu0 0.0
    %2848 = vmatpush1.msra.mxu0 %v120
    %2849 = vmatprep.subr.mxu0 0.0
    %2850 = vmatpush1.msra.mxu0 %v121
    %2851 = vmatprep.subr.mxu0 0.0
    %2852 = vmatpush1.msra.mxu0 %v122
    %2853 = vmatprep.subr.mxu0 0.0
    %2854 = vmatpush1.msra.mxu0 %v123
    %2855 = vmatprep.subr.mxu0 0.0
    %2856 = vmatpush1.msra.mxu0 %v124
    %2857 = vmatprep.subr.mxu0 0.0
    %2858 = vmatpush1.msra.mxu0 %v125
    %2859 = vmatprep.subr.mxu0 0.0
    %2860 = vmatpush1.msra.mxu0 %v126
    %2861 = vmatprep.subr.mxu0 0.0
    %2862 = vmatpush1.msra.mxu0 %v127
    %2863 = vmatprep.subr.mxu0 0.0
    %2864 = vmatpush1.msra.mxu0 %v128
    %2865 = vmatprep.subr.mxu0 0.0
    %2866 = vmatpush1.msra.mxu0 %v129
    %2867 = vmatprep.subr.mxu0 0.0
    %2868 = vmatpush1.msra.mxu0 %v130
    %2869 = vmatprep.subr.mxu0 0.0
    %2870 = vmatpush1.msra.mxu0 %v131
    %2871 = vmatprep.subr.mxu0 0.0
    %2872 = vmatpush1.msra.mxu0 %v132
    %2873 = vmatprep.subr.mxu0 0.0
    %2874 = vmatpush1.msra.mxu0 0.0
    %2875 = vmatprep.subr.mxu0 0.0
    %2876 = vmatpush1.msra.mxu0 0.0
    %2877 = vmatprep.subr.mxu0 0.0
    %2878 = vmatpush1.msra.mxu0 0.0
    %2879 = vmatprep.subr.mxu0 0.0
    %2880 = vmatpush1.msra.mxu0 0.0
    %2881 = vmatprep.subr.mxu0 0.0
    %2882 = vmatpush1.msra.mxu0 0.0
    %2883 = vmatprep.subr.mxu0 0.0
    %2884 = vmatpush1.msra.mxu0 0.0
    %2885 = vmatprep.subr.mxu0 0.0
    %2886 = vmatpush1.msra.mxu0 0.0
    %2887 = vmatprep.subr.mxu0 0.0
    %2888 = vmatpush1.msra.mxu0 0.0
    %2889 = vmatprep.subr.mxu0 0.0
    %2890 = vmatpush1.msra.mxu0 0.0
    %2891 = vmatprep.subr.mxu0 0.0
    %2892 = vmatpush1.msra.mxu0 0.0
    %2893 = vmatprep.subr.mxu0 0.0
    %2894 = vmatpush1.msra.mxu0 0.0
    %2895 = vmatprep.subr.mxu0 0.0
    %2896 = vmatpush1.msra.mxu0 0.0
    %2897 = vmatprep.subr.mxu0 0.0
    %2898 = vmatpush1.msra.mxu0 0.0
    %2899 = vmatprep.subr.mxu0 0.0
    %2900 = vmatpush1.msra.mxu0 0.0
    %2901 = vmatprep.subr.mxu0 0.0
    %2902 = vmatpush1.msra.mxu0 0.0
    %2903 = vmatprep.subr.mxu0 0.0
    %2904 = vmatpush1.msra.mxu0 0.0
    %2905 = vmatprep.mubr.f32.mxu0 0.0
    %2906 = vmatmul.mubr.f32.gmra.mrb[0].mxu0 %v2840
    %v2907 = vpop.f32.mrb[0].mxu0
    %v2908 = vadd.f32 0.0, %v2907
    %v2909 = vpop.f32.mrb[0].mxu0
    %2910 = vdwg.mxu0
    %v2911 = vmul.f32 %v2908, %v2908
    %v2913 = vrot.slane %v2911, 7
    %v2915 = vsub.f32 %v2908, %v2913
    %v2916 = vmax.f32 %v2915, 0.0
    %v2917 = vlaneseq
    %v2918 = vshrl.u32 %v2917, 7
    %v2919 = vsub.s32 0, %v2918
    %v2920 = vrot.slane %v2908, %v2919
    %v2921 = vsub.f32 %v2818, %v2920
    %v2922 = vadd.f32 %v2916, 1e-05
    %v2923 = vrsqrt.pop %v2922
    %v2924 = vlaneseq
    %v2925 = vshrl.u32 %v2924, 7
    %v2926 = vsub.s32 1, %v2925
    %v2927 = vrot.slane %v2923, %v2926
    %v2928 = vmul.f32 %v2921, %v2927
    %v2929 = vld [vmem:[#allocation2 + $0x20] ss:$0 sm:$0xff]
    %v2930 = vmul.f32 %v2928, %v2929
    %v2931 = vld [vmem:[#allocation2 + $0x21] ss:$0 sm:$0xff]
    %v2932 = vadd.f32 %v2930, %v2931
    %v2933 = vmax.f32 %v2932, 0.0
    %v2934 = vld [vmem:[%s2 + $0x4] sm:$0xf]
    %v2935 = vmul.f32 %v2933, %v2934
    %v2936 = vld [vmem:[%s12] sm:$0xf]
    %v2937 = vld [vmem:[%s12 + $0x4] sm:$0xf]
    %v2938 = vld [vmem:[%s12 + $0x8] sm:$0xf]
    %v2939 = vld [vmem:[%s12 + $0xc] sm:$0xf]
    %v2940 = vld [vmem:[%s12 + $0x10] sm:$0xf]
    %v2941 = vld [vmem:[%s12 + $0x14] sm:$0xf]
    %v2942 = vld [vmem:[%s12 + $0x18] sm:$0xf]
    %v2943 = vld [vmem:[%s12 + $0x1c] sm:$0xf]
    %v2944 = vld [vmem:[%s12 + $0x20] sm:$0xf]
    %v2945 = vld [vmem:[%s12 + $0x24] sm:$0xf]
    %v2946 = vld [vmem:[%s12 + $0x28] sm:$0xf]
    %v2947 = vld [vmem:[%s12 + $0x2c] sm:$0xf]
    %v2948 = vld [vmem:[%s12 + $0x30] sm:$0xf]
    %v2949 = vld [vmem:[%s12 + $0x34] sm:$0xf]
    %v2950 = vld [vmem:[%s12 + $0x38] sm:$0xf]
    %v2951 = vld [vmem:[%s12 + $0x3c] sm:$0xf]
    %v2952 = vld [vmem:[%s12 + $0x40] sm:$0xf]
    %v2953 = vld [vmem:[%s12 + $0x44] sm:$0xf]
    %v2954 = vld [vmem:[%s12 + $0x48] sm:$0xf]
    %v2955 = vld [vmem:[%s12 + $0x4c] sm:$0xf]
    %v2956 = vld [vmem:[%s12 + $0x50] sm:$0xf]
    %v2957 = vld [vmem:[%s12 + $0x54] sm:$0xf]
    %v2958 = vld [vmem:[%s12 + $0x58] sm:$0xf]
    %v2959 = vld [vmem:[%s12 + $0x5c] sm:$0xf]
    %v2960 = vld [vmem:[%s12 + $0x60] sm:$0xf]
    %v2961 = vld [vmem:[%s12 + $0x64] sm:$0xf]
    %v2962 = vld [vmem:[%s12 + $0x68] sm:$0xf]
    %v2963 = vld [vmem:[%s12 + $0x6c] sm:$0xf]
    %v2964 = vld [vmem:[%s12 + $0x70] sm:$0xf]
    %v2965 = vld [vmem:[%s12 + $0x74] sm:$0xf]
    %v2966 = vld [vmem:[%s12 + $0x78] sm:$0xf]
    %v2967 = vld [vmem:[%s12 + $0x7c] sm:$0xf]
    %v2968 = vpack.c.bf16 %v1854, %v1854
    %v2969 = vpack.c.bf16 %v2935, %v2935
    %v2970 = vld [vmem:[#allocation2 + $0x24] ss:$0 sm:$0xff]
    %v3003 = vunpack.c.l.b16 %v2936
    %v3004 = vunpack.c.l.b16 %v2937
    %v3005 = vunpack.c.l.b16 %v2938
    %v3006 = vunpack.c.l.b16 %v2939
    %v3007 = vunpack.c.l.b16 %v2940
    %v3008 = vunpack.c.l.b16 %v2941
    %v3009 = vunpack.c.l.b16 %v2942
    %v3010 = vunpack.c.l.b16 %v2943
    %v3011 = vunpack.c.l.b16 %v2944
    %v3012 = vunpack.c.l.b16 %v2945
    %v3013 = vunpack.c.l.b16 %v2946
    %v3014 = vunpack.c.l.b16 %v2947
    %v3015 = vunpack.c.l.b16 %v2948
    %v3016 = vunpack.c.l.b16 %v2949
    %v3017 = vunpack.c.l.b16 %v2950
    %v3018 = vunpack.c.l.b16 %v2951
    %v3019 = vunpack.c.l.b16 %v2952
    %v3020 = vunpack.c.l.b16 %v2953
    %v3021 = vunpack.c.l.b16 %v2954
    %v3022 = vunpack.c.l.b16 %v2955
    %v3023 = vunpack.c.l.b16 %v2956
    %v3024 = vunpack.c.l.b16 %v2957
    %v3025 = vunpack.c.l.b16 %v2958
    %v3026 = vunpack.c.l.b16 %v2959
    %v3027 = vunpack.c.l.b16 %v2960
    %v3028 = vunpack.c.l.b16 %v2961
    %v3029 = vunpack.c.l.b16 %v2962
    %v3030 = vunpack.c.l.b16 %v2963
    %v3031 = vunpack.c.l.b16 %v2964
    %v3032 = vunpack.c.l.b16 %v2965
    %v3033 = vunpack.c.l.b16 %v2966
    %v3034 = vunpack.c.l.b16 %v2967
    %v3035 = vpack.c.b16 %v3004, %v3003
    %v3036 = vpack.c.b16 %v3006, %v3005
    %v3037 = vpack.c.b16 %v3008, %v3007
    %v3038 = vpack.c.b16 %v3010, %v3009
    %v3039 = vpack.c.b16 %v3012, %v3011
    %v3040 = vpack.c.b16 %v3014, %v3013
    %v3041 = vpack.c.b16 %v3016, %v3015
    %v3042 = vpack.c.b16 %v3018, %v3017
    %v3043 = vpack.c.b16 %v3020, %v3019
    %v3044 = vpack.c.b16 %v3022, %v3021
    %v3045 = vpack.c.b16 %v3024, %v3023
    %v3046 = vpack.c.b16 %v3026, %v3025
    %v3047 = vpack.c.b16 %v3028, %v3027
    %v3048 = vpack.c.b16 %v3030, %v3029
    %v3049 = vpack.c.b16 %v3032, %v3031
    %v3050 = vpack.c.b16 %v3034, %v3033
    %3067 = vmatprep.subr.bf16.mxu0 0
    %3068 = vmatpush1.bf16.msra.mxu0 %v3035
    %3069 = vmatprep.subr.bf16.mxu0 0
    %3070 = vmatpush1.bf16.msra.mxu0 %v3036
    %3071 = vmatprep.subr.bf16.mxu0 0
    %3072 = vmatpush1.bf16.msra.mxu0 %v3037
    %3073 = vmatprep.subr.bf16.mxu0 0
    %3074 = vmatpush1.bf16.msra.mxu0 %v3038
    %3075 = vmatprep.subr.bf16.mxu0 0
    %3076 = vmatpush1.bf16.msra.mxu0 %v3039
    %3077 = vmatprep.subr.bf16.mxu0 0
    %3078 = vmatpush1.bf16.msra.mxu0 %v3040
    %3079 = vmatprep.subr.bf16.mxu0 0
    %3080 = vmatpush1.bf16.msra.mxu0 %v3041
    %3081 = vmatprep.subr.bf16.mxu0 0
    %3082 = vmatpush1.bf16.msra.mxu0 %v3042
    %3083 = vmatprep.subr.bf16.mxu0 0
    %3084 = vmatpush1.bf16.msra.mxu0 %v3043
    %3085 = vmatprep.subr.bf16.mxu0 0
    %3086 = vmatpush1.bf16.msra.mxu0 %v3044
    %3087 = vmatprep.subr.bf16.mxu0 0
    %3088 = vmatpush1.bf16.msra.mxu0 %v3045
    %3089 = vmatprep.subr.bf16.mxu0 0
    %3090 = vmatpush1.bf16.msra.mxu0 %v3046
    %3091 = vmatprep.subr.bf16.mxu0 0
    %3092 = vmatpush1.bf16.msra.mxu0 %v3047
    %3093 = vmatprep.subr.bf16.mxu0 0
    %3094 = vmatpush1.bf16.msra.mxu0 %v3048
    %3095 = vmatprep.subr.bf16.mxu0 0
    %3096 = vmatpush1.bf16.msra.mxu0 %v3049
    %3097 = vmatprep.subr.bf16.mxu0 0
    %3098 = vmatpush1.bf16.msra.mxu0 %v3050
    %3099 = vmatprep.mubr.bf16.mxu0 %v2969
    %3100 = vmatmul.mubr.bf16.gmra.mrb[0].mxu0 %v2968
    %v3101 = vpop.f32.mrb[0].mxu0
    %v3102 = vadd.f32 %v2970, %v3101
    %v3103 = vpop.f32.mrb[0].mxu0
    %v3104 = vpop.f32.mrb[0].mxu0
    %v3105 = vpop.f32.mrb[0].mxu0
    %3106 = vdwg.mxu0
    %v3107 = vmax.f32 %v3102, 0.0
    %v3108 = vld [vmem:[%s13] sm:$0xf]
    %v3109 = vpack.c.bf16 %v3107, %v3107
    %v3110 = vld [vmem:[#allocation2 + $0x25] ss:$0 sm:$0xff]
    %v3112 = vsel %vm209, %v3109, 0
    %v3115 = vsel %vm213, %v3108, 0
    %3117 = vmatprep.subr.bf16.mxu0 0
    %3118 = vmatpush1.bf16.msra.mxu0 %v3115
    %3119 = vmatprep.subr.bf16.mxu0 0
    %3120 = vmatpush1.bf16.msra.mxu0 0
    %3121 = vmatprep.subr.bf16.mxu0 0
    %3122 = vmatpush1.bf16.msra.mxu0 0
    %3123 = vmatprep.subr.bf16.mxu0 0
    %3124 = vmatpush1.bf16.msra.mxu0 0
    %3125 = vmatprep.subr.bf16.mxu0 0
    %3126 = vmatpush1.bf16.msra.mxu0 0
    %3127 = vmatprep.subr.bf16.mxu0 0
    %3128 = vmatpush1.bf16.msra.mxu0 0
    %3129 = vmatprep.subr.bf16.mxu0 0
    %3130 = vmatpush1.bf16.msra.mxu0 0
    %3131 = vmatprep.subr.bf16.mxu0 0
    %3132 = vmatpush1.bf16.msra.mxu0 0
    %3133 = vmatprep.subr.bf16.mxu0 0
    %3134 = vmatpush1.bf16.msra.mxu0 0
    %3135 = vmatprep.subr.bf16.mxu0 0
    %3136 = vmatpush1.bf16.msra.mxu0 0
    %3137 = vmatprep.subr.bf16.mxu0 0
    %3138 = vmatpush1.bf16.msra.mxu0 0
    %3139 = vmatprep.subr.bf16.mxu0 0
    %3140 = vmatpush1.bf16.msra.mxu0 0
    %3141 = vmatprep.subr.bf16.mxu0 0
    %3142 = vmatpush1.bf16.msra.mxu0 0
    %3143 = vmatprep.subr.bf16.mxu0 0
    %3144 = vmatpush1.bf16.msra.mxu0 0
    %3145 = vmatprep.subr.bf16.mxu0 0
    %3146 = vmatpush1.bf16.msra.mxu0 0
    %3147 = vmatprep.subr.bf16.mxu0 0
    %3148 = vmatpush1.bf16.msra.mxu0 0
    %3149 = vmatprep.mubr.bf16.mxu0 0
    %3150 = vmatmul.mubr.bf16.gmra.mrb[0].mxu0 %v3112
    %v3151 = vpop.f32.mrb[0].mxu0
    %v3152 = vadd.f32 %v3110, %v3151
    %v3153 = vpop.f32.mrb[0].mxu0
    %v3154 = vpop.f32.mrb[0].mxu0
    %v3155 = vpop.f32.mrb[0].mxu0
    %3156 = vdwg.mxu0
    %vm3157 = vcmask 60416
    %3158 = vst.msk [vmem:[#allocation11] sm:$0xf] %vm3157, %v3152
    // Predicated region
    $region78: #{tpu_custom_call.1} parent=1 // pred_check
      _
    $region79: #{tpu_custom_call.1} parent=1 // pred_check_branch
      %3160 = sbr.rel (0) target = $region81
    $region80: #{tpu_custom_call.1} parent=1 // pred_region
      %s3162 = ssub.s32 64, 64
      %3163 = vsyncadd [#allocation4], %s3162
      %s3165 = sshll.u32 [#allocation11], 4
      %s3166 = int_to_ptr.vmem [resolvable:$true] %s3165
      %3168 = dma.vmem_to_hbm [thread:$0]  %s3166, 64, %s14, [#allocation4]
    $region81: #{tpu_custom_call.1} parent=1 // pred_fallthru
      _
    // Predicated region
    $region82: #{tpu_custom_call.1} parent=1 // pred_check
      _
    $region83: #{tpu_custom_call.1} parent=1 // pred_check_branch
      %3170 = sbr.rel (0) target = $region85
    $region84: #{tpu_custom_call.1} parent=1 // pred_region
      %3171 = dma.done [#allocation4], 64
    $region85: #{tpu_custom_call.1} parent=1 // pred_fallthru
      _
    %3172 = vsyncpa [#allocation3], 1
    %3173 = vsyncpa [#allocation6], 1
    %3174 = vsyncpa [#allocation9], 1
    %3175 = vsyncpa [#allocation4], 1

</llo_original>
